<compile_context>
chip_gen: v5e
topology: v5e:2x2
jax: 0.10.0
libtpu: 0.0.40
codegen_flags: <defaults>
</compile_context>

<pallas_src>
import math
import jax
import jax.numpy as jnp
from jax.experimental import pallas as pl
from jax.experimental.pallas import tpu as pltpu

IN_FEATURES = 512
HIDDEN = 2048
OUT_FEATURES = 64
OUT_PADDED = 128        # lane-dense output slab; zero-padded cols sliced off after
MIN_SPLIT_ROWS = 256    # split a single tile in two (for v7x megacore) once B >= this


def _round_up(a, m):
    return (a + m - 1) // m * m


def _cdiv(a, b):
    return (a + b - 1) // b


def fcs_kernel(x_ref, w1_ref, b1_ref, w2_ref, b2_ref, o_ref):
    # x_ref:  (TB, 512)      original dtype (f32); cast to compute dtype in-kernel
    # w1_ref: (512, 2048)    compute dtype (bf16 default), grid-invariant (resident)
    # b1_ref: (1, 2048)      f32
    # w2_ref: (2048, 128)    compute dtype, grid-invariant, zero-padded cols
    # b2_ref: (1, 128)       f32, zero-padded cols
    # o_ref:  (TB, 128)      f32
    x = x_ref[...].astype(w1_ref.dtype)            # VPU cast, hidden under the MXU
    # Layer 1: MXU matmul (f32 accumulation), bias + tanh in f32.
    h = jnp.dot(x, w1_ref[...], preferred_element_type=jnp.float32)
    h = jnp.tanh(h + b1_ref[...])
    # Narrow the hidden activations for the second MXU pass.
    h = h.astype(w2_ref.dtype)
    # Layer 2: MXU matmul (f32 accumulation), bias + tanh in f32.
    y = jnp.dot(h, w2_ref[...], preferred_element_type=jnp.float32)
    o_ref[...] = jnp.tanh(y + b2_ref[...]).astype(o_ref.dtype)


def prepare_params(w1, b1, w2, b2, compute_dtype=jnp.bfloat16):
    """One-time per-model preparation (do NOT call per forward pass):
    cast weights to the MXU compute dtype and zero-pad the 64-wide output
    dim of w2/b2 to a lane-dense 128 slab."""
    assert w1.shape == (IN_FEATURES, HIDDEN) and b1.shape == (1, HIDDEN)
    assert w2.shape == (HIDDEN, OUT_FEATURES) and b2.shape == (1, OUT_FEATURES)
    w1c = w1.astype(compute_dtype)
    b1c = b1.astype(jnp.float32)
    w2c = jnp.zeros((HIDDEN, OUT_PADDED), compute_dtype)
    w2c = w2c.at[:, :OUT_FEATURES].set(w2.astype(compute_dtype))
    b2c = jnp.zeros((1, OUT_PADDED), jnp.float32)
    b2c = b2c.at[:, :OUT_FEATURES].set(b2.astype(jnp.float32))
    return (w1c, b1c, w2c, b2c)


def fcs_forward(x, params, *, tb=512):
    """Forward pass of `fcs`: tanh(tanh(x @ w1 + b1) @ w2 + b2).
    `params` must come from prepare_params()."""
    w1c, b1c, w2c, b2c = params
    B, F = x.shape
    assert F == IN_FEATURES
    orig_dtype = x.dtype

    # ---- balanced batch tiling (no explicit padding of x) ----
    n_tiles = max(1, _cdiv(B, tb))
    if n_tiles == 1 and B >= MIN_SPLIT_ROWS:
        n_tiles = 2                              # give v7x's 2nd TensorCore work
    tb_eff = _round_up(_cdiv(B, n_tiles), 8)     # sublane-aligned, balanced tiles
    grid = (_cdiv(B, tb_eff),)

    w_itemsize = jnp.dtype(w1c.dtype).itemsize
    x_itemsize = jnp.dtype(x.dtype).itemsize
    cost = pl.CostEstimate(
        flops=2 * B * (IN_FEATURES * HIDDEN + HIDDEN * OUT_PADDED),
        transcendentals=B * (HIDDEN + OUT_PADDED),
        bytes_accessed=(B * IN_FEATURES * x_itemsize            # x
                        + IN_FEATURES * HIDDEN * w_itemsize     # w1
                        + HIDDEN * OUT_PADDED * w_itemsize      # w2
                        + (HIDDEN + OUT_PADDED) * 4             # biases
                        + B * OUT_PADDED * 4),                  # out
    )

    out = pl.pallas_call(
        fcs_kernel,
        out_shape=jax.ShapeDtypeStruct((B, OUT_PADDED), jnp.float32),
        grid_spec=pltpu.PrefetchScalarGridSpec(
            num_scalar_prefetch=0,
            grid=grid,
            in_specs=[
                # batch tile marches with the grid (boundary tile is masked)
                pl.BlockSpec((tb_eff, IN_FEATURES), lambda i: (i, 0)),
                # weights / biases: constant block index -> DMA'd once, resident
                pl.BlockSpec((IN_FEATURES, HIDDEN), lambda i: (0, 0)),
                pl.BlockSpec((1, HIDDEN), lambda i: (0, 0)),
                pl.BlockSpec((HIDDEN, OUT_PADDED), lambda i: (0, 0)),
                pl.BlockSpec((1, OUT_PADDED), lambda i: (0, 0)),
            ],
            out_specs=pl.BlockSpec((tb_eff, OUT_PADDED), lambda i: (i, 0)),
        ),
        compiler_params=pltpu.CompilerParams(
            dimension_semantics=("parallel",),       # batch splits across v7x TCs
            vmem_limit_bytes=48 * 1024 * 1024,       # headroom for f32 path / big tb
        ),
        cost_estimate=cost,
    )(x, w1c, b1c, w2c, b2c)

    # Strip the zero-padded output columns.
    return out[:, :OUT_FEATURES].astype(orig_dtype)


def init_params(key):
    """Deterministic init mimicking PyTorch nn.Linear defaults
    (uniform(+-1/sqrt(fan_in)) weights & biases). Weights stored as [in, out]."""
    k1, k2, k3, k4 = jax.random.split(key, 4)

    def linear_init(kw, kb, fan_in, fan_out):
        bound = 1.0 / math.sqrt(fan_in)
        w = jax.random.uniform(kw, (fan_in, fan_out), jnp.float32,
                               minval=-bound, maxval=bound)
        b = jax.random.uniform(kb, (1, fan_out), jnp.float32,
                               minval=-bound, maxval=bound)
        return w, b

    w1, b1 = linear_init(k1, k2, IN_FEATURES, HIDDEN)
    w2, b2 = linear_init(k3, k4, HIDDEN, OUT_FEATURES)
    return w1, b1, w2, b2


if __name__ == "__main__":
    key = jax.random.PRNGKey(0)
    kx1, kx2, kp = jax.random.split(key, 3)
    w1, b1, w2, b2 = init_params(kp)

    def ref_fn(x):
        return jnp.tanh(jnp.tanh(x @ w1 + b1) @ w2 + b2)

    # ---- small batch ----
    B = 8
    x = jax.random.normal(kx1, (B, IN_FEATURES), jnp.float32)
    ref = ref_fn(x)

    # 1) f32 compute path: must match the reference tightly.
    params_f32 = prepare_params(w1, b1, w2, b2, compute_dtype=jnp.float32)
    out_f32 = jax.block_until_ready(fcs_forward(x, params_f32))
    assert out_f32.shape == (B, OUT_FEATURES)
    assert jnp.allclose(out_f32, ref, atol=2e-5, rtol=1e-5), \
        float(jnp.max(jnp.abs(out_f32 - ref)))

    # 2) default bf16-operand / f32-accumulate path: loose tolerance vs f32 ref.
    params_bf16 = prepare_params(w1, b1, w2, b2)  # bf16 default
    out_bf16 = jax.block_until_ready(fcs_forward(x, params_bf16))
    assert out_bf16.shape == (B, OUT_FEATURES)
    assert jnp.allclose(out_bf16, ref, atol=3e-2), \
        float(jnp.max(jnp.abs(out_bf16 - ref)))

    # 3) ragged multi-tile batch: exercises balanced tiling + masked boundary tile.
    B2 = 300
    x2 = jax.random.normal(kx2, (B2, IN_FEATURES), jnp.float32)
    ref2 = ref_fn(x2)
    out2 = jax.block_until_ready(fcs_forward(x2, params_bf16))
    assert out2.shape == (B2, OUT_FEATURES)
    assert jnp.allclose(out2, ref2, atol=3e-2), \
        float(jnp.max(jnp.abs(out2 - ref2)))

    print("KERNEL_OK")
</pallas_src>

<mosaic_0001>
module attributes {stable_mosaic.version = 11 : i64} {
  func.func @fcs_kernel(%arg0: i32, %arg1: memref<8x512xf32, #tpu.memory_space<vmem>>, %arg2: memref<512x2048xf32, #tpu.memory_space<vmem>>, %arg3: memref<1x2048xf32, #tpu.memory_space<vmem>>, %arg4: memref<2048x128xf32, #tpu.memory_space<vmem>>, %arg5: memref<1x128xf32, #tpu.memory_space<vmem>>, %arg6: memref<8x128xf32, #tpu.memory_space<vmem>>) attributes {dimension_semantics = [#tpu.dimension_semantics<parallel>], iteration_bounds = array<i64: 1>, scalar_prefetch = 0 : i64, scratch_operands = 0 : i64, tpu.core_type = #tpu.core_type<tc>, window_params = [{transform_indices = @transform_0, window_bounds = array<i64: 8, 512>}, {pipeline_mode = #tpu.pipeline_mode<synchronous>, transform_indices = @transform_1, window_bounds = array<i64: 512, 2048>}, {pipeline_mode = #tpu.pipeline_mode<synchronous>, transform_indices = @transform_2, window_bounds = array<i64: 1, 2048>}, {pipeline_mode = #tpu.pipeline_mode<synchronous>, transform_indices = @transform_3, window_bounds = array<i64: 2048, 128>}, {pipeline_mode = #tpu.pipeline_mode<synchronous>, transform_indices = @transform_4, window_bounds = array<i64: 1, 128>}, {transform_indices = @transform_5, window_bounds = array<i64: 8, 128>}]} {
    %c0 = arith.constant 0 : index
    %c0_0 = arith.constant 0 : index
    %0 = vector.load %arg1[%c0, %c0_0] : memref<8x512xf32, #tpu.memory_space<vmem>>, vector<8x512xf32>
    %c0_1 = arith.constant 0 : index
    %c0_2 = arith.constant 0 : index
    %1 = vector.load %arg2[%c0_1, %c0_2] : memref<512x2048xf32, #tpu.memory_space<vmem>>, vector<512x2048xf32>
    %cst = arith.constant dense<0.000000e+00> : vector<8x2048xf32>
    %2 = tpu.matmul %0, %1, %cst {dimension_numbers = #tpu.dot_dimension_numbers<[1], [0], [0], [1], [0, 0, 1, 1], [], []>} : vector<8x512xf32>, vector<512x2048xf32>, vector<8x2048xf32> -> vector<8x2048xf32>
    %c0_3 = arith.constant 0 : index
    %c0_4 = arith.constant 0 : index
    %3 = vector.load %arg3[%c0_3, %c0_4] : memref<1x2048xf32, #tpu.memory_space<vmem>>, vector<1x2048xf32>
    %4 = vector.broadcast %3 : vector<1x2048xf32> to vector<8x2048xf32>
    %5 = arith.addf %2, %4 : vector<8x2048xf32>
    %6 = math.tanh %5 : vector<8x2048xf32>
    %c0_5 = arith.constant 0 : index
    %c0_6 = arith.constant 0 : index
    %7 = vector.load %arg4[%c0_5, %c0_6] : memref<2048x128xf32, #tpu.memory_space<vmem>>, vector<2048x128xf32>
    %cst_7 = arith.constant dense<0.000000e+00> : vector<8x128xf32>
    %8 = tpu.matmul %6, %7, %cst_7 {dimension_numbers = #tpu.dot_dimension_numbers<[1], [0], [0], [1], [0, 0, 1, 1], [], []>} : vector<8x2048xf32>, vector<2048x128xf32>, vector<8x128xf32> -> vector<8x128xf32>
    %c0_8 = arith.constant 0 : index
    %c0_9 = arith.constant 0 : index
    %9 = vector.load %arg5[%c0_8, %c0_9] : memref<1x128xf32, #tpu.memory_space<vmem>>, vector<1x128xf32>
    %10 = vector.broadcast %9 : vector<1x128xf32> to vector<8x128xf32>
    %11 = arith.addf %8, %10 : vector<8x128xf32>
    %12 = math.tanh %11 : vector<8x128xf32>
    %c0_10 = arith.constant 0 : index
    %c0_11 = arith.constant 0 : index
    %13 = vector.load %arg6[%c0_10, %c0_11] : memref<8x128xf32, #tpu.memory_space<vmem>>, vector<8x128xf32>
    tpu.vector_store %arg6[%c0_10, %c0_11], %12 {strides = array<i32>} : memref<8x128xf32, #tpu.memory_space<vmem>>, vector<8x128xf32>,
    return
  }
  func.func @transform_0(%arg0: i32) -> (i32, i32) {
    %c0_i32 = arith.constant 0 : i32
    %c0_i32_0 = arith.constant 0 : i32
    return %arg0, %c0_i32 : i32, i32
  }
  func.func @transform_1(%arg0: i32) -> (i32, i32) {
    %c0_i32 = arith.constant 0 : i32
    %c0_i32_0 = arith.constant 0 : i32
    %c0_i32_1 = arith.constant 0 : i32
    return %c0_i32, %c0_i32_0 : i32, i32
  }
  func.func @transform_2(%arg0: i32) -> (i32, i32) {
    %c0_i32 = arith.constant 0 : i32
    %c0_i32_0 = arith.constant 0 : i32
    %c0_i32_1 = arith.constant 0 : i32
    return %c0_i32, %c0_i32_0 : i32, i32
  }
  func.func @transform_3(%arg0: i32) -> (i32, i32) {
    %c0_i32 = arith.constant 0 : i32
    %c0_i32_0 = arith.constant 0 : i32
    %c0_i32_1 = arith.constant 0 : i32
    return %c0_i32, %c0_i32_0 : i32, i32
  }
  func.func @transform_4(%arg0: i32) -> (i32, i32) {
    %c0_i32 = arith.constant 0 : i32
    %c0_i32_0 = arith.constant 0 : i32
    %c0_i32_1 = arith.constant 0 : i32
    return %c0_i32, %c0_i32_0 : i32, i32
  }
  func.func @transform_5(%arg0: i32) -> (i32, i32) {
    %c0_i32 = arith.constant 0 : i32
    %c0_i32_0 = arith.constant 0 : i32
    return %arg0, %c0_i32 : i32, i32
  }
}

</mosaic_0001>

<llo_original>
// kernel: tpu_custom_call.1
$region0: #{tpu_custom_call.1}
  #allocation0 [shape = 'u32[]', space=smem, size = 0x4, offset = 0x4, fixed_abs, tag = 'smem constant byte address 0x4 - core index']
  #allocation1 [shape = 'u32[72,128]{1,0:T(1,128)}', space=vmem, size = 0x9000, scoped, tag = 'internal scratch']
  %s0 = inlined_call_operand.hbm [shape: f32[8,512], index: 0, kind: input, shape index: {}]
  %s1 = inlined_call_operand.hbm [shape: f32[512,2048], index: 1, kind: input, shape index: {}]
  %s2 = inlined_call_operand.hbm [shape: f32[1,2048], index: 2, kind: input, shape index: {}]
  %s3 = inlined_call_operand.hbm [shape: f32[2048,128], index: 3, kind: input, shape index: {}]
  %s4 = inlined_call_operand.hbm [shape: f32[1,128], index: 4, kind: input, shape index: {}]
  %s5 = inlined_call_operand.hbm [shape: f32[8,128], index: 5, kind: output, shape index: {}]
  %s6 = sld [smem:[#allocation0]]
  $region50: #{tpu_custom_call.1} parent=0
    _
  %s8 = ssub.s32 1, %s6
  %s9 = scalar_select 0, %s8, %s6
  $region1: #{tpu_custom_call.1} parent=0
    #allocation2 [shape = 'u8[16384]{0}', space=vmem, size = 0x4000, scoped, tag = 'input window, operand 0, single buffered']
    #allocation3 [shape = 's32[1]{0}', space=sflag, size = 0x4, scoped, tag = 'scoped memory for tpu_custom_call.1']
    #allocation4 [shape = 's32[1]{0}', space=sflag, size = 0x4, scoped, tag = 'scoped memory for tpu_custom_call.1']
    #allocation5 [shape = 'u8[4194304]{0}', space=vmem, size = 0x400000, scoped, tag = 'input window, operand 1, single buffered']
    #allocation6 [shape = 's32[1]{0}', space=sflag, size = 0x4, scoped, tag = 'scoped memory for tpu_custom_call.1']
    #allocation7 [shape = 'u8[8192]{0}', space=vmem, size = 0x2000, scoped, tag = 'input window, operand 2, single buffered']
    #allocation8 [shape = 'u8[1048576]{0}', space=vmem, size = 0x100000, scoped, tag = 'input window, operand 3, single buffered']
    #allocation9 [shape = 's32[1]{0}', space=sflag, size = 0x4, scoped, tag = 'scoped memory for tpu_custom_call.1']
    #allocation10 [shape = 'u8[512]{0}', space=vmem, size = 0x400, scoped, tag = 'input window, operand 4, single buffered']
    #allocation11 [shape = 'u8[4096]{0}', space=vmem, size = 0x1000, scoped, tag = 'output window, operand 0, single buffered']
    %10 = vsyncpa [#allocation3], 0
    %11 = vsyncpa [#allocation6], 0
    %12 = vsyncpa [#allocation9], 0
    %13 = vsyncpa [#allocation4], 0
    // Predicated region
    $region2: #{tpu_custom_call.1} parent=1 // pred_check
      _
    $region3: #{tpu_custom_call.1} parent=1 // pred_check_branch
      %15 = sbr.rel (0) target = $region5
    $region4: #{tpu_custom_call.1} parent=1 // pred_region
      %17 = vsyncadd [#allocation3], 0
      %s19 = sshll.u32 %s0, 4
      %s20 = int_to_ptr.hbm [resolvable:$true] %s19
      %s21 = sshll.u32 [#allocation2], 4
      %s22 = int_to_ptr.vmem [resolvable:$true] %s21
      %24 = dma.hbm_to_vmem [thread:$0]  %s20, 512, %s22, [#allocation3]
    $region5: #{tpu_custom_call.1} parent=1 // pred_fallthru
      _
    // Predicated region
    $region6: #{tpu_custom_call.1} parent=1 // pred_check
      _
    $region7: #{tpu_custom_call.1} parent=1 // pred_check_branch
      %26 = sbr.rel (0) target = $region9
    $region8: #{tpu_custom_call.1} parent=1 // pred_region
      %28 = vsyncadd [#allocation6], 0
      %s29 = sshll.u32 %s1, 4
      %s30 = int_to_ptr.hbm [resolvable:$true] %s29
      %s31 = sshll.u32 [#allocation5], 4
      %s32 = int_to_ptr.vmem [resolvable:$true] %s31
      %37 = dma.hbm_to_vmem [thread:$0]  %s30, 131072, %s32, [#allocation6], 2048, 2048, 128
    $region9: #{tpu_custom_call.1} parent=1 // pred_fallthru
      _
    // Predicated region
    $region10: #{tpu_custom_call.1} parent=1 // pred_check
      _
    $region11: #{tpu_custom_call.1} parent=1 // pred_check_branch
      %39 = sbr.rel (0) target = $region13
    $region12: #{tpu_custom_call.1} parent=1 // pred_region
      %41 = vsyncadd [#allocation6], 0
      %s43 = sshll.u32 %s2, 4
      %s44 = int_to_ptr.hbm [resolvable:$true] %s43
      %s45 = sshll.u32 [#allocation7], 4
      %s46 = int_to_ptr.vmem [resolvable:$true] %s45
      %48 = dma.hbm_to_vmem [thread:$0]  %s44, 256, %s46, [#allocation6]
    $region13: #{tpu_custom_call.1} parent=1 // pred_fallthru
      _
    // Predicated region
    $region14: #{tpu_custom_call.1} parent=1 // pred_check
      _
    $region15: #{tpu_custom_call.1} parent=1 // pred_check_branch
      %50 = sbr.rel (0) target = $region17
    $region16: #{tpu_custom_call.1} parent=1 // pred_region
      %52 = vsyncadd [#allocation9], 0
      %s53 = sshll.u32 %s3, 4
      %s54 = int_to_ptr.hbm [resolvable:$true] %s53
      %s55 = sshll.u32 [#allocation8], 4
      %s56 = int_to_ptr.vmem [resolvable:$true] %s55
      %61 = dma.hbm_to_vmem [thread:$0]  %s54, 32768, %s56, [#allocation9], 128, 128, 8
    $region17: #{tpu_custom_call.1} parent=1 // pred_fallthru
      _
    // Predicated region
    $region18: #{tpu_custom_call.1} parent=1 // pred_check
      _
    $region19: #{tpu_custom_call.1} parent=1 // pred_check_branch
      %63 = sbr.rel (0) target = $region21
    $region20: #{tpu_custom_call.1} parent=1 // pred_region
      %65 = vsyncadd [#allocation9], 0
      %s67 = sshll.u32 %s4, 4
      %s68 = int_to_ptr.hbm [resolvable:$true] %s67
      %s69 = sshll.u32 [#allocation10], 4
      %s70 = int_to_ptr.vmem [resolvable:$true] %s69
      %72 = dma.hbm_to_vmem [thread:$0]  %s68, 16, %s70, [#allocation9]
    $region21: #{tpu_custom_call.1} parent=1 // pred_fallthru
      _
    // Predicated region
    $region22: #{tpu_custom_call.1} parent=1 // pred_check
      _
    $region23: #{tpu_custom_call.1} parent=1 // pred_check_branch
      %74 = sbr.rel (0) target = $region25
    $region24: #{tpu_custom_call.1} parent=1 // pred_region
      %76 = dma.done [#allocation3], 512
    $region25: #{tpu_custom_call.1} parent=1 // pred_fallthru
      _
    // Predicated region
    $region26: #{tpu_custom_call.1} parent=1 // pred_check
      _
    $region27: #{tpu_custom_call.1} parent=1 // pred_check_branch
      %78 = sbr.rel (0) target = $region29
    $region28: #{tpu_custom_call.1} parent=1 // pred_region
      %80 = dma.done [#allocation6], 131072
    $region29: #{tpu_custom_call.1} parent=1 // pred_fallthru
      _
    // Predicated region
    $region30: #{tpu_custom_call.1} parent=1 // pred_check
      _
    $region31: #{tpu_custom_call.1} parent=1 // pred_check_branch
      %82 = sbr.rel (0) target = $region33
    $region32: #{tpu_custom_call.1} parent=1 // pred_region
      %84 = dma.done [#allocation6], 256
    $region33: #{tpu_custom_call.1} parent=1 // pred_fallthru
      _
    // Predicated region
    $region34: #{tpu_custom_call.1} parent=1 // pred_check
      _
    $region35: #{tpu_custom_call.1} parent=1 // pred_check_branch
      %86 = sbr.rel (0) target = $region37
    $region36: #{tpu_custom_call.1} parent=1 // pred_region
      %88 = dma.done [#allocation9], 32768
    $region37: #{tpu_custom_call.1} parent=1 // pred_fallthru
      _
    // Predicated region
    $region38: #{tpu_custom_call.1} parent=1 // pred_check
      _
    $region39: #{tpu_custom_call.1} parent=1 // pred_check_branch
      %90 = sbr.rel (0) target = $region41
    $region40: #{tpu_custom_call.1} parent=1 // pred_region
      %92 = dma.done [#allocation9], 16
    $region41: #{tpu_custom_call.1} parent=1 // pred_fallthru
      _
    %v93 = vld [vmem:[#allocation2] sm:$0xff]
    %v94 = vld [vmem:[#allocation2 + $0x8] sm:$0xff]
    %v95 = vld [vmem:[#allocation2 + $0x10] sm:$0xff]
    %v96 = vld [vmem:[#allocation2 + $0x18] sm:$0xff]
    %v97 = vld [vmem:[#allocation5] sm:$0xff]
    %v98 = vld [vmem:[#allocation5 + $0x8] sm:$0xff]
    %v99 = vld [vmem:[#allocation5 + $0x10] sm:$0xff]
    %v100 = vld [vmem:[#allocation5 + $0x18] sm:$0xff]
    %v101 = vld [vmem:[#allocation5 + $0x20] sm:$0xff]
    %v102 = vld [vmem:[#allocation5 + $0x28] sm:$0xff]
    %v103 = vld [vmem:[#allocation5 + $0x30] sm:$0xff]
    %v104 = vld [vmem:[#allocation5 + $0x38] sm:$0xff]
    %v105 = vld [vmem:[#allocation5 + $0x40] sm:$0xff]
    %v106 = vld [vmem:[#allocation5 + $0x48] sm:$0xff]
    %v107 = vld [vmem:[#allocation5 + $0x50] sm:$0xff]
    %v108 = vld [vmem:[#allocation5 + $0x58] sm:$0xff]
    %v109 = vld [vmem:[#allocation5 + $0x60] sm:$0xff]
    %v110 = vld [vmem:[#allocation5 + $0x68] sm:$0xff]
    %v111 = vld [vmem:[#allocation5 + $0x70] sm:$0xff]
    %v112 = vld [vmem:[#allocation5 + $0x78] sm:$0xff]
    %v113 = vld [vmem:[#allocation5 + $0x80] sm:$0xff]
    %v114 = vld [vmem:[#allocation5 + $0x88] sm:$0xff]
    %v115 = vld [vmem:[#allocation5 + $0x90] sm:$0xff]
    %v116 = vld [vmem:[#allocation5 + $0x98] sm:$0xff]
    %v117 = vld [vmem:[#allocation5 + $0xa0] sm:$0xff]
    %v118 = vld [vmem:[#allocation5 + $0xa8] sm:$0xff]
    %v119 = vld [vmem:[#allocation5 + $0xb0] sm:$0xff]
    %v120 = vld [vmem:[#allocation5 + $0xb8] sm:$0xff]
    %v121 = vld [vmem:[#allocation5 + $0xc0] sm:$0xff]
    %v122 = vld [vmem:[#allocation5 + $0xc8] sm:$0xff]
    %v123 = vld [vmem:[#allocation5 + $0xd0] sm:$0xff]
    %v124 = vld [vmem:[#allocation5 + $0xd8] sm:$0xff]
    %v125 = vld [vmem:[#allocation5 + $0xe0] sm:$0xff]
    %v126 = vld [vmem:[#allocation5 + $0xe8] sm:$0xff]
    %v127 = vld [vmem:[#allocation5 + $0xf0] sm:$0xff]
    %v128 = vld [vmem:[#allocation5 + $0xf8] sm:$0xff]
    %v129 = vld [vmem:[#allocation5 + $0x100] sm:$0xff]
    %v130 = vld [vmem:[#allocation5 + $0x108] sm:$0xff]
    %v131 = vld [vmem:[#allocation5 + $0x110] sm:$0xff]
    %v132 = vld [vmem:[#allocation5 + $0x118] sm:$0xff]
    %v133 = vld [vmem:[#allocation5 + $0x120] sm:$0xff]
    %v134 = vld [vmem:[#allocation5 + $0x128] sm:$0xff]
    %v135 = vld [vmem:[#allocation5 + $0x130] sm:$0xff]
    %v136 = vld [vmem:[#allocation5 + $0x138] sm:$0xff]
    %v137 = vld [vmem:[#allocation5 + $0x140] sm:$0xff]
    %v138 = vld [vmem:[#allocation5 + $0x148] sm:$0xff]
    %v139 = vld [vmem:[#allocation5 + $0x150] sm:$0xff]
    %v140 = vld [vmem:[#allocation5 + $0x158] sm:$0xff]
    %v141 = vld [vmem:[#allocation5 + $0x160] sm:$0xff]
    %v142 = vld [vmem:[#allocation5 + $0x168] sm:$0xff]
    %v143 = vld [vmem:[#allocation5 + $0x170] sm:$0xff]
    %v144 = vld [vmem:[#allocation5 + $0x178] sm:$0xff]
    %v145 = vld [vmem:[#allocation5 + $0x180] sm:$0xff]
    %v146 = vld [vmem:[#allocation5 + $0x188] sm:$0xff]
    %v147 = vld [vmem:[#allocation5 + $0x190] sm:$0xff]
    %v148 = vld [vmem:[#allocation5 + $0x198] sm:$0xff]
    %v149 = vld [vmem:[#allocation5 + $0x1a0] sm:$0xff]
    %v150 = vld [vmem:[#allocation5 + $0x1a8] sm:$0xff]
    %v151 = vld [vmem:[#allocation5 + $0x1b0] sm:$0xff]
    %v152 = vld [vmem:[#allocation5 + $0x1b8] sm:$0xff]
    %v153 = vld [vmem:[#allocation5 + $0x1c0] sm:$0xff]
    %v154 = vld [vmem:[#allocation5 + $0x1c8] sm:$0xff]
    %v155 = vld [vmem:[#allocation5 + $0x1d0] sm:$0xff]
    %v156 = vld [vmem:[#allocation5 + $0x1d8] sm:$0xff]
    %v157 = vld [vmem:[#allocation5 + $0x1e0] sm:$0xff]
    %v158 = vld [vmem:[#allocation5 + $0x1e8] sm:$0xff]
    %v159 = vld [vmem:[#allocation5 + $0x1f0] sm:$0xff]
    %v160 = vld [vmem:[#allocation5 + $0x1f8] sm:$0xff]
    %v161 = vld [vmem:[#allocation5 + $0x200] sm:$0xff]
    %v162 = vld [vmem:[#allocation5 + $0x208] sm:$0xff]
    %v163 = vld [vmem:[#allocation5 + $0x210] sm:$0xff]
    %v164 = vld [vmem:[#allocation5 + $0x218] sm:$0xff]
    %v165 = vld [vmem:[#allocation5 + $0x220] sm:$0xff]
    %v166 = vld [vmem:[#allocation5 + $0x228] sm:$0xff]
    %v167 = vld [vmem:[#allocation5 + $0x230] sm:$0xff]
    %v168 = vld [vmem:[#allocation5 + $0x238] sm:$0xff]
    %v169 = vld [vmem:[#allocation5 + $0x240] sm:$0xff]
    %v170 = vld [vmem:[#allocation5 + $0x248] sm:$0xff]
    %v171 = vld [vmem:[#allocation5 + $0x250] sm:$0xff]
    %v172 = vld [vmem:[#allocation5 + $0x258] sm:$0xff]
    %v173 = vld [vmem:[#allocation5 + $0x260] sm:$0xff]
    %v174 = vld [vmem:[#allocation5 + $0x268] sm:$0xff]
    %v175 = vld [vmem:[#allocation5 + $0x270] sm:$0xff]
    %v176 = vld [vmem:[#allocation5 + $0x278] sm:$0xff]
    %v177 = vld [vmem:[#allocation5 + $0x280] sm:$0xff]
    %v178 = vld [vmem:[#allocation5 + $0x288] sm:$0xff]
    %v179 = vld [vmem:[#allocation5 + $0x290] sm:$0xff]
    %v180 = vld [vmem:[#allocation5 + $0x298] sm:$0xff]
    %v181 = vld [vmem:[#allocation5 + $0x2a0] sm:$0xff]
    %v182 = vld [vmem:[#allocation5 + $0x2a8] sm:$0xff]
    %v183 = vld [vmem:[#allocation5 + $0x2b0] sm:$0xff]
    %v184 = vld [vmem:[#allocation5 + $0x2b8] sm:$0xff]
    %v185 = vld [vmem:[#allocation5 + $0x2c0] sm:$0xff]
    %v186 = vld [vmem:[#allocation5 + $0x2c8] sm:$0xff]
    %v187 = vld [vmem:[#allocation5 + $0x2d0] sm:$0xff]
    %v188 = vld [vmem:[#allocation5 + $0x2d8] sm:$0xff]
    %v189 = vld [vmem:[#allocation5 + $0x2e0] sm:$0xff]
    %v190 = vld [vmem:[#allocation5 + $0x2e8] sm:$0xff]
    %v191 = vld [vmem:[#allocation5 + $0x2f0] sm:$0xff]
    %v192 = vld [vmem:[#allocation5 + $0x2f8] sm:$0xff]
    %v193 = vld [vmem:[#allocation5 + $0x300] sm:$0xff]
    %v194 = vld [vmem:[#allocation5 + $0x308] sm:$0xff]
    %v195 = vld [vmem:[#allocation5 + $0x310] sm:$0xff]
    %v196 = vld [vmem:[#allocation5 + $0x318] sm:$0xff]
    %v197 = vld [vmem:[#allocation5 + $0x320] sm:$0xff]
    %v198 = vld [vmem:[#allocation5 + $0x328] sm:$0xff]
    %v199 = vld [vmem:[#allocation5 + $0x330] sm:$0xff]
    %v200 = vld [vmem:[#allocation5 + $0x338] sm:$0xff]
    %v201 = vld [vmem:[#allocation5 + $0x340] sm:$0xff]
    %v202 = vld [vmem:[#allocation5 + $0x348] sm:$0xff]
    %v203 = vld [vmem:[#allocation5 + $0x350] sm:$0xff]
    %v204 = vld [vmem:[#allocation5 + $0x358] sm:$0xff]
    %v205 = vld [vmem:[#allocation5 + $0x360] sm:$0xff]
    %v206 = vld [vmem:[#allocation5 + $0x368] sm:$0xff]
    %v207 = vld [vmem:[#allocation5 + $0x370] sm:$0xff]
    %v208 = vld [vmem:[#allocation5 + $0x378] sm:$0xff]
    %v209 = vld [vmem:[#allocation5 + $0x380] sm:$0xff]
    %v210 = vld [vmem:[#allocation5 + $0x388] sm:$0xff]
    %v211 = vld [vmem:[#allocation5 + $0x390] sm:$0xff]
    %v212 = vld [vmem:[#allocation5 + $0x398] sm:$0xff]
    %v213 = vld [vmem:[#allocation5 + $0x3a0] sm:$0xff]
    %v214 = vld [vmem:[#allocation5 + $0x3a8] sm:$0xff]
    %v215 = vld [vmem:[#allocation5 + $0x3b0] sm:$0xff]
    %v216 = vld [vmem:[#allocation5 + $0x3b8] sm:$0xff]
    %v217 = vld [vmem:[#allocation5 + $0x3c0] sm:$0xff]
    %v218 = vld [vmem:[#allocation5 + $0x3c8] sm:$0xff]
    %v219 = vld [vmem:[#allocation5 + $0x3d0] sm:$0xff]
    %v220 = vld [vmem:[#allocation5 + $0x3d8] sm:$0xff]
    %v221 = vld [vmem:[#allocation5 + $0x3e0] sm:$0xff]
    %v222 = vld [vmem:[#allocation5 + $0x3e8] sm:$0xff]
    %v223 = vld [vmem:[#allocation5 + $0x3f0] sm:$0xff]
    %v224 = vld [vmem:[#allocation5 + $0x3f8] sm:$0xff]
    %v225 = vld [vmem:[#allocation5 + $0x400] sm:$0xff]
    %v226 = vld [vmem:[#allocation5 + $0x408] sm:$0xff]
    %v227 = vld [vmem:[#allocation5 + $0x410] sm:$0xff]
    %v228 = vld [vmem:[#allocation5 + $0x418] sm:$0xff]
    %v229 = vld [vmem:[#allocation5 + $0x420] sm:$0xff]
    %v230 = vld [vmem:[#allocation5 + $0x428] sm:$0xff]
    %v231 = vld [vmem:[#allocation5 + $0x430] sm:$0xff]
    %v232 = vld [vmem:[#allocation5 + $0x438] sm:$0xff]
    %v233 = vld [vmem:[#allocation5 + $0x440] sm:$0xff]
    %v234 = vld [vmem:[#allocation5 + $0x448] sm:$0xff]
    %v235 = vld [vmem:[#allocation5 + $0x450] sm:$0xff]
    %v236 = vld [vmem:[#allocation5 + $0x458] sm:$0xff]
    %v237 = vld [vmem:[#allocation5 + $0x460] sm:$0xff]
    %v238 = vld [vmem:[#allocation5 + $0x468] sm:$0xff]
    %v239 = vld [vmem:[#allocation5 + $0x470] sm:$0xff]
    %v240 = vld [vmem:[#allocation5 + $0x478] sm:$0xff]
    %v241 = vld [vmem:[#allocation5 + $0x480] sm:$0xff]
    %v242 = vld [vmem:[#allocation5 + $0x488] sm:$0xff]
    %v243 = vld [vmem:[#allocation5 + $0x490] sm:$0xff]
    %v244 = vld [vmem:[#allocation5 + $0x498] sm:$0xff]
    %v245 = vld [vmem:[#allocation5 + $0x4a0] sm:$0xff]
    %v246 = vld [vmem:[#allocation5 + $0x4a8] sm:$0xff]
    %v247 = vld [vmem:[#allocation5 + $0x4b0] sm:$0xff]
    %v248 = vld [vmem:[#allocation5 + $0x4b8] sm:$0xff]
    %v249 = vld [vmem:[#allocation5 + $0x4c0] sm:$0xff]
    %v250 = vld [vmem:[#allocation5 + $0x4c8] sm:$0xff]
    %v251 = vld [vmem:[#allocation5 + $0x4d0] sm:$0xff]
    %v252 = vld [vmem:[#allocation5 + $0x4d8] sm:$0xff]
    %v253 = vld [vmem:[#allocation5 + $0x4e0] sm:$0xff]
    %v254 = vld [vmem:[#allocation5 + $0x4e8] sm:$0xff]
    %v255 = vld [vmem:[#allocation5 + $0x4f0] sm:$0xff]
    %v256 = vld [vmem:[#allocation5 + $0x4f8] sm:$0xff]
    %v257 = vld [vmem:[#allocation5 + $0x500] sm:$0xff]
    %v258 = vld [vmem:[#allocation5 + $0x508] sm:$0xff]
    %v259 = vld [vmem:[#allocation5 + $0x510] sm:$0xff]
    %v260 = vld [vmem:[#allocation5 + $0x518] sm:$0xff]
    %v261 = vld [vmem:[#allocation5 + $0x520] sm:$0xff]
    %v262 = vld [vmem:[#allocation5 + $0x528] sm:$0xff]
    %v263 = vld [vmem:[#allocation5 + $0x530] sm:$0xff]
    %v264 = vld [vmem:[#allocation5 + $0x538] sm:$0xff]
    %v265 = vld [vmem:[#allocation5 + $0x540] sm:$0xff]
    %v266 = vld [vmem:[#allocation5 + $0x548] sm:$0xff]
    %v267 = vld [vmem:[#allocation5 + $0x550] sm:$0xff]
    %v268 = vld [vmem:[#allocation5 + $0x558] sm:$0xff]
    %v269 = vld [vmem:[#allocation5 + $0x560] sm:$0xff]
    %v270 = vld [vmem:[#allocation5 + $0x568] sm:$0xff]
    %v271 = vld [vmem:[#allocation5 + $0x570] sm:$0xff]
    %v272 = vld [vmem:[#allocation5 + $0x578] sm:$0xff]
    %v273 = vld [vmem:[#allocation5 + $0x580] sm:$0xff]
    %v274 = vld [vmem:[#allocation5 + $0x588] sm:$0xff]
    %v275 = vld [vmem:[#allocation5 + $0x590] sm:$0xff]
    %v276 = vld [vmem:[#allocation5 + $0x598] sm:$0xff]
    %v277 = vld [vmem:[#allocation5 + $0x5a0] sm:$0xff]
    %v278 = vld [vmem:[#allocation5 + $0x5a8] sm:$0xff]
    %v279 = vld [vmem:[#allocation5 + $0x5b0] sm:$0xff]
    %v280 = vld [vmem:[#allocation5 + $0x5b8] sm:$0xff]
    %v281 = vld [vmem:[#allocation5 + $0x5c0] sm:$0xff]
    %v282 = vld [vmem:[#allocation5 + $0x5c8] sm:$0xff]
    %v283 = vld [vmem:[#allocation5 + $0x5d0] sm:$0xff]
    %v284 = vld [vmem:[#allocation5 + $0x5d8] sm:$0xff]
    %v285 = vld [vmem:[#allocation5 + $0x5e0] sm:$0xff]
    %v286 = vld [vmem:[#allocation5 + $0x5e8] sm:$0xff]
    %v287 = vld [vmem:[#allocation5 + $0x5f0] sm:$0xff]
    %v288 = vld [vmem:[#allocation5 + $0x5f8] sm:$0xff]
    %v289 = vld [vmem:[#allocation5 + $0x600] sm:$0xff]
    %v290 = vld [vmem:[#allocation5 + $0x608] sm:$0xff]
    %v291 = vld [vmem:[#allocation5 + $0x610] sm:$0xff]
    %v292 = vld [vmem:[#allocation5 + $0x618] sm:$0xff]
    %v293 = vld [vmem:[#allocation5 + $0x620] sm:$0xff]
    %v294 = vld [vmem:[#allocation5 + $0x628] sm:$0xff]
    %v295 = vld [vmem:[#allocation5 + $0x630] sm:$0xff]
    %v296 = vld [vmem:[#allocation5 + $0x638] sm:$0xff]
    %v297 = vld [vmem:[#allocation5 + $0x640] sm:$0xff]
    %v298 = vld [vmem:[#allocation5 + $0x648] sm:$0xff]
    %v299 = vld [vmem:[#allocation5 + $0x650] sm:$0xff]
    %v300 = vld [vmem:[#allocation5 + $0x658] sm:$0xff]
    %v301 = vld [vmem:[#allocation5 + $0x660] sm:$0xff]
    %v302 = vld [vmem:[#allocation5 + $0x668] sm:$0xff]
    %v303 = vld [vmem:[#allocation5 + $0x670] sm:$0xff]
    %v304 = vld [vmem:[#allocation5 + $0x678] sm:$0xff]
    %v305 = vld [vmem:[#allocation5 + $0x680] sm:$0xff]
    %v306 = vld [vmem:[#allocation5 + $0x688] sm:$0xff]
    %v307 = vld [vmem:[#allocation5 + $0x690] sm:$0xff]
    %v308 = vld [vmem:[#allocation5 + $0x698] sm:$0xff]
    %v309 = vld [vmem:[#allocation5 + $0x6a0] sm:$0xff]
    %v310 = vld [vmem:[#allocation5 + $0x6a8] sm:$0xff]
    %v311 = vld [vmem:[#allocation5 + $0x6b0] sm:$0xff]
    %v312 = vld [vmem:[#allocation5 + $0x6b8] sm:$0xff]
    %v313 = vld [vmem:[#allocation5 + $0x6c0] sm:$0xff]
    %v314 = vld [vmem:[#allocation5 + $0x6c8] sm:$0xff]
    %v315 = vld [vmem:[#allocation5 + $0x6d0] sm:$0xff]
    %v316 = vld [vmem:[#allocation5 + $0x6d8] sm:$0xff]
    %v317 = vld [vmem:[#allocation5 + $0x6e0] sm:$0xff]
    %v318 = vld [vmem:[#allocation5 + $0x6e8] sm:$0xff]
    %v319 = vld [vmem:[#allocation5 + $0x6f0] sm:$0xff]
    %v320 = vld [vmem:[#allocation5 + $0x6f8] sm:$0xff]
    %v321 = vld [vmem:[#allocation5 + $0x700] sm:$0xff]
    %v322 = vld [vmem:[#allocation5 + $0x708] sm:$0xff]
    %v323 = vld [vmem:[#allocation5 + $0x710] sm:$0xff]
    %v324 = vld [vmem:[#allocation5 + $0x718] sm:$0xff]
    %v325 = vld [vmem:[#allocation5 + $0x720] sm:$0xff]
    %v326 = vld [vmem:[#allocation5 + $0x728] sm:$0xff]
    %v327 = vld [vmem:[#allocation5 + $0x730] sm:$0xff]
    %v328 = vld [vmem:[#allocation5 + $0x738] sm:$0xff]
    %v329 = vld [vmem:[#allocation5 + $0x740] sm:$0xff]
    %v330 = vld [vmem:[#allocation5 + $0x748] sm:$0xff]
    %v331 = vld [vmem:[#allocation5 + $0x750] sm:$0xff]
    %v332 = vld [vmem:[#allocation5 + $0x758] sm:$0xff]
    %v333 = vld [vmem:[#allocation5 + $0x760] sm:$0xff]
    %v334 = vld [vmem:[#allocation5 + $0x768] sm:$0xff]
    %v335 = vld [vmem:[#allocation5 + $0x770] sm:$0xff]
    %v336 = vld [vmem:[#allocation5 + $0x778] sm:$0xff]
    %v337 = vld [vmem:[#allocation5 + $0x780] sm:$0xff]
    %v338 = vld [vmem:[#allocation5 + $0x788] sm:$0xff]
    %v339 = vld [vmem:[#allocation5 + $0x790] sm:$0xff]
    %v340 = vld [vmem:[#allocation5 + $0x798] sm:$0xff]
    %v341 = vld [vmem:[#allocation5 + $0x7a0] sm:$0xff]
    %v342 = vld [vmem:[#allocation5 + $0x7a8] sm:$0xff]
    %v343 = vld [vmem:[#allocation5 + $0x7b0] sm:$0xff]
    %v344 = vld [vmem:[#allocation5 + $0x7b8] sm:$0xff]
    %v345 = vld [vmem:[#allocation5 + $0x7c0] sm:$0xff]
    %v346 = vld [vmem:[#allocation5 + $0x7c8] sm:$0xff]
    %v347 = vld [vmem:[#allocation5 + $0x7d0] sm:$0xff]
    %v348 = vld [vmem:[#allocation5 + $0x7d8] sm:$0xff]
    %v349 = vld [vmem:[#allocation5 + $0x7e0] sm:$0xff]
    %v350 = vld [vmem:[#allocation5 + $0x7e8] sm:$0xff]
    %v351 = vld [vmem:[#allocation5 + $0x7f0] sm:$0xff]
    %v352 = vld [vmem:[#allocation5 + $0x7f8] sm:$0xff]
    %v353 = vld [vmem:[#allocation5 + $0x800] sm:$0xff]
    %v354 = vld [vmem:[#allocation5 + $0x808] sm:$0xff]
    %v355 = vld [vmem:[#allocation5 + $0x810] sm:$0xff]
    %v356 = vld [vmem:[#allocation5 + $0x818] sm:$0xff]
    %v357 = vld [vmem:[#allocation5 + $0x820] sm:$0xff]
    %v358 = vld [vmem:[#allocation5 + $0x828] sm:$0xff]
    %v359 = vld [vmem:[#allocation5 + $0x830] sm:$0xff]
    %v360 = vld [vmem:[#allocation5 + $0x838] sm:$0xff]
    %v361 = vld [vmem:[#allocation5 + $0x840] sm:$0xff]
    %v362 = vld [vmem:[#allocation5 + $0x848] sm:$0xff]
    %v363 = vld [vmem:[#allocation5 + $0x850] sm:$0xff]
    %v364 = vld [vmem:[#allocation5 + $0x858] sm:$0xff]
    %v365 = vld [vmem:[#allocation5 + $0x860] sm:$0xff]
    %v366 = vld [vmem:[#allocation5 + $0x868] sm:$0xff]
    %v367 = vld [vmem:[#allocation5 + $0x870] sm:$0xff]
    %v368 = vld [vmem:[#allocation5 + $0x878] sm:$0xff]
    %v369 = vld [vmem:[#allocation5 + $0x880] sm:$0xff]
    %v370 = vld [vmem:[#allocation5 + $0x888] sm:$0xff]
    %v371 = vld [vmem:[#allocation5 + $0x890] sm:$0xff]
    %v372 = vld [vmem:[#allocation5 + $0x898] sm:$0xff]
    %v373 = vld [vmem:[#allocation5 + $0x8a0] sm:$0xff]
    %v374 = vld [vmem:[#allocation5 + $0x8a8] sm:$0xff]
    %v375 = vld [vmem:[#allocation5 + $0x8b0] sm:$0xff]
    %v376 = vld [vmem:[#allocation5 + $0x8b8] sm:$0xff]
    %v377 = vld [vmem:[#allocation5 + $0x8c0] sm:$0xff]
    %v378 = vld [vmem:[#allocation5 + $0x8c8] sm:$0xff]
    %v379 = vld [vmem:[#allocation5 + $0x8d0] sm:$0xff]
    %v380 = vld [vmem:[#allocation5 + $0x8d8] sm:$0xff]
    %v381 = vld [vmem:[#allocation5 + $0x8e0] sm:$0xff]
    %v382 = vld [vmem:[#allocation5 + $0x8e8] sm:$0xff]
    %v383 = vld [vmem:[#allocation5 + $0x8f0] sm:$0xff]
    %v384 = vld [vmem:[#allocation5 + $0x8f8] sm:$0xff]
    %v385 = vld [vmem:[#allocation5 + $0x900] sm:$0xff]
    %v386 = vld [vmem:[#allocation5 + $0x908] sm:$0xff]
    %v387 = vld [vmem:[#allocation5 + $0x910] sm:$0xff]
    %v388 = vld [vmem:[#allocation5 + $0x918] sm:$0xff]
    %v389 = vld [vmem:[#allocation5 + $0x920] sm:$0xff]
    %v390 = vld [vmem:[#allocation5 + $0x928] sm:$0xff]
    %v391 = vld [vmem:[#allocation5 + $0x930] sm:$0xff]
    %v392 = vld [vmem:[#allocation5 + $0x938] sm:$0xff]
    %v393 = vld [vmem:[#allocation5 + $0x940] sm:$0xff]
    %v394 = vld [vmem:[#allocation5 + $0x948] sm:$0xff]
    %v395 = vld [vmem:[#allocation5 + $0x950] sm:$0xff]
    %v396 = vld [vmem:[#allocation5 + $0x958] sm:$0xff]
    %v397 = vld [vmem:[#allocation5 + $0x960] sm:$0xff]
    %v398 = vld [vmem:[#allocation5 + $0x968] sm:$0xff]
    %v399 = vld [vmem:[#allocation5 + $0x970] sm:$0xff]
    %v400 = vld [vmem:[#allocation5 + $0x978] sm:$0xff]
    %v401 = vld [vmem:[#allocation5 + $0x980] sm:$0xff]
    %v402 = vld [vmem:[#allocation5 + $0x988] sm:$0xff]
    %v403 = vld [vmem:[#allocation5 + $0x990] sm:$0xff]
    %v404 = vld [vmem:[#allocation5 + $0x998] sm:$0xff]
    %v405 = vld [vmem:[#allocation5 + $0x9a0] sm:$0xff]
    %v406 = vld [vmem:[#allocation5 + $0x9a8] sm:$0xff]
    %v407 = vld [vmem:[#allocation5 + $0x9b0] sm:$0xff]
    %v408 = vld [vmem:[#allocation5 + $0x9b8] sm:$0xff]
    %v409 = vld [vmem:[#allocation5 + $0x9c0] sm:$0xff]
    %v410 = vld [vmem:[#allocation5 + $0x9c8] sm:$0xff]
    %v411 = vld [vmem:[#allocation5 + $0x9d0] sm:$0xff]
    %v412 = vld [vmem:[#allocation5 + $0x9d8] sm:$0xff]
    %v413 = vld [vmem:[#allocation5 + $0x9e0] sm:$0xff]
    %v414 = vld [vmem:[#allocation5 + $0x9e8] sm:$0xff]
    %v415 = vld [vmem:[#allocation5 + $0x9f0] sm:$0xff]
    %v416 = vld [vmem:[#allocation5 + $0x9f8] sm:$0xff]
    %v417 = vld [vmem:[#allocation5 + $0xa00] sm:$0xff]
    %v418 = vld [vmem:[#allocation5 + $0xa08] sm:$0xff]
    %v419 = vld [vmem:[#allocation5 + $0xa10] sm:$0xff]
    %v420 = vld [vmem:[#allocation5 + $0xa18] sm:$0xff]
    %v421 = vld [vmem:[#allocation5 + $0xa20] sm:$0xff]
    %v422 = vld [vmem:[#allocation5 + $0xa28] sm:$0xff]
    %v423 = vld [vmem:[#allocation5 + $0xa30] sm:$0xff]
    %v424 = vld [vmem:[#allocation5 + $0xa38] sm:$0xff]
    %v425 = vld [vmem:[#allocation5 + $0xa40] sm:$0xff]
    %v426 = vld [vmem:[#allocation5 + $0xa48] sm:$0xff]
    %v427 = vld [vmem:[#allocation5 + $0xa50] sm:$0xff]
    %v428 = vld [vmem:[#allocation5 + $0xa58] sm:$0xff]
    %v429 = vld [vmem:[#allocation5 + $0xa60] sm:$0xff]
    %v430 = vld [vmem:[#allocation5 + $0xa68] sm:$0xff]
    %v431 = vld [vmem:[#allocation5 + $0xa70] sm:$0xff]
    %v432 = vld [vmem:[#allocation5 + $0xa78] sm:$0xff]
    %v433 = vld [vmem:[#allocation5 + $0xa80] sm:$0xff]
    %v434 = vld [vmem:[#allocation5 + $0xa88] sm:$0xff]
    %v435 = vld [vmem:[#allocation5 + $0xa90] sm:$0xff]
    %v436 = vld [vmem:[#allocation5 + $0xa98] sm:$0xff]
    %v437 = vld [vmem:[#allocation5 + $0xaa0] sm:$0xff]
    %v438 = vld [vmem:[#allocation5 + $0xaa8] sm:$0xff]
    %v439 = vld [vmem:[#allocation5 + $0xab0] sm:$0xff]
    %v440 = vld [vmem:[#allocation5 + $0xab8] sm:$0xff]
    %v441 = vld [vmem:[#allocation5 + $0xac0] sm:$0xff]
    %v442 = vld [vmem:[#allocation5 + $0xac8] sm:$0xff]
    %v443 = vld [vmem:[#allocation5 + $0xad0] sm:$0xff]
    %v444 = vld [vmem:[#allocation5 + $0xad8] sm:$0xff]
    %v445 = vld [vmem:[#allocation5 + $0xae0] sm:$0xff]
    %v446 = vld [vmem:[#allocation5 + $0xae8] sm:$0xff]
    %v447 = vld [vmem:[#allocation5 + $0xaf0] sm:$0xff]
    %v448 = vld [vmem:[#allocation5 + $0xaf8] sm:$0xff]
    %v449 = vld [vmem:[#allocation5 + $0xb00] sm:$0xff]
    %v450 = vld [vmem:[#allocation5 + $0xb08] sm:$0xff]
    %v451 = vld [vmem:[#allocation5 + $0xb10] sm:$0xff]
    %v452 = vld [vmem:[#allocation5 + $0xb18] sm:$0xff]
    %v453 = vld [vmem:[#allocation5 + $0xb20] sm:$0xff]
    %v454 = vld [vmem:[#allocation5 + $0xb28] sm:$0xff]
    %v455 = vld [vmem:[#allocation5 + $0xb30] sm:$0xff]
    %v456 = vld [vmem:[#allocation5 + $0xb38] sm:$0xff]
    %v457 = vld [vmem:[#allocation5 + $0xb40] sm:$0xff]
    %v458 = vld [vmem:[#allocation5 + $0xb48] sm:$0xff]
    %v459 = vld [vmem:[#allocation5 + $0xb50] sm:$0xff]
    %v460 = vld [vmem:[#allocation5 + $0xb58] sm:$0xff]
    %v461 = vld [vmem:[#allocation5 + $0xb60] sm:$0xff]
    %v462 = vld [vmem:[#allocation5 + $0xb68] sm:$0xff]
    %v463 = vld [vmem:[#allocation5 + $0xb70] sm:$0xff]
    %v464 = vld [vmem:[#allocation5 + $0xb78] sm:$0xff]
    %v465 = vld [vmem:[#allocation5 + $0xb80] sm:$0xff]
    %v466 = vld [vmem:[#allocation5 + $0xb88] sm:$0xff]
    %v467 = vld [vmem:[#allocation5 + $0xb90] sm:$0xff]
    %v468 = vld [vmem:[#allocation5 + $0xb98] sm:$0xff]
    %v469 = vld [vmem:[#allocation5 + $0xba0] sm:$0xff]
    %v470 = vld [vmem:[#allocation5 + $0xba8] sm:$0xff]
    %v471 = vld [vmem:[#allocation5 + $0xbb0] sm:$0xff]
    %v472 = vld [vmem:[#allocation5 + $0xbb8] sm:$0xff]
    %v473 = vld [vmem:[#allocation5 + $0xbc0] sm:$0xff]
    %v474 = vld [vmem:[#allocation5 + $0xbc8] sm:$0xff]
    %v475 = vld [vmem:[#allocation5 + $0xbd0] sm:$0xff]
    %v476 = vld [vmem:[#allocation5 + $0xbd8] sm:$0xff]
    %v477 = vld [vmem:[#allocation5 + $0xbe0] sm:$0xff]
    %v478 = vld [vmem:[#allocation5 + $0xbe8] sm:$0xff]
    %v479 = vld [vmem:[#allocation5 + $0xbf0] sm:$0xff]
    %v480 = vld [vmem:[#allocation5 + $0xbf8] sm:$0xff]
    %v481 = vld [vmem:[#allocation5 + $0xc00] sm:$0xff]
    %v482 = vld [vmem:[#allocation5 + $0xc08] sm:$0xff]
    %v483 = vld [vmem:[#allocation5 + $0xc10] sm:$0xff]
    %v484 = vld [vmem:[#allocation5 + $0xc18] sm:$0xff]
    %v485 = vld [vmem:[#allocation5 + $0xc20] sm:$0xff]
    %v486 = vld [vmem:[#allocation5 + $0xc28] sm:$0xff]
    %v487 = vld [vmem:[#allocation5 + $0xc30] sm:$0xff]
    %v488 = vld [vmem:[#allocation5 + $0xc38] sm:$0xff]
    %v489 = vld [vmem:[#allocation5 + $0xc40] sm:$0xff]
    %v490 = vld [vmem:[#allocation5 + $0xc48] sm:$0xff]
    %v491 = vld [vmem:[#allocation5 + $0xc50] sm:$0xff]
    %v492 = vld [vmem:[#allocation5 + $0xc58] sm:$0xff]
    %v493 = vld [vmem:[#allocation5 + $0xc60] sm:$0xff]
    %v494 = vld [vmem:[#allocation5 + $0xc68] sm:$0xff]
    %v495 = vld [vmem:[#allocation5 + $0xc70] sm:$0xff]
    %v496 = vld [vmem:[#allocation5 + $0xc78] sm:$0xff]
    %v497 = vld [vmem:[#allocation5 + $0xc80] sm:$0xff]
    %v498 = vld [vmem:[#allocation5 + $0xc88] sm:$0xff]
    %v499 = vld [vmem:[#allocation5 + $0xc90] sm:$0xff]
    %v500 = vld [vmem:[#allocation5 + $0xc98] sm:$0xff]
    %v501 = vld [vmem:[#allocation5 + $0xca0] sm:$0xff]
    %v502 = vld [vmem:[#allocation5 + $0xca8] sm:$0xff]
    %v503 = vld [vmem:[#allocation5 + $0xcb0] sm:$0xff]
    %v504 = vld [vmem:[#allocation5 + $0xcb8] sm:$0xff]
    %v505 = vld [vmem:[#allocation5 + $0xcc0] sm:$0xff]
    %v506 = vld [vmem:[#allocation5 + $0xcc8] sm:$0xff]
    %v507 = vld [vmem:[#allocation5 + $0xcd0] sm:$0xff]
    %v508 = vld [vmem:[#allocation5 + $0xcd8] sm:$0xff]
    %v509 = vld [vmem:[#allocation5 + $0xce0] sm:$0xff]
    %v510 = vld [vmem:[#allocation5 + $0xce8] sm:$0xff]
    %v511 = vld [vmem:[#allocation5 + $0xcf0] sm:$0xff]
    %v512 = vld [vmem:[#allocation5 + $0xcf8] sm:$0xff]
    %v513 = vld [vmem:[#allocation5 + $0xd00] sm:$0xff]
    %v514 = vld [vmem:[#allocation5 + $0xd08] sm:$0xff]
    %v515 = vld [vmem:[#allocation5 + $0xd10] sm:$0xff]
    %v516 = vld [vmem:[#allocation5 + $0xd18] sm:$0xff]
    %v517 = vld [vmem:[#allocation5 + $0xd20] sm:$0xff]
    %v518 = vld [vmem:[#allocation5 + $0xd28] sm:$0xff]
    %v519 = vld [vmem:[#allocation5 + $0xd30] sm:$0xff]
    %v520 = vld [vmem:[#allocation5 + $0xd38] sm:$0xff]
    %v521 = vld [vmem:[#allocation5 + $0xd40] sm:$0xff]
    %v522 = vld [vmem:[#allocation5 + $0xd48] sm:$0xff]
    %v523 = vld [vmem:[#allocation5 + $0xd50] sm:$0xff]
    %v524 = vld [vmem:[#allocation5 + $0xd58] sm:$0xff]
    %v525 = vld [vmem:[#allocation5 + $0xd60] sm:$0xff]
    %v526 = vld [vmem:[#allocation5 + $0xd68] sm:$0xff]
    %v527 = vld [vmem:[#allocation5 + $0xd70] sm:$0xff]
    %v528 = vld [vmem:[#allocation5 + $0xd78] sm:$0xff]
    %v529 = vld [vmem:[#allocation5 + $0xd80] sm:$0xff]
    %v530 = vld [vmem:[#allocation5 + $0xd88] sm:$0xff]
    %v531 = vld [vmem:[#allocation5 + $0xd90] sm:$0xff]
    %v532 = vld [vmem:[#allocation5 + $0xd98] sm:$0xff]
    %v533 = vld [vmem:[#allocation5 + $0xda0] sm:$0xff]
    %v534 = vld [vmem:[#allocation5 + $0xda8] sm:$0xff]
    %v535 = vld [vmem:[#allocation5 + $0xdb0] sm:$0xff]
    %v536 = vld [vmem:[#allocation5 + $0xdb8] sm:$0xff]
    %v537 = vld [vmem:[#allocation5 + $0xdc0] sm:$0xff]
    %v538 = vld [vmem:[#allocation5 + $0xdc8] sm:$0xff]
    %v539 = vld [vmem:[#allocation5 + $0xdd0] sm:$0xff]
    %v540 = vld [vmem:[#allocation5 + $0xdd8] sm:$0xff]
    %v541 = vld [vmem:[#allocation5 + $0xde0] sm:$0xff]
    %v542 = vld [vmem:[#allocation5 + $0xde8] sm:$0xff]
    %v543 = vld [vmem:[#allocation5 + $0xdf0] sm:$0xff]
    %v544 = vld [vmem:[#allocation5 + $0xdf8] sm:$0xff]
    %v545 = vld [vmem:[#allocation5 + $0xe00] sm:$0xff]
    %v546 = vld [vmem:[#allocation5 + $0xe08] sm:$0xff]
    %v547 = vld [vmem:[#allocation5 + $0xe10] sm:$0xff]
    %v548 = vld [vmem:[#allocation5 + $0xe18] sm:$0xff]
    %v549 = vld [vmem:[#allocation5 + $0xe20] sm:$0xff]
    %v550 = vld [vmem:[#allocation5 + $0xe28] sm:$0xff]
    %v551 = vld [vmem:[#allocation5 + $0xe30] sm:$0xff]
    %v552 = vld [vmem:[#allocation5 + $0xe38] sm:$0xff]
    %v553 = vld [vmem:[#allocation5 + $0xe40] sm:$0xff]
    %v554 = vld [vmem:[#allocation5 + $0xe48] sm:$0xff]
    %v555 = vld [vmem:[#allocation5 + $0xe50] sm:$0xff]
    %v556 = vld [vmem:[#allocation5 + $0xe58] sm:$0xff]
    %v557 = vld [vmem:[#allocation5 + $0xe60] sm:$0xff]
    %v558 = vld [vmem:[#allocation5 + $0xe68] sm:$0xff]
    %v559 = vld [vmem:[#allocation5 + $0xe70] sm:$0xff]
    %v560 = vld [vmem:[#allocation5 + $0xe78] sm:$0xff]
    %v561 = vld [vmem:[#allocation5 + $0xe80] sm:$0xff]
    %v562 = vld [vmem:[#allocation5 + $0xe88] sm:$0xff]
    %v563 = vld [vmem:[#allocation5 + $0xe90] sm:$0xff]
    %v564 = vld [vmem:[#allocation5 + $0xe98] sm:$0xff]
    %v565 = vld [vmem:[#allocation5 + $0xea0] sm:$0xff]
    %v566 = vld [vmem:[#allocation5 + $0xea8] sm:$0xff]
    %v567 = vld [vmem:[#allocation5 + $0xeb0] sm:$0xff]
    %v568 = vld [vmem:[#allocation5 + $0xeb8] sm:$0xff]
    %v569 = vld [vmem:[#allocation5 + $0xec0] sm:$0xff]
    %v570 = vld [vmem:[#allocation5 + $0xec8] sm:$0xff]
    %v571 = vld [vmem:[#allocation5 + $0xed0] sm:$0xff]
    %v572 = vld [vmem:[#allocation5 + $0xed8] sm:$0xff]
    %v573 = vld [vmem:[#allocation5 + $0xee0] sm:$0xff]
    %v574 = vld [vmem:[#allocation5 + $0xee8] sm:$0xff]
    %v575 = vld [vmem:[#allocation5 + $0xef0] sm:$0xff]
    %v576 = vld [vmem:[#allocation5 + $0xef8] sm:$0xff]
    %v577 = vld [vmem:[#allocation5 + $0xf00] sm:$0xff]
    %v578 = vld [vmem:[#allocation5 + $0xf08] sm:$0xff]
    %v579 = vld [vmem:[#allocation5 + $0xf10] sm:$0xff]
    %v580 = vld [vmem:[#allocation5 + $0xf18] sm:$0xff]
    %v581 = vld [vmem:[#allocation5 + $0xf20] sm:$0xff]
    %v582 = vld [vmem:[#allocation5 + $0xf28] sm:$0xff]
    %v583 = vld [vmem:[#allocation5 + $0xf30] sm:$0xff]
    %v584 = vld [vmem:[#allocation5 + $0xf38] sm:$0xff]
    %v585 = vld [vmem:[#allocation5 + $0xf40] sm:$0xff]
    %v586 = vld [vmem:[#allocation5 + $0xf48] sm:$0xff]
    %v587 = vld [vmem:[#allocation5 + $0xf50] sm:$0xff]
    %v588 = vld [vmem:[#allocation5 + $0xf58] sm:$0xff]
    %v589 = vld [vmem:[#allocation5 + $0xf60] sm:$0xff]
    %v590 = vld [vmem:[#allocation5 + $0xf68] sm:$0xff]
    %v591 = vld [vmem:[#allocation5 + $0xf70] sm:$0xff]
    %v592 = vld [vmem:[#allocation5 + $0xf78] sm:$0xff]
    %v593 = vld [vmem:[#allocation5 + $0xf80] sm:$0xff]
    %v594 = vld [vmem:[#allocation5 + $0xf88] sm:$0xff]
    %v595 = vld [vmem:[#allocation5 + $0xf90] sm:$0xff]
    %v596 = vld [vmem:[#allocation5 + $0xf98] sm:$0xff]
    %v597 = vld [vmem:[#allocation5 + $0xfa0] sm:$0xff]
    %v598 = vld [vmem:[#allocation5 + $0xfa8] sm:$0xff]
    %v599 = vld [vmem:[#allocation5 + $0xfb0] sm:$0xff]
    %v600 = vld [vmem:[#allocation5 + $0xfb8] sm:$0xff]
    %v601 = vld [vmem:[#allocation5 + $0xfc0] sm:$0xff]
    %v602 = vld [vmem:[#allocation5 + $0xfc8] sm:$0xff]
    %v603 = vld [vmem:[#allocation5 + $0xfd0] sm:$0xff]
    %v604 = vld [vmem:[#allocation5 + $0xfd8] sm:$0xff]
    %v605 = vld [vmem:[#allocation5 + $0xfe0] sm:$0xff]
    %v606 = vld [vmem:[#allocation5 + $0xfe8] sm:$0xff]
    %v607 = vld [vmem:[#allocation5 + $0xff0] sm:$0xff]
    %v608 = vld [vmem:[#allocation5 + $0xff8] sm:$0xff]
    %v609 = vld [vmem:[#allocation5 + $0x1000] sm:$0xff]
    %v610 = vld [vmem:[#allocation5 + $0x1008] sm:$0xff]
    %v611 = vld [vmem:[#allocation5 + $0x1010] sm:$0xff]
    %v612 = vld [vmem:[#allocation5 + $0x1018] sm:$0xff]
    %v613 = vld [vmem:[#allocation5 + $0x1020] sm:$0xff]
    %v614 = vld [vmem:[#allocation5 + $0x1028] sm:$0xff]
    %v615 = vld [vmem:[#allocation5 + $0x1030] sm:$0xff]
    %v616 = vld [vmem:[#allocation5 + $0x1038] sm:$0xff]
    %v617 = vld [vmem:[#allocation5 + $0x1040] sm:$0xff]
    %v618 = vld [vmem:[#allocation5 + $0x1048] sm:$0xff]
    %v619 = vld [vmem:[#allocation5 + $0x1050] sm:$0xff]
    %v620 = vld [vmem:[#allocation5 + $0x1058] sm:$0xff]
    %v621 = vld [vmem:[#allocation5 + $0x1060] sm:$0xff]
    %v622 = vld [vmem:[#allocation5 + $0x1068] sm:$0xff]
    %v623 = vld [vmem:[#allocation5 + $0x1070] sm:$0xff]
    %v624 = vld [vmem:[#allocation5 + $0x1078] sm:$0xff]
    %v625 = vld [vmem:[#allocation5 + $0x1080] sm:$0xff]
    %v626 = vld [vmem:[#allocation5 + $0x1088] sm:$0xff]
    %v627 = vld [vmem:[#allocation5 + $0x1090] sm:$0xff]
    %v628 = vld [vmem:[#allocation5 + $0x1098] sm:$0xff]
    %v629 = vld [vmem:[#allocation5 + $0x10a0] sm:$0xff]
    %v630 = vld [vmem:[#allocation5 + $0x10a8] sm:$0xff]
    %v631 = vld [vmem:[#allocation5 + $0x10b0] sm:$0xff]
    %v632 = vld [vmem:[#allocation5 + $0x10b8] sm:$0xff]
    %v633 = vld [vmem:[#allocation5 + $0x10c0] sm:$0xff]
    %v634 = vld [vmem:[#allocation5 + $0x10c8] sm:$0xff]
    %v635 = vld [vmem:[#allocation5 + $0x10d0] sm:$0xff]
    %v636 = vld [vmem:[#allocation5 + $0x10d8] sm:$0xff]
    %v637 = vld [vmem:[#allocation5 + $0x10e0] sm:$0xff]
    %v638 = vld [vmem:[#allocation5 + $0x10e8] sm:$0xff]
    %v639 = vld [vmem:[#allocation5 + $0x10f0] sm:$0xff]
    %v640 = vld [vmem:[#allocation5 + $0x10f8] sm:$0xff]
    %v641 = vld [vmem:[#allocation5 + $0x1100] sm:$0xff]
    %v642 = vld [vmem:[#allocation5 + $0x1108] sm:$0xff]
    %v643 = vld [vmem:[#allocation5 + $0x1110] sm:$0xff]
    %v644 = vld [vmem:[#allocation5 + $0x1118] sm:$0xff]
    %v645 = vld [vmem:[#allocation5 + $0x1120] sm:$0xff]
    %v646 = vld [vmem:[#allocation5 + $0x1128] sm:$0xff]
    %v647 = vld [vmem:[#allocation5 + $0x1130] sm:$0xff]
    %v648 = vld [vmem:[#allocation5 + $0x1138] sm:$0xff]
    %v649 = vld [vmem:[#allocation5 + $0x1140] sm:$0xff]
    %v650 = vld [vmem:[#allocation5 + $0x1148] sm:$0xff]
    %v651 = vld [vmem:[#allocation5 + $0x1150] sm:$0xff]
    %v652 = vld [vmem:[#allocation5 + $0x1158] sm:$0xff]
    %v653 = vld [vmem:[#allocation5 + $0x1160] sm:$0xff]
    %v654 = vld [vmem:[#allocation5 + $0x1168] sm:$0xff]
    %v655 = vld [vmem:[#allocation5 + $0x1170] sm:$0xff]
    %v656 = vld [vmem:[#allocation5 + $0x1178] sm:$0xff]
    %v657 = vld [vmem:[#allocation5 + $0x1180] sm:$0xff]
    %v658 = vld [vmem:[#allocation5 + $0x1188] sm:$0xff]
    %v659 = vld [vmem:[#allocation5 + $0x1190] sm:$0xff]
    %v660 = vld [vmem:[#allocation5 + $0x1198] sm:$0xff]
    %v661 = vld [vmem:[#allocation5 + $0x11a0] sm:$0xff]
    %v662 = vld [vmem:[#allocation5 + $0x11a8] sm:$0xff]
    %v663 = vld [vmem:[#allocation5 + $0x11b0] sm:$0xff]
    %v664 = vld [vmem:[#allocation5 + $0x11b8] sm:$0xff]
    %v665 = vld [vmem:[#allocation5 + $0x11c0] sm:$0xff]
    %v666 = vld [vmem:[#allocation5 + $0x11c8] sm:$0xff]
    %v667 = vld [vmem:[#allocation5 + $0x11d0] sm:$0xff]
    %v668 = vld [vmem:[#allocation5 + $0x11d8] sm:$0xff]
    %v669 = vld [vmem:[#allocation5 + $0x11e0] sm:$0xff]
    %v670 = vld [vmem:[#allocation5 + $0x11e8] sm:$0xff]
    %v671 = vld [vmem:[#allocation5 + $0x11f0] sm:$0xff]
    %v672 = vld [vmem:[#allocation5 + $0x11f8] sm:$0xff]
    %v673 = vld [vmem:[#allocation5 + $0x1200] sm:$0xff]
    %v674 = vld [vmem:[#allocation5 + $0x1208] sm:$0xff]
    %v675 = vld [vmem:[#allocation5 + $0x1210] sm:$0xff]
    %v676 = vld [vmem:[#allocation5 + $0x1218] sm:$0xff]
    %v677 = vld [vmem:[#allocation5 + $0x1220] sm:$0xff]
    %v678 = vld [vmem:[#allocation5 + $0x1228] sm:$0xff]
    %v679 = vld [vmem:[#allocation5 + $0x1230] sm:$0xff]
    %v680 = vld [vmem:[#allocation5 + $0x1238] sm:$0xff]
    %v681 = vld [vmem:[#allocation5 + $0x1240] sm:$0xff]
    %v682 = vld [vmem:[#allocation5 + $0x1248] sm:$0xff]
    %v683 = vld [vmem:[#allocation5 + $0x1250] sm:$0xff]
    %v684 = vld [vmem:[#allocation5 + $0x1258] sm:$0xff]
    %v685 = vld [vmem:[#allocation5 + $0x1260] sm:$0xff]
    %v686 = vld [vmem:[#allocation5 + $0x1268] sm:$0xff]
    %v687 = vld [vmem:[#allocation5 + $0x1270] sm:$0xff]
    %v688 = vld [vmem:[#allocation5 + $0x1278] sm:$0xff]
    %v689 = vld [vmem:[#allocation5 + $0x1280] sm:$0xff]
    %v690 = vld [vmem:[#allocation5 + $0x1288] sm:$0xff]
    %v691 = vld [vmem:[#allocation5 + $0x1290] sm:$0xff]
    %v692 = vld [vmem:[#allocation5 + $0x1298] sm:$0xff]
    %v693 = vld [vmem:[#allocation5 + $0x12a0] sm:$0xff]
    %v694 = vld [vmem:[#allocation5 + $0x12a8] sm:$0xff]
    %v695 = vld [vmem:[#allocation5 + $0x12b0] sm:$0xff]
    %v696 = vld [vmem:[#allocation5 + $0x12b8] sm:$0xff]
    %v697 = vld [vmem:[#allocation5 + $0x12c0] sm:$0xff]
    %v698 = vld [vmem:[#allocation5 + $0x12c8] sm:$0xff]
    %v699 = vld [vmem:[#allocation5 + $0x12d0] sm:$0xff]
    %v700 = vld [vmem:[#allocation5 + $0x12d8] sm:$0xff]
    %v701 = vld [vmem:[#allocation5 + $0x12e0] sm:$0xff]
    %v702 = vld [vmem:[#allocation5 + $0x12e8] sm:$0xff]
    %v703 = vld [vmem:[#allocation5 + $0x12f0] sm:$0xff]
    %v704 = vld [vmem:[#allocation5 + $0x12f8] sm:$0xff]
    %v705 = vld [vmem:[#allocation5 + $0x1300] sm:$0xff]
    %v706 = vld [vmem:[#allocation5 + $0x1308] sm:$0xff]
    %v707 = vld [vmem:[#allocation5 + $0x1310] sm:$0xff]
    %v708 = vld [vmem:[#allocation5 + $0x1318] sm:$0xff]
    %v709 = vld [vmem:[#allocation5 + $0x1320] sm:$0xff]
    %v710 = vld [vmem:[#allocation5 + $0x1328] sm:$0xff]
    %v711 = vld [vmem:[#allocation5 + $0x1330] sm:$0xff]
    %v712 = vld [vmem:[#allocation5 + $0x1338] sm:$0xff]
    %v713 = vld [vmem:[#allocation5 + $0x1340] sm:$0xff]
    %v714 = vld [vmem:[#allocation5 + $0x1348] sm:$0xff]
    %v715 = vld [vmem:[#allocation5 + $0x1350] sm:$0xff]
    %v716 = vld [vmem:[#allocation5 + $0x1358] sm:$0xff]
    %v717 = vld [vmem:[#allocation5 + $0x1360] sm:$0xff]
    %v718 = vld [vmem:[#allocation5 + $0x1368] sm:$0xff]
    %v719 = vld [vmem:[#allocation5 + $0x1370] sm:$0xff]
    %v720 = vld [vmem:[#allocation5 + $0x1378] sm:$0xff]
    %v721 = vld [vmem:[#allocation5 + $0x1380] sm:$0xff]
    %v722 = vld [vmem:[#allocation5 + $0x1388] sm:$0xff]
    %v723 = vld [vmem:[#allocation5 + $0x1390] sm:$0xff]
    %v724 = vld [vmem:[#allocation5 + $0x1398] sm:$0xff]
    %v725 = vld [vmem:[#allocation5 + $0x13a0] sm:$0xff]
    %v726 = vld [vmem:[#allocation5 + $0x13a8] sm:$0xff]
    %v727 = vld [vmem:[#allocation5 + $0x13b0] sm:$0xff]
    %v728 = vld [vmem:[#allocation5 + $0x13b8] sm:$0xff]
    %v729 = vld [vmem:[#allocation5 + $0x13c0] sm:$0xff]
    %v730 = vld [vmem:[#allocation5 + $0x13c8] sm:$0xff]
    %v731 = vld [vmem:[#allocation5 + $0x13d0] sm:$0xff]
    %v732 = vld [vmem:[#allocation5 + $0x13d8] sm:$0xff]
    %v733 = vld [vmem:[#allocation5 + $0x13e0] sm:$0xff]
    %v734 = vld [vmem:[#allocation5 + $0x13e8] sm:$0xff]
    %v735 = vld [vmem:[#allocation5 + $0x13f0] sm:$0xff]
    %v736 = vld [vmem:[#allocation5 + $0x13f8] sm:$0xff]
    %v737 = vld [vmem:[#allocation5 + $0x1400] sm:$0xff]
    %v738 = vld [vmem:[#allocation5 + $0x1408] sm:$0xff]
    %v739 = vld [vmem:[#allocation5 + $0x1410] sm:$0xff]
    %v740 = vld [vmem:[#allocation5 + $0x1418] sm:$0xff]
    %v741 = vld [vmem:[#allocation5 + $0x1420] sm:$0xff]
    %v742 = vld [vmem:[#allocation5 + $0x1428] sm:$0xff]
    %v743 = vld [vmem:[#allocation5 + $0x1430] sm:$0xff]
    %v744 = vld [vmem:[#allocation5 + $0x1438] sm:$0xff]
    %v745 = vld [vmem:[#allocation5 + $0x1440] sm:$0xff]
    %v746 = vld [vmem:[#allocation5 + $0x1448] sm:$0xff]
    %v747 = vld [vmem:[#allocation5 + $0x1450] sm:$0xff]
    %v748 = vld [vmem:[#allocation5 + $0x1458] sm:$0xff]
    %v749 = vld [vmem:[#allocation5 + $0x1460] sm:$0xff]
    %v750 = vld [vmem:[#allocation5 + $0x1468] sm:$0xff]
    %v751 = vld [vmem:[#allocation5 + $0x1470] sm:$0xff]
    %v752 = vld [vmem:[#allocation5 + $0x1478] sm:$0xff]
    %v753 = vld [vmem:[#allocation5 + $0x1480] sm:$0xff]
    %v754 = vld [vmem:[#allocation5 + $0x1488] sm:$0xff]
    %v755 = vld [vmem:[#allocation5 + $0x1490] sm:$0xff]
    %v756 = vld [vmem:[#allocation5 + $0x1498] sm:$0xff]
    %v757 = vld [vmem:[#allocation5 + $0x14a0] sm:$0xff]
    %v758 = vld [vmem:[#allocation5 + $0x14a8] sm:$0xff]
    %v759 = vld [vmem:[#allocation5 + $0x14b0] sm:$0xff]
    %v760 = vld [vmem:[#allocation5 + $0x14b8] sm:$0xff]
    %v761 = vld [vmem:[#allocation5 + $0x14c0] sm:$0xff]
    %v762 = vld [vmem:[#allocation5 + $0x14c8] sm:$0xff]
    %v763 = vld [vmem:[#allocation5 + $0x14d0] sm:$0xff]
    %v764 = vld [vmem:[#allocation5 + $0x14d8] sm:$0xff]
    %v765 = vld [vmem:[#allocation5 + $0x14e0] sm:$0xff]
    %v766 = vld [vmem:[#allocation5 + $0x14e8] sm:$0xff]
    %v767 = vld [vmem:[#allocation5 + $0x14f0] sm:$0xff]
    %v768 = vld [vmem:[#allocation5 + $0x14f8] sm:$0xff]
    %v769 = vld [vmem:[#allocation5 + $0x1500] sm:$0xff]
    %v770 = vld [vmem:[#allocation5 + $0x1508] sm:$0xff]
    %v771 = vld [vmem:[#allocation5 + $0x1510] sm:$0xff]
    %v772 = vld [vmem:[#allocation5 + $0x1518] sm:$0xff]
    %v773 = vld [vmem:[#allocation5 + $0x1520] sm:$0xff]
    %v774 = vld [vmem:[#allocation5 + $0x1528] sm:$0xff]
    %v775 = vld [vmem:[#allocation5 + $0x1530] sm:$0xff]
    %v776 = vld [vmem:[#allocation5 + $0x1538] sm:$0xff]
    %v777 = vld [vmem:[#allocation5 + $0x1540] sm:$0xff]
    %v778 = vld [vmem:[#allocation5 + $0x1548] sm:$0xff]
    %v779 = vld [vmem:[#allocation5 + $0x1550] sm:$0xff]
    %v780 = vld [vmem:[#allocation5 + $0x1558] sm:$0xff]
    %v781 = vld [vmem:[#allocation5 + $0x1560] sm:$0xff]
    %v782 = vld [vmem:[#allocation5 + $0x1568] sm:$0xff]
    %v783 = vld [vmem:[#allocation5 + $0x1570] sm:$0xff]
    %v784 = vld [vmem:[#allocation5 + $0x1578] sm:$0xff]
    %v785 = vld [vmem:[#allocation5 + $0x1580] sm:$0xff]
    %v786 = vld [vmem:[#allocation5 + $0x1588] sm:$0xff]
    %v787 = vld [vmem:[#allocation5 + $0x1590] sm:$0xff]
    %v788 = vld [vmem:[#allocation5 + $0x1598] sm:$0xff]
    %v789 = vld [vmem:[#allocation5 + $0x15a0] sm:$0xff]
    %v790 = vld [vmem:[#allocation5 + $0x15a8] sm:$0xff]
    %v791 = vld [vmem:[#allocation5 + $0x15b0] sm:$0xff]
    %v792 = vld [vmem:[#allocation5 + $0x15b8] sm:$0xff]
    %v793 = vld [vmem:[#allocation5 + $0x15c0] sm:$0xff]
    %v794 = vld [vmem:[#allocation5 + $0x15c8] sm:$0xff]
    %v795 = vld [vmem:[#allocation5 + $0x15d0] sm:$0xff]
    %v796 = vld [vmem:[#allocation5 + $0x15d8] sm:$0xff]
    %v797 = vld [vmem:[#allocation5 + $0x15e0] sm:$0xff]
    %v798 = vld [vmem:[#allocation5 + $0x15e8] sm:$0xff]
    %v799 = vld [vmem:[#allocation5 + $0x15f0] sm:$0xff]
    %v800 = vld [vmem:[#allocation5 + $0x15f8] sm:$0xff]
    %v801 = vld [vmem:[#allocation5 + $0x1600] sm:$0xff]
    %v802 = vld [vmem:[#allocation5 + $0x1608] sm:$0xff]
    %v803 = vld [vmem:[#allocation5 + $0x1610] sm:$0xff]
    %v804 = vld [vmem:[#allocation5 + $0x1618] sm:$0xff]
    %v805 = vld [vmem:[#allocation5 + $0x1620] sm:$0xff]
    %v806 = vld [vmem:[#allocation5 + $0x1628] sm:$0xff]
    %v807 = vld [vmem:[#allocation5 + $0x1630] sm:$0xff]
    %v808 = vld [vmem:[#allocation5 + $0x1638] sm:$0xff]
    %v809 = vld [vmem:[#allocation5 + $0x1640] sm:$0xff]
    %v810 = vld [vmem:[#allocation5 + $0x1648] sm:$0xff]
    %v811 = vld [vmem:[#allocation5 + $0x1650] sm:$0xff]
    %v812 = vld [vmem:[#allocation5 + $0x1658] sm:$0xff]
    %v813 = vld [vmem:[#allocation5 + $0x1660] sm:$0xff]
    %v814 = vld [vmem:[#allocation5 + $0x1668] sm:$0xff]
    %v815 = vld [vmem:[#allocation5 + $0x1670] sm:$0xff]
    %v816 = vld [vmem:[#allocation5 + $0x1678] sm:$0xff]
    %v817 = vld [vmem:[#allocation5 + $0x1680] sm:$0xff]
    %v818 = vld [vmem:[#allocation5 + $0x1688] sm:$0xff]
    %v819 = vld [vmem:[#allocation5 + $0x1690] sm:$0xff]
    %v820 = vld [vmem:[#allocation5 + $0x1698] sm:$0xff]
    %v821 = vld [vmem:[#allocation5 + $0x16a0] sm:$0xff]
    %v822 = vld [vmem:[#allocation5 + $0x16a8] sm:$0xff]
    %v823 = vld [vmem:[#allocation5 + $0x16b0] sm:$0xff]
    %v824 = vld [vmem:[#allocation5 + $0x16b8] sm:$0xff]
    %v825 = vld [vmem:[#allocation5 + $0x16c0] sm:$0xff]
    %v826 = vld [vmem:[#allocation5 + $0x16c8] sm:$0xff]
    %v827 = vld [vmem:[#allocation5 + $0x16d0] sm:$0xff]
    %v828 = vld [vmem:[#allocation5 + $0x16d8] sm:$0xff]
    %v829 = vld [vmem:[#allocation5 + $0x16e0] sm:$0xff]
    %v830 = vld [vmem:[#allocation5 + $0x16e8] sm:$0xff]
    %v831 = vld [vmem:[#allocation5 + $0x16f0] sm:$0xff]
    %v832 = vld [vmem:[#allocation5 + $0x16f8] sm:$0xff]
    %v833 = vld [vmem:[#allocation5 + $0x1700] sm:$0xff]
    %v834 = vld [vmem:[#allocation5 + $0x1708] sm:$0xff]
    %v835 = vld [vmem:[#allocation5 + $0x1710] sm:$0xff]
    %v836 = vld [vmem:[#allocation5 + $0x1718] sm:$0xff]
    %v837 = vld [vmem:[#allocation5 + $0x1720] sm:$0xff]
    %v838 = vld [vmem:[#allocation5 + $0x1728] sm:$0xff]
    %v839 = vld [vmem:[#allocation5 + $0x1730] sm:$0xff]
    %v840 = vld [vmem:[#allocation5 + $0x1738] sm:$0xff]
    %v841 = vld [vmem:[#allocation5 + $0x1740] sm:$0xff]
    %v842 = vld [vmem:[#allocation5 + $0x1748] sm:$0xff]
    %v843 = vld [vmem:[#allocation5 + $0x1750] sm:$0xff]
    %v844 = vld [vmem:[#allocation5 + $0x1758] sm:$0xff]
    %v845 = vld [vmem:[#allocation5 + $0x1760] sm:$0xff]
    %v846 = vld [vmem:[#allocation5 + $0x1768] sm:$0xff]
    %v847 = vld [vmem:[#allocation5 + $0x1770] sm:$0xff]
    %v848 = vld [vmem:[#allocation5 + $0x1778] sm:$0xff]
    %v849 = vld [vmem:[#allocation5 + $0x1780] sm:$0xff]
    %v850 = vld [vmem:[#allocation5 + $0x1788] sm:$0xff]
    %v851 = vld [vmem:[#allocation5 + $0x1790] sm:$0xff]
    %v852 = vld [vmem:[#allocation5 + $0x1798] sm:$0xff]
    %v853 = vld [vmem:[#allocation5 + $0x17a0] sm:$0xff]
    %v854 = vld [vmem:[#allocation5 + $0x17a8] sm:$0xff]
    %v855 = vld [vmem:[#allocation5 + $0x17b0] sm:$0xff]
    %v856 = vld [vmem:[#allocation5 + $0x17b8] sm:$0xff]
    %v857 = vld [vmem:[#allocation5 + $0x17c0] sm:$0xff]
    %v858 = vld [vmem:[#allocation5 + $0x17c8] sm:$0xff]
    %v859 = vld [vmem:[#allocation5 + $0x17d0] sm:$0xff]
    %v860 = vld [vmem:[#allocation5 + $0x17d8] sm:$0xff]
    %v861 = vld [vmem:[#allocation5 + $0x17e0] sm:$0xff]
    %v862 = vld [vmem:[#allocation5 + $0x17e8] sm:$0xff]
    %v863 = vld [vmem:[#allocation5 + $0x17f0] sm:$0xff]
    %v864 = vld [vmem:[#allocation5 + $0x17f8] sm:$0xff]
    %v865 = vld [vmem:[#allocation5 + $0x1800] sm:$0xff]
    %v866 = vld [vmem:[#allocation5 + $0x1808] sm:$0xff]
    %v867 = vld [vmem:[#allocation5 + $0x1810] sm:$0xff]
    %v868 = vld [vmem:[#allocation5 + $0x1818] sm:$0xff]
    %v869 = vld [vmem:[#allocation5 + $0x1820] sm:$0xff]
    %v870 = vld [vmem:[#allocation5 + $0x1828] sm:$0xff]
    %v871 = vld [vmem:[#allocation5 + $0x1830] sm:$0xff]
    %v872 = vld [vmem:[#allocation5 + $0x1838] sm:$0xff]
    %v873 = vld [vmem:[#allocation5 + $0x1840] sm:$0xff]
    %v874 = vld [vmem:[#allocation5 + $0x1848] sm:$0xff]
    %v875 = vld [vmem:[#allocation5 + $0x1850] sm:$0xff]
    %v876 = vld [vmem:[#allocation5 + $0x1858] sm:$0xff]
    %v877 = vld [vmem:[#allocation5 + $0x1860] sm:$0xff]
    %v878 = vld [vmem:[#allocation5 + $0x1868] sm:$0xff]
    %v879 = vld [vmem:[#allocation5 + $0x1870] sm:$0xff]
    %v880 = vld [vmem:[#allocation5 + $0x1878] sm:$0xff]
    %v881 = vld [vmem:[#allocation5 + $0x1880] sm:$0xff]
    %v882 = vld [vmem:[#allocation5 + $0x1888] sm:$0xff]
    %v883 = vld [vmem:[#allocation5 + $0x1890] sm:$0xff]
    %v884 = vld [vmem:[#allocation5 + $0x1898] sm:$0xff]
    %v885 = vld [vmem:[#allocation5 + $0x18a0] sm:$0xff]
    %v886 = vld [vmem:[#allocation5 + $0x18a8] sm:$0xff]
    %v887 = vld [vmem:[#allocation5 + $0x18b0] sm:$0xff]
    %v888 = vld [vmem:[#allocation5 + $0x18b8] sm:$0xff]
    %v889 = vld [vmem:[#allocation5 + $0x18c0] sm:$0xff]
    %v890 = vld [vmem:[#allocation5 + $0x18c8] sm:$0xff]
    %v891 = vld [vmem:[#allocation5 + $0x18d0] sm:$0xff]
    %v892 = vld [vmem:[#allocation5 + $0x18d8] sm:$0xff]
    %v893 = vld [vmem:[#allocation5 + $0x18e0] sm:$0xff]
    %v894 = vld [vmem:[#allocation5 + $0x18e8] sm:$0xff]
    %v895 = vld [vmem:[#allocation5 + $0x18f0] sm:$0xff]
    %v896 = vld [vmem:[#allocation5 + $0x18f8] sm:$0xff]
    %v897 = vld [vmem:[#allocation5 + $0x1900] sm:$0xff]
    %v898 = vld [vmem:[#allocation5 + $0x1908] sm:$0xff]
    %v899 = vld [vmem:[#allocation5 + $0x1910] sm:$0xff]
    %v900 = vld [vmem:[#allocation5 + $0x1918] sm:$0xff]
    %v901 = vld [vmem:[#allocation5 + $0x1920] sm:$0xff]
    %v902 = vld [vmem:[#allocation5 + $0x1928] sm:$0xff]
    %v903 = vld [vmem:[#allocation5 + $0x1930] sm:$0xff]
    %v904 = vld [vmem:[#allocation5 + $0x1938] sm:$0xff]
    %v905 = vld [vmem:[#allocation5 + $0x1940] sm:$0xff]
    %v906 = vld [vmem:[#allocation5 + $0x1948] sm:$0xff]
    %v907 = vld [vmem:[#allocation5 + $0x1950] sm:$0xff]
    %v908 = vld [vmem:[#allocation5 + $0x1958] sm:$0xff]
    %v909 = vld [vmem:[#allocation5 + $0x1960] sm:$0xff]
    %v910 = vld [vmem:[#allocation5 + $0x1968] sm:$0xff]
    %v911 = vld [vmem:[#allocation5 + $0x1970] sm:$0xff]
    %v912 = vld [vmem:[#allocation5 + $0x1978] sm:$0xff]
    %v913 = vld [vmem:[#allocation5 + $0x1980] sm:$0xff]
    %v914 = vld [vmem:[#allocation5 + $0x1988] sm:$0xff]
    %v915 = vld [vmem:[#allocation5 + $0x1990] sm:$0xff]
    %v916 = vld [vmem:[#allocation5 + $0x1998] sm:$0xff]
    %v917 = vld [vmem:[#allocation5 + $0x19a0] sm:$0xff]
    %v918 = vld [vmem:[#allocation5 + $0x19a8] sm:$0xff]
    %v919 = vld [vmem:[#allocation5 + $0x19b0] sm:$0xff]
    %v920 = vld [vmem:[#allocation5 + $0x19b8] sm:$0xff]
    %v921 = vld [vmem:[#allocation5 + $0x19c0] sm:$0xff]
    %v922 = vld [vmem:[#allocation5 + $0x19c8] sm:$0xff]
    %v923 = vld [vmem:[#allocation5 + $0x19d0] sm:$0xff]
    %v924 = vld [vmem:[#allocation5 + $0x19d8] sm:$0xff]
    %v925 = vld [vmem:[#allocation5 + $0x19e0] sm:$0xff]
    %v926 = vld [vmem:[#allocation5 + $0x19e8] sm:$0xff]
    %v927 = vld [vmem:[#allocation5 + $0x19f0] sm:$0xff]
    %v928 = vld [vmem:[#allocation5 + $0x19f8] sm:$0xff]
    %v929 = vld [vmem:[#allocation5 + $0x1a00] sm:$0xff]
    %v930 = vld [vmem:[#allocation5 + $0x1a08] sm:$0xff]
    %v931 = vld [vmem:[#allocation5 + $0x1a10] sm:$0xff]
    %v932 = vld [vmem:[#allocation5 + $0x1a18] sm:$0xff]
    %v933 = vld [vmem:[#allocation5 + $0x1a20] sm:$0xff]
    %v934 = vld [vmem:[#allocation5 + $0x1a28] sm:$0xff]
    %v935 = vld [vmem:[#allocation5 + $0x1a30] sm:$0xff]
    %v936 = vld [vmem:[#allocation5 + $0x1a38] sm:$0xff]
    %v937 = vld [vmem:[#allocation5 + $0x1a40] sm:$0xff]
    %v938 = vld [vmem:[#allocation5 + $0x1a48] sm:$0xff]
    %v939 = vld [vmem:[#allocation5 + $0x1a50] sm:$0xff]
    %v940 = vld [vmem:[#allocation5 + $0x1a58] sm:$0xff]
    %v941 = vld [vmem:[#allocation5 + $0x1a60] sm:$0xff]
    %v942 = vld [vmem:[#allocation5 + $0x1a68] sm:$0xff]
    %v943 = vld [vmem:[#allocation5 + $0x1a70] sm:$0xff]
    %v944 = vld [vmem:[#allocation5 + $0x1a78] sm:$0xff]
    %v945 = vld [vmem:[#allocation5 + $0x1a80] sm:$0xff]
    %v946 = vld [vmem:[#allocation5 + $0x1a88] sm:$0xff]
    %v947 = vld [vmem:[#allocation5 + $0x1a90] sm:$0xff]
    %v948 = vld [vmem:[#allocation5 + $0x1a98] sm:$0xff]
    %v949 = vld [vmem:[#allocation5 + $0x1aa0] sm:$0xff]
    %v950 = vld [vmem:[#allocation5 + $0x1aa8] sm:$0xff]
    %v951 = vld [vmem:[#allocation5 + $0x1ab0] sm:$0xff]
    %v952 = vld [vmem:[#allocation5 + $0x1ab8] sm:$0xff]
    %v953 = vld [vmem:[#allocation5 + $0x1ac0] sm:$0xff]
    %v954 = vld [vmem:[#allocation5 + $0x1ac8] sm:$0xff]
    %v955 = vld [vmem:[#allocation5 + $0x1ad0] sm:$0xff]
    %v956 = vld [vmem:[#allocation5 + $0x1ad8] sm:$0xff]
    %v957 = vld [vmem:[#allocation5 + $0x1ae0] sm:$0xff]
    %v958 = vld [vmem:[#allocation5 + $0x1ae8] sm:$0xff]
    %v959 = vld [vmem:[#allocation5 + $0x1af0] sm:$0xff]
    %v960 = vld [vmem:[#allocation5 + $0x1af8] sm:$0xff]
    %v961 = vld [vmem:[#allocation5 + $0x1b00] sm:$0xff]
    %v962 = vld [vmem:[#allocation5 + $0x1b08] sm:$0xff]
    %v963 = vld [vmem:[#allocation5 + $0x1b10] sm:$0xff]
    %v964 = vld [vmem:[#allocation5 + $0x1b18] sm:$0xff]
    %v965 = vld [vmem:[#allocation5 + $0x1b20] sm:$0xff]
    %v966 = vld [vmem:[#allocation5 + $0x1b28] sm:$0xff]
    %v967 = vld [vmem:[#allocation5 + $0x1b30] sm:$0xff]
    %v968 = vld [vmem:[#allocation5 + $0x1b38] sm:$0xff]
    %v969 = vld [vmem:[#allocation5 + $0x1b40] sm:$0xff]
    %v970 = vld [vmem:[#allocation5 + $0x1b48] sm:$0xff]
    %v971 = vld [vmem:[#allocation5 + $0x1b50] sm:$0xff]
    %v972 = vld [vmem:[#allocation5 + $0x1b58] sm:$0xff]
    %v973 = vld [vmem:[#allocation5 + $0x1b60] sm:$0xff]
    %v974 = vld [vmem:[#allocation5 + $0x1b68] sm:$0xff]
    %v975 = vld [vmem:[#allocation5 + $0x1b70] sm:$0xff]
    %v976 = vld [vmem:[#allocation5 + $0x1b78] sm:$0xff]
    %v977 = vld [vmem:[#allocation5 + $0x1b80] sm:$0xff]
    %v978 = vld [vmem:[#allocation5 + $0x1b88] sm:$0xff]
    %v979 = vld [vmem:[#allocation5 + $0x1b90] sm:$0xff]
    %v980 = vld [vmem:[#allocation5 + $0x1b98] sm:$0xff]
    %v981 = vld [vmem:[#allocation5 + $0x1ba0] sm:$0xff]
    %v982 = vld [vmem:[#allocation5 + $0x1ba8] sm:$0xff]
    %v983 = vld [vmem:[#allocation5 + $0x1bb0] sm:$0xff]
    %v984 = vld [vmem:[#allocation5 + $0x1bb8] sm:$0xff]
    %v985 = vld [vmem:[#allocation5 + $0x1bc0] sm:$0xff]
    %v986 = vld [vmem:[#allocation5 + $0x1bc8] sm:$0xff]
    %v987 = vld [vmem:[#allocation5 + $0x1bd0] sm:$0xff]
    %v988 = vld [vmem:[#allocation5 + $0x1bd8] sm:$0xff]
    %v989 = vld [vmem:[#allocation5 + $0x1be0] sm:$0xff]
    %v990 = vld [vmem:[#allocation5 + $0x1be8] sm:$0xff]
    %v991 = vld [vmem:[#allocation5 + $0x1bf0] sm:$0xff]
    %v992 = vld [vmem:[#allocation5 + $0x1bf8] sm:$0xff]
    %v993 = vld [vmem:[#allocation5 + $0x1c00] sm:$0xff]
    %v994 = vld [vmem:[#allocation5 + $0x1c08] sm:$0xff]
    %v995 = vld [vmem:[#allocation5 + $0x1c10] sm:$0xff]
    %v996 = vld [vmem:[#allocation5 + $0x1c18] sm:$0xff]
    %v997 = vld [vmem:[#allocation5 + $0x1c20] sm:$0xff]
    %v998 = vld [vmem:[#allocation5 + $0x1c28] sm:$0xff]
    %v999 = vld [vmem:[#allocation5 + $0x1c30] sm:$0xff]
    %v1000 = vld [vmem:[#allocation5 + $0x1c38] sm:$0xff]
    %v1001 = vld [vmem:[#allocation5 + $0x1c40] sm:$0xff]
    %v1002 = vld [vmem:[#allocation5 + $0x1c48] sm:$0xff]
    %v1003 = vld [vmem:[#allocation5 + $0x1c50] sm:$0xff]
    %v1004 = vld [vmem:[#allocation5 + $0x1c58] sm:$0xff]
    %v1005 = vld [vmem:[#allocation5 + $0x1c60] sm:$0xff]
    %v1006 = vld [vmem:[#allocation5 + $0x1c68] sm:$0xff]
    %v1007 = vld [vmem:[#allocation5 + $0x1c70] sm:$0xff]
    %v1008 = vld [vmem:[#allocation5 + $0x1c78] sm:$0xff]
    %v1009 = vld [vmem:[#allocation5 + $0x1c80] sm:$0xff]
    %v1010 = vld [vmem:[#allocation5 + $0x1c88] sm:$0xff]
    %v1011 = vld [vmem:[#allocation5 + $0x1c90] sm:$0xff]
    %v1012 = vld [vmem:[#allocation5 + $0x1c98] sm:$0xff]
    %v1013 = vld [vmem:[#allocation5 + $0x1ca0] sm:$0xff]
    %v1014 = vld [vmem:[#allocation5 + $0x1ca8] sm:$0xff]
    %v1015 = vld [vmem:[#allocation5 + $0x1cb0] sm:$0xff]
    %v1016 = vld [vmem:[#allocation5 + $0x1cb8] sm:$0xff]
    %v1017 = vld [vmem:[#allocation5 + $0x1cc0] sm:$0xff]
    %v1018 = vld [vmem:[#allocation5 + $0x1cc8] sm:$0xff]
    %v1019 = vld [vmem:[#allocation5 + $0x1cd0] sm:$0xff]
    %v1020 = vld [vmem:[#allocation5 + $0x1cd8] sm:$0xff]
    %v1021 = vld [vmem:[#allocation5 + $0x1ce0] sm:$0xff]
    %v1022 = vld [vmem:[#allocation5 + $0x1ce8] sm:$0xff]
    %v1023 = vld [vmem:[#allocation5 + $0x1cf0] sm:$0xff]
    %v1024 = vld [vmem:[#allocation5 + $0x1cf8] sm:$0xff]
    %v1025 = vld [vmem:[#allocation5 + $0x1d00] sm:$0xff]
    %v1026 = vld [vmem:[#allocation5 + $0x1d08] sm:$0xff]
    %v1027 = vld [vmem:[#allocation5 + $0x1d10] sm:$0xff]
    %v1028 = vld [vmem:[#allocation5 + $0x1d18] sm:$0xff]
    %v1029 = vld [vmem:[#allocation5 + $0x1d20] sm:$0xff]
    %v1030 = vld [vmem:[#allocation5 + $0x1d28] sm:$0xff]
    %v1031 = vld [vmem:[#allocation5 + $0x1d30] sm:$0xff]
    %v1032 = vld [vmem:[#allocation5 + $0x1d38] sm:$0xff]
    %v1033 = vld [vmem:[#allocation5 + $0x1d40] sm:$0xff]
    %v1034 = vld [vmem:[#allocation5 + $0x1d48] sm:$0xff]
    %v1035 = vld [vmem:[#allocation5 + $0x1d50] sm:$0xff]
    %v1036 = vld [vmem:[#allocation5 + $0x1d58] sm:$0xff]
    %v1037 = vld [vmem:[#allocation5 + $0x1d60] sm:$0xff]
    %v1038 = vld [vmem:[#allocation5 + $0x1d68] sm:$0xff]
    %v1039 = vld [vmem:[#allocation5 + $0x1d70] sm:$0xff]
    %v1040 = vld [vmem:[#allocation5 + $0x1d78] sm:$0xff]
    %v1041 = vld [vmem:[#allocation5 + $0x1d80] sm:$0xff]
    %v1042 = vld [vmem:[#allocation5 + $0x1d88] sm:$0xff]
    %v1043 = vld [vmem:[#allocation5 + $0x1d90] sm:$0xff]
    %v1044 = vld [vmem:[#allocation5 + $0x1d98] sm:$0xff]
    %v1045 = vld [vmem:[#allocation5 + $0x1da0] sm:$0xff]
    %v1046 = vld [vmem:[#allocation5 + $0x1da8] sm:$0xff]
    %v1047 = vld [vmem:[#allocation5 + $0x1db0] sm:$0xff]
    %v1048 = vld [vmem:[#allocation5 + $0x1db8] sm:$0xff]
    %v1049 = vld [vmem:[#allocation5 + $0x1dc0] sm:$0xff]
    %v1050 = vld [vmem:[#allocation5 + $0x1dc8] sm:$0xff]
    %v1051 = vld [vmem:[#allocation5 + $0x1dd0] sm:$0xff]
    %v1052 = vld [vmem:[#allocation5 + $0x1dd8] sm:$0xff]
    %v1053 = vld [vmem:[#allocation5 + $0x1de0] sm:$0xff]
    %v1054 = vld [vmem:[#allocation5 + $0x1de8] sm:$0xff]
    %v1055 = vld [vmem:[#allocation5 + $0x1df0] sm:$0xff]
    %v1056 = vld [vmem:[#allocation5 + $0x1df8] sm:$0xff]
    %v1057 = vld [vmem:[#allocation5 + $0x1e00] sm:$0xff]
    %v1058 = vld [vmem:[#allocation5 + $0x1e08] sm:$0xff]
    %v1059 = vld [vmem:[#allocation5 + $0x1e10] sm:$0xff]
    %v1060 = vld [vmem:[#allocation5 + $0x1e18] sm:$0xff]
    %v1061 = vld [vmem:[#allocation5 + $0x1e20] sm:$0xff]
    %v1062 = vld [vmem:[#allocation5 + $0x1e28] sm:$0xff]
    %v1063 = vld [vmem:[#allocation5 + $0x1e30] sm:$0xff]
    %v1064 = vld [vmem:[#allocation5 + $0x1e38] sm:$0xff]
    %v1065 = vld [vmem:[#allocation5 + $0x1e40] sm:$0xff]
    %v1066 = vld [vmem:[#allocation5 + $0x1e48] sm:$0xff]
    %v1067 = vld [vmem:[#allocation5 + $0x1e50] sm:$0xff]
    %v1068 = vld [vmem:[#allocation5 + $0x1e58] sm:$0xff]
    %v1069 = vld [vmem:[#allocation5 + $0x1e60] sm:$0xff]
    %v1070 = vld [vmem:[#allocation5 + $0x1e68] sm:$0xff]
    %v1071 = vld [vmem:[#allocation5 + $0x1e70] sm:$0xff]
    %v1072 = vld [vmem:[#allocation5 + $0x1e78] sm:$0xff]
    %v1073 = vld [vmem:[#allocation5 + $0x1e80] sm:$0xff]
    %v1074 = vld [vmem:[#allocation5 + $0x1e88] sm:$0xff]
    %v1075 = vld [vmem:[#allocation5 + $0x1e90] sm:$0xff]
    %v1076 = vld [vmem:[#allocation5 + $0x1e98] sm:$0xff]
    %v1077 = vld [vmem:[#allocation5 + $0x1ea0] sm:$0xff]
    %v1078 = vld [vmem:[#allocation5 + $0x1ea8] sm:$0xff]
    %v1079 = vld [vmem:[#allocation5 + $0x1eb0] sm:$0xff]
    %v1080 = vld [vmem:[#allocation5 + $0x1eb8] sm:$0xff]
    %v1081 = vld [vmem:[#allocation5 + $0x1ec0] sm:$0xff]
    %v1082 = vld [vmem:[#allocation5 + $0x1ec8] sm:$0xff]
    %v1083 = vld [vmem:[#allocation5 + $0x1ed0] sm:$0xff]
    %v1084 = vld [vmem:[#allocation5 + $0x1ed8] sm:$0xff]
    %v1085 = vld [vmem:[#allocation5 + $0x1ee0] sm:$0xff]
    %v1086 = vld [vmem:[#allocation5 + $0x1ee8] sm:$0xff]
    %v1087 = vld [vmem:[#allocation5 + $0x1ef0] sm:$0xff]
    %v1088 = vld [vmem:[#allocation5 + $0x1ef8] sm:$0xff]
    %v1089 = vld [vmem:[#allocation5 + $0x1f00] sm:$0xff]
    %v1090 = vld [vmem:[#allocation5 + $0x1f08] sm:$0xff]
    %v1091 = vld [vmem:[#allocation5 + $0x1f10] sm:$0xff]
    %v1092 = vld [vmem:[#allocation5 + $0x1f18] sm:$0xff]
    %v1093 = vld [vmem:[#allocation5 + $0x1f20] sm:$0xff]
    %v1094 = vld [vmem:[#allocation5 + $0x1f28] sm:$0xff]
    %v1095 = vld [vmem:[#allocation5 + $0x1f30] sm:$0xff]
    %v1096 = vld [vmem:[#allocation5 + $0x1f38] sm:$0xff]
    %v1097 = vld [vmem:[#allocation5 + $0x1f40] sm:$0xff]
    %v1098 = vld [vmem:[#allocation5 + $0x1f48] sm:$0xff]
    %v1099 = vld [vmem:[#allocation5 + $0x1f50] sm:$0xff]
    %v1100 = vld [vmem:[#allocation5 + $0x1f58] sm:$0xff]
    %v1101 = vld [vmem:[#allocation5 + $0x1f60] sm:$0xff]
    %v1102 = vld [vmem:[#allocation5 + $0x1f68] sm:$0xff]
    %v1103 = vld [vmem:[#allocation5 + $0x1f70] sm:$0xff]
    %v1104 = vld [vmem:[#allocation5 + $0x1f78] sm:$0xff]
    %v1105 = vld [vmem:[#allocation5 + $0x1f80] sm:$0xff]
    %v1106 = vld [vmem:[#allocation5 + $0x1f88] sm:$0xff]
    %v1107 = vld [vmem:[#allocation5 + $0x1f90] sm:$0xff]
    %v1108 = vld [vmem:[#allocation5 + $0x1f98] sm:$0xff]
    %v1109 = vld [vmem:[#allocation5 + $0x1fa0] sm:$0xff]
    %v1110 = vld [vmem:[#allocation5 + $0x1fa8] sm:$0xff]
    %v1111 = vld [vmem:[#allocation5 + $0x1fb0] sm:$0xff]
    %v1112 = vld [vmem:[#allocation5 + $0x1fb8] sm:$0xff]
    %v1113 = vld [vmem:[#allocation5 + $0x1fc0] sm:$0xff]
    %v1114 = vld [vmem:[#allocation5 + $0x1fc8] sm:$0xff]
    %v1115 = vld [vmem:[#allocation5 + $0x1fd0] sm:$0xff]
    %v1116 = vld [vmem:[#allocation5 + $0x1fd8] sm:$0xff]
    %v1117 = vld [vmem:[#allocation5 + $0x1fe0] sm:$0xff]
    %v1118 = vld [vmem:[#allocation5 + $0x1fe8] sm:$0xff]
    %v1119 = vld [vmem:[#allocation5 + $0x1ff0] sm:$0xff]
    %v1120 = vld [vmem:[#allocation5 + $0x1ff8] sm:$0xff]
    %v1121 = vld [vmem:[#allocation7] sm:$0xff]
    %v1122 = vld [vmem:[#allocation7 + $0x8] sm:$0xff]
    %v1125 = vperm.slane %v1121, 0
    %v1126 = vperm.slane %v1121, 1
    %v1127 = vperm.slane %v1121, 2
    %v1128 = vperm.slane %v1121, 3
    %v1129 = vperm.slane %v1121, 4
    %v1130 = vperm.slane %v1121, 5
    %v1131 = vperm.slane %v1121, 6
    %v1132 = vperm.slane %v1121, 7
    %v1133 = vperm.slane %v1122, 0
    %v1134 = vperm.slane %v1122, 1
    %v1135 = vperm.slane %v1122, 2
    %v1136 = vperm.slane %v1122, 3
    %v1137 = vperm.slane %v1122, 4
    %v1138 = vperm.slane %v1122, 5
    %v1139 = vperm.slane %v1122, 6
    %v1140 = vperm.slane %v1122, 7
    %1157 = vmatpush.msra.mxu0 %v337
    %1158 = vmatpush.msra.mxu0 %v321
    %1159 = vmatpush.msra.mxu0 %v305
    %1160 = vmatpush.msra.mxu0 %v289
    %1161 = vmatpush.msra.mxu0 %v273
    %1162 = vmatpush.msra.mxu0 %v257
    %1163 = vmatpush.msra.mxu0 %v241
    %1164 = vmatpush.msra.mxu0 %v225
    %1165 = vmatpush.msra.mxu0 %v209
    %1166 = vmatpush.msra.mxu0 %v193
    %1167 = vmatpush.msra.mxu0 %v177
    %1168 = vmatpush.msra.mxu0 %v161
    %1169 = vmatpush.msra.mxu0 %v145
    %1170 = vmatpush.msra.mxu0 %v129
    %1171 = vmatpush.msra.mxu0 %v113
    %1172 = vmatpush.msra.mxu0 %v97
    %1173 = vmatmul.f32.gmra.mxu0 %v93
    %v1174 = vpop.f32.mrf.mxu0
    %v1175 = vadd.f32 %v1125, %v1174
    %1176 = vdwg.mxu0
    %1177 = vmatpush.msra.mxu0 %v593
    %1178 = vmatpush.msra.mxu0 %v577
    %1179 = vmatpush.msra.mxu0 %v561
    %1180 = vmatpush.msra.mxu0 %v545
    %1181 = vmatpush.msra.mxu0 %v529
    %1182 = vmatpush.msra.mxu0 %v513
    %1183 = vmatpush.msra.mxu0 %v497
    %1184 = vmatpush.msra.mxu0 %v481
    %1185 = vmatpush.msra.mxu0 %v465
    %1186 = vmatpush.msra.mxu0 %v449
    %1187 = vmatpush.msra.mxu0 %v433
    %1188 = vmatpush.msra.mxu0 %v417
    %1189 = vmatpush.msra.mxu0 %v401
    %1190 = vmatpush.msra.mxu0 %v385
    %1191 = vmatpush.msra.mxu0 %v369
    %1192 = vmatpush.msra.mxu0 %v353
    %1193 = vmatmul.f32.gmra.mxu0 %v94
    %v1194 = vpop.f32.mrf.mxu0
    %v1195 = vadd.f32 %v1175, %v1194
    %1196 = vdwg.mxu0
    %1197 = vmatpush.msra.mxu0 %v849
    %1198 = vmatpush.msra.mxu0 %v833
    %1199 = vmatpush.msra.mxu0 %v817
    %1200 = vmatpush.msra.mxu0 %v801
    %1201 = vmatpush.msra.mxu0 %v785
    %1202 = vmatpush.msra.mxu0 %v769
    %1203 = vmatpush.msra.mxu0 %v753
    %1204 = vmatpush.msra.mxu0 %v737
    %1205 = vmatpush.msra.mxu0 %v721
    %1206 = vmatpush.msra.mxu0 %v705
    %1207 = vmatpush.msra.mxu0 %v689
    %1208 = vmatpush.msra.mxu0 %v673
    %1209 = vmatpush.msra.mxu0 %v657
    %1210 = vmatpush.msra.mxu0 %v641
    %1211 = vmatpush.msra.mxu0 %v625
    %1212 = vmatpush.msra.mxu0 %v609
    %1213 = vmatmul.f32.gmra.mxu0 %v95
    %v1214 = vpop.f32.mrf.mxu0
    %v1215 = vadd.f32 %v1195, %v1214
    %1216 = vdwg.mxu0
    %1217 = vmatpush.msra.mxu0 %v1105
    %1218 = vmatpush.msra.mxu0 %v1089
    %1219 = vmatpush.msra.mxu0 %v1073
    %1220 = vmatpush.msra.mxu0 %v1057
    %1221 = vmatpush.msra.mxu0 %v1041
    %1222 = vmatpush.msra.mxu0 %v1025
    %1223 = vmatpush.msra.mxu0 %v1009
    %1224 = vmatpush.msra.mxu0 %v993
    %1225 = vmatpush.msra.mxu0 %v977
    %1226 = vmatpush.msra.mxu0 %v961
    %1227 = vmatpush.msra.mxu0 %v945
    %1228 = vmatpush.msra.mxu0 %v929
    %1229 = vmatpush.msra.mxu0 %v913
    %1230 = vmatpush.msra.mxu0 %v897
    %1231 = vmatpush.msra.mxu0 %v881
    %1232 = vmatpush.msra.mxu0 %v865
    %1233 = vmatmul.f32.gmra.mxu0 %v96
    %v1234 = vpop.f32.mrf.mxu0
    %v1235 = vadd.f32 %v1215, %v1234
    %1236 = vdwg.mxu0
    %1237 = vmatpush.msra.mxu0 %v338
    %1238 = vmatpush.msra.mxu0 %v322
    %1239 = vmatpush.msra.mxu0 %v306
    %1240 = vmatpush.msra.mxu0 %v290
    %1241 = vmatpush.msra.mxu0 %v274
    %1242 = vmatpush.msra.mxu0 %v258
    %1243 = vmatpush.msra.mxu0 %v242
    %1244 = vmatpush.msra.mxu0 %v226
    %1245 = vmatpush.msra.mxu0 %v210
    %1246 = vmatpush.msra.mxu0 %v194
    %1247 = vmatpush.msra.mxu0 %v178
    %1248 = vmatpush.msra.mxu0 %v162
    %1249 = vmatpush.msra.mxu0 %v146
    %1250 = vmatpush.msra.mxu0 %v130
    %1251 = vmatpush.msra.mxu0 %v114
    %1252 = vmatpush.msra.mxu0 %v98
    %1253 = vmatmul.f32.gmra.mxu0 %v93
    %v1254 = vpop.f32.mrf.mxu0
    %v1255 = vadd.f32 %v1126, %v1254
    %1256 = vdwg.mxu0
    %1257 = vmatpush.msra.mxu0 %v594
    %1258 = vmatpush.msra.mxu0 %v578
    %1259 = vmatpush.msra.mxu0 %v562
    %1260 = vmatpush.msra.mxu0 %v546
    %1261 = vmatpush.msra.mxu0 %v530
    %1262 = vmatpush.msra.mxu0 %v514
    %1263 = vmatpush.msra.mxu0 %v498
    %1264 = vmatpush.msra.mxu0 %v482
    %1265 = vmatpush.msra.mxu0 %v466
    %1266 = vmatpush.msra.mxu0 %v450
    %1267 = vmatpush.msra.mxu0 %v434
    %1268 = vmatpush.msra.mxu0 %v418
    %1269 = vmatpush.msra.mxu0 %v402
    %1270 = vmatpush.msra.mxu0 %v386
    %1271 = vmatpush.msra.mxu0 %v370
    %1272 = vmatpush.msra.mxu0 %v354
    %1273 = vmatmul.f32.gmra.mxu0 %v94
    %v1274 = vpop.f32.mrf.mxu0
    %v1275 = vadd.f32 %v1255, %v1274
    %1276 = vdwg.mxu0
    %1277 = vmatpush.msra.mxu0 %v850
    %1278 = vmatpush.msra.mxu0 %v834
    %1279 = vmatpush.msra.mxu0 %v818
    %1280 = vmatpush.msra.mxu0 %v802
    %1281 = vmatpush.msra.mxu0 %v786
    %1282 = vmatpush.msra.mxu0 %v770
    %1283 = vmatpush.msra.mxu0 %v754
    %1284 = vmatpush.msra.mxu0 %v738
    %1285 = vmatpush.msra.mxu0 %v722
    %1286 = vmatpush.msra.mxu0 %v706
    %1287 = vmatpush.msra.mxu0 %v690
    %1288 = vmatpush.msra.mxu0 %v674
    %1289 = vmatpush.msra.mxu0 %v658
    %1290 = vmatpush.msra.mxu0 %v642
    %1291 = vmatpush.msra.mxu0 %v626
    %1292 = vmatpush.msra.mxu0 %v610
    %1293 = vmatmul.f32.gmra.mxu0 %v95
    %v1294 = vpop.f32.mrf.mxu0
    %v1295 = vadd.f32 %v1275, %v1294
    %1296 = vdwg.mxu0
    %1297 = vmatpush.msra.mxu0 %v1106
    %1298 = vmatpush.msra.mxu0 %v1090
    %1299 = vmatpush.msra.mxu0 %v1074
    %1300 = vmatpush.msra.mxu0 %v1058
    %1301 = vmatpush.msra.mxu0 %v1042
    %1302 = vmatpush.msra.mxu0 %v1026
    %1303 = vmatpush.msra.mxu0 %v1010
    %1304 = vmatpush.msra.mxu0 %v994
    %1305 = vmatpush.msra.mxu0 %v978
    %1306 = vmatpush.msra.mxu0 %v962
    %1307 = vmatpush.msra.mxu0 %v946
    %1308 = vmatpush.msra.mxu0 %v930
    %1309 = vmatpush.msra.mxu0 %v914
    %1310 = vmatpush.msra.mxu0 %v898
    %1311 = vmatpush.msra.mxu0 %v882
    %1312 = vmatpush.msra.mxu0 %v866
    %1313 = vmatmul.f32.gmra.mxu0 %v96
    %v1314 = vpop.f32.mrf.mxu0
    %v1315 = vadd.f32 %v1295, %v1314
    %1316 = vdwg.mxu0
    %1317 = vmatpush.msra.mxu0 %v339
    %1318 = vmatpush.msra.mxu0 %v323
    %1319 = vmatpush.msra.mxu0 %v307
    %1320 = vmatpush.msra.mxu0 %v291
    %1321 = vmatpush.msra.mxu0 %v275
    %1322 = vmatpush.msra.mxu0 %v259
    %1323 = vmatpush.msra.mxu0 %v243
    %1324 = vmatpush.msra.mxu0 %v227
    %1325 = vmatpush.msra.mxu0 %v211
    %1326 = vmatpush.msra.mxu0 %v195
    %1327 = vmatpush.msra.mxu0 %v179
    %1328 = vmatpush.msra.mxu0 %v163
    %1329 = vmatpush.msra.mxu0 %v147
    %1330 = vmatpush.msra.mxu0 %v131
    %1331 = vmatpush.msra.mxu0 %v115
    %1332 = vmatpush.msra.mxu0 %v99
    %1333 = vmatmul.f32.gmra.mxu0 %v93
    %v1334 = vpop.f32.mrf.mxu0
    %v1335 = vadd.f32 %v1127, %v1334
    %1336 = vdwg.mxu0
    %1337 = vmatpush.msra.mxu0 %v595
    %1338 = vmatpush.msra.mxu0 %v579
    %1339 = vmatpush.msra.mxu0 %v563
    %1340 = vmatpush.msra.mxu0 %v547
    %1341 = vmatpush.msra.mxu0 %v531
    %1342 = vmatpush.msra.mxu0 %v515
    %1343 = vmatpush.msra.mxu0 %v499
    %1344 = vmatpush.msra.mxu0 %v483
    %1345 = vmatpush.msra.mxu0 %v467
    %1346 = vmatpush.msra.mxu0 %v451
    %1347 = vmatpush.msra.mxu0 %v435
    %1348 = vmatpush.msra.mxu0 %v419
    %1349 = vmatpush.msra.mxu0 %v403
    %1350 = vmatpush.msra.mxu0 %v387
    %1351 = vmatpush.msra.mxu0 %v371
    %1352 = vmatpush.msra.mxu0 %v355
    %1353 = vmatmul.f32.gmra.mxu0 %v94
    %v1354 = vpop.f32.mrf.mxu0
    %v1355 = vadd.f32 %v1335, %v1354
    %1356 = vdwg.mxu0
    %1357 = vmatpush.msra.mxu0 %v851
    %1358 = vmatpush.msra.mxu0 %v835
    %1359 = vmatpush.msra.mxu0 %v819
    %1360 = vmatpush.msra.mxu0 %v803
    %1361 = vmatpush.msra.mxu0 %v787
    %1362 = vmatpush.msra.mxu0 %v771
    %1363 = vmatpush.msra.mxu0 %v755
    %1364 = vmatpush.msra.mxu0 %v739
    %1365 = vmatpush.msra.mxu0 %v723
    %1366 = vmatpush.msra.mxu0 %v707
    %1367 = vmatpush.msra.mxu0 %v691
    %1368 = vmatpush.msra.mxu0 %v675
    %1369 = vmatpush.msra.mxu0 %v659
    %1370 = vmatpush.msra.mxu0 %v643
    %1371 = vmatpush.msra.mxu0 %v627
    %1372 = vmatpush.msra.mxu0 %v611
    %1373 = vmatmul.f32.gmra.mxu0 %v95
    %v1374 = vpop.f32.mrf.mxu0
    %v1375 = vadd.f32 %v1355, %v1374
    %1376 = vdwg.mxu0
    %1377 = vmatpush.msra.mxu0 %v1107
    %1378 = vmatpush.msra.mxu0 %v1091
    %1379 = vmatpush.msra.mxu0 %v1075
    %1380 = vmatpush.msra.mxu0 %v1059
    %1381 = vmatpush.msra.mxu0 %v1043
    %1382 = vmatpush.msra.mxu0 %v1027
    %1383 = vmatpush.msra.mxu0 %v1011
    %1384 = vmatpush.msra.mxu0 %v995
    %1385 = vmatpush.msra.mxu0 %v979
    %1386 = vmatpush.msra.mxu0 %v963
    %1387 = vmatpush.msra.mxu0 %v947
    %1388 = vmatpush.msra.mxu0 %v931
    %1389 = vmatpush.msra.mxu0 %v915
    %1390 = vmatpush.msra.mxu0 %v899
    %1391 = vmatpush.msra.mxu0 %v883
    %1392 = vmatpush.msra.mxu0 %v867
    %1393 = vmatmul.f32.gmra.mxu0 %v96
    %v1394 = vpop.f32.mrf.mxu0
    %v1395 = vadd.f32 %v1375, %v1394
    %1396 = vdwg.mxu0
    %1397 = vmatpush.msra.mxu0 %v340
    %1398 = vmatpush.msra.mxu0 %v324
    %1399 = vmatpush.msra.mxu0 %v308
    %1400 = vmatpush.msra.mxu0 %v292
    %1401 = vmatpush.msra.mxu0 %v276
    %1402 = vmatpush.msra.mxu0 %v260
    %1403 = vmatpush.msra.mxu0 %v244
    %1404 = vmatpush.msra.mxu0 %v228
    %1405 = vmatpush.msra.mxu0 %v212
    %1406 = vmatpush.msra.mxu0 %v196
    %1407 = vmatpush.msra.mxu0 %v180
    %1408 = vmatpush.msra.mxu0 %v164
    %1409 = vmatpush.msra.mxu0 %v148
    %1410 = vmatpush.msra.mxu0 %v132
    %1411 = vmatpush.msra.mxu0 %v116
    %1412 = vmatpush.msra.mxu0 %v100
    %1413 = vmatmul.f32.gmra.mxu0 %v93
    %v1414 = vpop.f32.mrf.mxu0
    %v1415 = vadd.f32 %v1128, %v1414
    %1416 = vdwg.mxu0
    %1417 = vmatpush.msra.mxu0 %v596
    %1418 = vmatpush.msra.mxu0 %v580
    %1419 = vmatpush.msra.mxu0 %v564
    %1420 = vmatpush.msra.mxu0 %v548
    %1421 = vmatpush.msra.mxu0 %v532
    %1422 = vmatpush.msra.mxu0 %v516
    %1423 = vmatpush.msra.mxu0 %v500
    %1424 = vmatpush.msra.mxu0 %v484
    %1425 = vmatpush.msra.mxu0 %v468
    %1426 = vmatpush.msra.mxu0 %v452
    %1427 = vmatpush.msra.mxu0 %v436
    %1428 = vmatpush.msra.mxu0 %v420
    %1429 = vmatpush.msra.mxu0 %v404
    %1430 = vmatpush.msra.mxu0 %v388
    %1431 = vmatpush.msra.mxu0 %v372
    %1432 = vmatpush.msra.mxu0 %v356
    %1433 = vmatmul.f32.gmra.mxu0 %v94
    %v1434 = vpop.f32.mrf.mxu0
    %v1435 = vadd.f32 %v1415, %v1434
    %1436 = vdwg.mxu0
    %1437 = vmatpush.msra.mxu0 %v852
    %1438 = vmatpush.msra.mxu0 %v836
    %1439 = vmatpush.msra.mxu0 %v820
    %1440 = vmatpush.msra.mxu0 %v804
    %1441 = vmatpush.msra.mxu0 %v788
    %1442 = vmatpush.msra.mxu0 %v772
    %1443 = vmatpush.msra.mxu0 %v756
    %1444 = vmatpush.msra.mxu0 %v740
    %1445 = vmatpush.msra.mxu0 %v724
    %1446 = vmatpush.msra.mxu0 %v708
    %1447 = vmatpush.msra.mxu0 %v692
    %1448 = vmatpush.msra.mxu0 %v676
    %1449 = vmatpush.msra.mxu0 %v660
    %1450 = vmatpush.msra.mxu0 %v644
    %1451 = vmatpush.msra.mxu0 %v628
    %1452 = vmatpush.msra.mxu0 %v612
    %1453 = vmatmul.f32.gmra.mxu0 %v95
    %v1454 = vpop.f32.mrf.mxu0
    %v1455 = vadd.f32 %v1435, %v1454
    %1456 = vdwg.mxu0
    %1457 = vmatpush.msra.mxu0 %v1108
    %1458 = vmatpush.msra.mxu0 %v1092
    %1459 = vmatpush.msra.mxu0 %v1076
    %1460 = vmatpush.msra.mxu0 %v1060
    %1461 = vmatpush.msra.mxu0 %v1044
    %1462 = vmatpush.msra.mxu0 %v1028
    %1463 = vmatpush.msra.mxu0 %v1012
    %1464 = vmatpush.msra.mxu0 %v996
    %1465 = vmatpush.msra.mxu0 %v980
    %1466 = vmatpush.msra.mxu0 %v964
    %1467 = vmatpush.msra.mxu0 %v948
    %1468 = vmatpush.msra.mxu0 %v932
    %1469 = vmatpush.msra.mxu0 %v916
    %1470 = vmatpush.msra.mxu0 %v900
    %1471 = vmatpush.msra.mxu0 %v884
    %1472 = vmatpush.msra.mxu0 %v868
    %1473 = vmatmul.f32.gmra.mxu0 %v96
    %v1474 = vpop.f32.mrf.mxu0
    %v1475 = vadd.f32 %v1455, %v1474
    %1476 = vdwg.mxu0
    %1477 = vmatpush.msra.mxu0 %v341
    %1478 = vmatpush.msra.mxu0 %v325
    %1479 = vmatpush.msra.mxu0 %v309
    %1480 = vmatpush.msra.mxu0 %v293
    %1481 = vmatpush.msra.mxu0 %v277
    %1482 = vmatpush.msra.mxu0 %v261
    %1483 = vmatpush.msra.mxu0 %v245
    %1484 = vmatpush.msra.mxu0 %v229
    %1485 = vmatpush.msra.mxu0 %v213
    %1486 = vmatpush.msra.mxu0 %v197
    %1487 = vmatpush.msra.mxu0 %v181
    %1488 = vmatpush.msra.mxu0 %v165
    %1489 = vmatpush.msra.mxu0 %v149
    %1490 = vmatpush.msra.mxu0 %v133
    %1491 = vmatpush.msra.mxu0 %v117
    %1492 = vmatpush.msra.mxu0 %v101
    %1493 = vmatmul.f32.gmra.mxu0 %v93
    %v1494 = vpop.f32.mrf.mxu0
    %v1495 = vadd.f32 %v1129, %v1494
    %1496 = vdwg.mxu0
    %1497 = vmatpush.msra.mxu0 %v597
    %1498 = vmatpush.msra.mxu0 %v581
    %1499 = vmatpush.msra.mxu0 %v565
    %1500 = vmatpush.msra.mxu0 %v549
    %1501 = vmatpush.msra.mxu0 %v533
    %1502 = vmatpush.msra.mxu0 %v517
    %1503 = vmatpush.msra.mxu0 %v501
    %1504 = vmatpush.msra.mxu0 %v485
    %1505 = vmatpush.msra.mxu0 %v469
    %1506 = vmatpush.msra.mxu0 %v453
    %1507 = vmatpush.msra.mxu0 %v437
    %1508 = vmatpush.msra.mxu0 %v421
    %1509 = vmatpush.msra.mxu0 %v405
    %1510 = vmatpush.msra.mxu0 %v389
    %1511 = vmatpush.msra.mxu0 %v373
    %1512 = vmatpush.msra.mxu0 %v357
    %1513 = vmatmul.f32.gmra.mxu0 %v94
    %v1514 = vpop.f32.mrf.mxu0
    %v1515 = vadd.f32 %v1495, %v1514
    %1516 = vdwg.mxu0
    %1517 = vmatpush.msra.mxu0 %v853
    %1518 = vmatpush.msra.mxu0 %v837
    %1519 = vmatpush.msra.mxu0 %v821
    %1520 = vmatpush.msra.mxu0 %v805
    %1521 = vmatpush.msra.mxu0 %v789
    %1522 = vmatpush.msra.mxu0 %v773
    %1523 = vmatpush.msra.mxu0 %v757
    %1524 = vmatpush.msra.mxu0 %v741
    %1525 = vmatpush.msra.mxu0 %v725
    %1526 = vmatpush.msra.mxu0 %v709
    %1527 = vmatpush.msra.mxu0 %v693
    %1528 = vmatpush.msra.mxu0 %v677
    %1529 = vmatpush.msra.mxu0 %v661
    %1530 = vmatpush.msra.mxu0 %v645
    %1531 = vmatpush.msra.mxu0 %v629
    %1532 = vmatpush.msra.mxu0 %v613
    %1533 = vmatmul.f32.gmra.mxu0 %v95
    %v1534 = vpop.f32.mrf.mxu0
    %v1535 = vadd.f32 %v1515, %v1534
    %1536 = vdwg.mxu0
    %1537 = vmatpush.msra.mxu0 %v1109
    %1538 = vmatpush.msra.mxu0 %v1093
    %1539 = vmatpush.msra.mxu0 %v1077
    %1540 = vmatpush.msra.mxu0 %v1061
    %1541 = vmatpush.msra.mxu0 %v1045
    %1542 = vmatpush.msra.mxu0 %v1029
    %1543 = vmatpush.msra.mxu0 %v1013
    %1544 = vmatpush.msra.mxu0 %v997
    %1545 = vmatpush.msra.mxu0 %v981
    %1546 = vmatpush.msra.mxu0 %v965
    %1547 = vmatpush.msra.mxu0 %v949
    %1548 = vmatpush.msra.mxu0 %v933
    %1549 = vmatpush.msra.mxu0 %v917
    %1550 = vmatpush.msra.mxu0 %v901
    %1551 = vmatpush.msra.mxu0 %v885
    %1552 = vmatpush.msra.mxu0 %v869
    %1553 = vmatmul.f32.gmra.mxu0 %v96
    %v1554 = vpop.f32.mrf.mxu0
    %v1555 = vadd.f32 %v1535, %v1554
    %1556 = vdwg.mxu0
    %1557 = vmatpush.msra.mxu0 %v342
    %1558 = vmatpush.msra.mxu0 %v326
    %1559 = vmatpush.msra.mxu0 %v310
    %1560 = vmatpush.msra.mxu0 %v294
    %1561 = vmatpush.msra.mxu0 %v278
    %1562 = vmatpush.msra.mxu0 %v262
    %1563 = vmatpush.msra.mxu0 %v246
    %1564 = vmatpush.msra.mxu0 %v230
    %1565 = vmatpush.msra.mxu0 %v214
    %1566 = vmatpush.msra.mxu0 %v198
    %1567 = vmatpush.msra.mxu0 %v182
    %1568 = vmatpush.msra.mxu0 %v166
    %1569 = vmatpush.msra.mxu0 %v150
    %1570 = vmatpush.msra.mxu0 %v134
    %1571 = vmatpush.msra.mxu0 %v118
    %1572 = vmatpush.msra.mxu0 %v102
    %1573 = vmatmul.f32.gmra.mxu0 %v93
    %v1574 = vpop.f32.mrf.mxu0
    %v1575 = vadd.f32 %v1130, %v1574
    %1576 = vdwg.mxu0
    %1577 = vmatpush.msra.mxu0 %v598
    %1578 = vmatpush.msra.mxu0 %v582
    %1579 = vmatpush.msra.mxu0 %v566
    %1580 = vmatpush.msra.mxu0 %v550
    %1581 = vmatpush.msra.mxu0 %v534
    %1582 = vmatpush.msra.mxu0 %v518
    %1583 = vmatpush.msra.mxu0 %v502
    %1584 = vmatpush.msra.mxu0 %v486
    %1585 = vmatpush.msra.mxu0 %v470
    %1586 = vmatpush.msra.mxu0 %v454
    %1587 = vmatpush.msra.mxu0 %v438
    %1588 = vmatpush.msra.mxu0 %v422
    %1589 = vmatpush.msra.mxu0 %v406
    %1590 = vmatpush.msra.mxu0 %v390
    %1591 = vmatpush.msra.mxu0 %v374
    %1592 = vmatpush.msra.mxu0 %v358
    %1593 = vmatmul.f32.gmra.mxu0 %v94
    %v1594 = vpop.f32.mrf.mxu0
    %v1595 = vadd.f32 %v1575, %v1594
    %1596 = vdwg.mxu0
    %1597 = vmatpush.msra.mxu0 %v854
    %1598 = vmatpush.msra.mxu0 %v838
    %1599 = vmatpush.msra.mxu0 %v822
    %1600 = vmatpush.msra.mxu0 %v806
    %1601 = vmatpush.msra.mxu0 %v790
    %1602 = vmatpush.msra.mxu0 %v774
    %1603 = vmatpush.msra.mxu0 %v758
    %1604 = vmatpush.msra.mxu0 %v742
    %1605 = vmatpush.msra.mxu0 %v726
    %1606 = vmatpush.msra.mxu0 %v710
    %1607 = vmatpush.msra.mxu0 %v694
    %1608 = vmatpush.msra.mxu0 %v678
    %1609 = vmatpush.msra.mxu0 %v662
    %1610 = vmatpush.msra.mxu0 %v646
    %1611 = vmatpush.msra.mxu0 %v630
    %1612 = vmatpush.msra.mxu0 %v614
    %1613 = vmatmul.f32.gmra.mxu0 %v95
    %v1614 = vpop.f32.mrf.mxu0
    %v1615 = vadd.f32 %v1595, %v1614
    %1616 = vdwg.mxu0
    %1617 = vmatpush.msra.mxu0 %v1110
    %1618 = vmatpush.msra.mxu0 %v1094
    %1619 = vmatpush.msra.mxu0 %v1078
    %1620 = vmatpush.msra.mxu0 %v1062
    %1621 = vmatpush.msra.mxu0 %v1046
    %1622 = vmatpush.msra.mxu0 %v1030
    %1623 = vmatpush.msra.mxu0 %v1014
    %1624 = vmatpush.msra.mxu0 %v998
    %1625 = vmatpush.msra.mxu0 %v982
    %1626 = vmatpush.msra.mxu0 %v966
    %1627 = vmatpush.msra.mxu0 %v950
    %1628 = vmatpush.msra.mxu0 %v934
    %1629 = vmatpush.msra.mxu0 %v918
    %1630 = vmatpush.msra.mxu0 %v902
    %1631 = vmatpush.msra.mxu0 %v886
    %1632 = vmatpush.msra.mxu0 %v870
    %1633 = vmatmul.f32.gmra.mxu0 %v96
    %v1634 = vpop.f32.mrf.mxu0
    %v1635 = vadd.f32 %v1615, %v1634
    %1636 = vdwg.mxu0
    %1637 = vmatpush.msra.mxu0 %v343
    %1638 = vmatpush.msra.mxu0 %v327
    %1639 = vmatpush.msra.mxu0 %v311
    %1640 = vmatpush.msra.mxu0 %v295
    %1641 = vmatpush.msra.mxu0 %v279
    %1642 = vmatpush.msra.mxu0 %v263
    %1643 = vmatpush.msra.mxu0 %v247
    %1644 = vmatpush.msra.mxu0 %v231
    %1645 = vmatpush.msra.mxu0 %v215
    %1646 = vmatpush.msra.mxu0 %v199
    %1647 = vmatpush.msra.mxu0 %v183
    %1648 = vmatpush.msra.mxu0 %v167
    %1649 = vmatpush.msra.mxu0 %v151
    %1650 = vmatpush.msra.mxu0 %v135
    %1651 = vmatpush.msra.mxu0 %v119
    %1652 = vmatpush.msra.mxu0 %v103
    %1653 = vmatmul.f32.gmra.mxu0 %v93
    %v1654 = vpop.f32.mrf.mxu0
    %v1655 = vadd.f32 %v1131, %v1654
    %1656 = vdwg.mxu0
    %1657 = vmatpush.msra.mxu0 %v599
    %1658 = vmatpush.msra.mxu0 %v583
    %1659 = vmatpush.msra.mxu0 %v567
    %1660 = vmatpush.msra.mxu0 %v551
    %1661 = vmatpush.msra.mxu0 %v535
    %1662 = vmatpush.msra.mxu0 %v519
    %1663 = vmatpush.msra.mxu0 %v503
    %1664 = vmatpush.msra.mxu0 %v487
    %1665 = vmatpush.msra.mxu0 %v471
    %1666 = vmatpush.msra.mxu0 %v455
    %1667 = vmatpush.msra.mxu0 %v439
    %1668 = vmatpush.msra.mxu0 %v423
    %1669 = vmatpush.msra.mxu0 %v407
    %1670 = vmatpush.msra.mxu0 %v391
    %1671 = vmatpush.msra.mxu0 %v375
    %1672 = vmatpush.msra.mxu0 %v359
    %1673 = vmatmul.f32.gmra.mxu0 %v94
    %v1674 = vpop.f32.mrf.mxu0
    %v1675 = vadd.f32 %v1655, %v1674
    %1676 = vdwg.mxu0
    %1677 = vmatpush.msra.mxu0 %v855
    %1678 = vmatpush.msra.mxu0 %v839
    %1679 = vmatpush.msra.mxu0 %v823
    %1680 = vmatpush.msra.mxu0 %v807
    %1681 = vmatpush.msra.mxu0 %v791
    %1682 = vmatpush.msra.mxu0 %v775
    %1683 = vmatpush.msra.mxu0 %v759
    %1684 = vmatpush.msra.mxu0 %v743
    %1685 = vmatpush.msra.mxu0 %v727
    %1686 = vmatpush.msra.mxu0 %v711
    %1687 = vmatpush.msra.mxu0 %v695
    %1688 = vmatpush.msra.mxu0 %v679
    %1689 = vmatpush.msra.mxu0 %v663
    %1690 = vmatpush.msra.mxu0 %v647
    %1691 = vmatpush.msra.mxu0 %v631
    %1692 = vmatpush.msra.mxu0 %v615
    %1693 = vmatmul.f32.gmra.mxu0 %v95
    %v1694 = vpop.f32.mrf.mxu0
    %v1695 = vadd.f32 %v1675, %v1694
    %1696 = vdwg.mxu0
    %1697 = vmatpush.msra.mxu0 %v1111
    %1698 = vmatpush.msra.mxu0 %v1095
    %1699 = vmatpush.msra.mxu0 %v1079
    %1700 = vmatpush.msra.mxu0 %v1063
    %1701 = vmatpush.msra.mxu0 %v1047
    %1702 = vmatpush.msra.mxu0 %v1031
    %1703 = vmatpush.msra.mxu0 %v1015
    %1704 = vmatpush.msra.mxu0 %v999
    %1705 = vmatpush.msra.mxu0 %v983
    %1706 = vmatpush.msra.mxu0 %v967
    %1707 = vmatpush.msra.mxu0 %v951
    %1708 = vmatpush.msra.mxu0 %v935
    %1709 = vmatpush.msra.mxu0 %v919
    %1710 = vmatpush.msra.mxu0 %v903
    %1711 = vmatpush.msra.mxu0 %v887
    %1712 = vmatpush.msra.mxu0 %v871
    %1713 = vmatmul.f32.gmra.mxu0 %v96
    %v1714 = vpop.f32.mrf.mxu0
    %v1715 = vadd.f32 %v1695, %v1714
    %1716 = vdwg.mxu0
    %1717 = vmatpush.msra.mxu0 %v344
    %1718 = vmatpush.msra.mxu0 %v328
    %1719 = vmatpush.msra.mxu0 %v312
    %1720 = vmatpush.msra.mxu0 %v296
    %1721 = vmatpush.msra.mxu0 %v280
    %1722 = vmatpush.msra.mxu0 %v264
    %1723 = vmatpush.msra.mxu0 %v248
    %1724 = vmatpush.msra.mxu0 %v232
    %1725 = vmatpush.msra.mxu0 %v216
    %1726 = vmatpush.msra.mxu0 %v200
    %1727 = vmatpush.msra.mxu0 %v184
    %1728 = vmatpush.msra.mxu0 %v168
    %1729 = vmatpush.msra.mxu0 %v152
    %1730 = vmatpush.msra.mxu0 %v136
    %1731 = vmatpush.msra.mxu0 %v120
    %1732 = vmatpush.msra.mxu0 %v104
    %1733 = vmatmul.f32.gmra.mxu0 %v93
    %v1734 = vpop.f32.mrf.mxu0
    %v1735 = vadd.f32 %v1132, %v1734
    %1736 = vdwg.mxu0
    %1737 = vmatpush.msra.mxu0 %v600
    %1738 = vmatpush.msra.mxu0 %v584
    %1739 = vmatpush.msra.mxu0 %v568
    %1740 = vmatpush.msra.mxu0 %v552
    %1741 = vmatpush.msra.mxu0 %v536
    %1742 = vmatpush.msra.mxu0 %v520
    %1743 = vmatpush.msra.mxu0 %v504
    %1744 = vmatpush.msra.mxu0 %v488
    %1745 = vmatpush.msra.mxu0 %v472
    %1746 = vmatpush.msra.mxu0 %v456
    %1747 = vmatpush.msra.mxu0 %v440
    %1748 = vmatpush.msra.mxu0 %v424
    %1749 = vmatpush.msra.mxu0 %v408
    %1750 = vmatpush.msra.mxu0 %v392
    %1751 = vmatpush.msra.mxu0 %v376
    %1752 = vmatpush.msra.mxu0 %v360
    %1753 = vmatmul.f32.gmra.mxu0 %v94
    %v1754 = vpop.f32.mrf.mxu0
    %v1755 = vadd.f32 %v1735, %v1754
    %1756 = vdwg.mxu0
    %1757 = vmatpush.msra.mxu0 %v856
    %1758 = vmatpush.msra.mxu0 %v840
    %1759 = vmatpush.msra.mxu0 %v824
    %1760 = vmatpush.msra.mxu0 %v808
    %1761 = vmatpush.msra.mxu0 %v792
    %1762 = vmatpush.msra.mxu0 %v776
    %1763 = vmatpush.msra.mxu0 %v760
    %1764 = vmatpush.msra.mxu0 %v744
    %1765 = vmatpush.msra.mxu0 %v728
    %1766 = vmatpush.msra.mxu0 %v712
    %1767 = vmatpush.msra.mxu0 %v696
    %1768 = vmatpush.msra.mxu0 %v680
    %1769 = vmatpush.msra.mxu0 %v664
    %1770 = vmatpush.msra.mxu0 %v648
    %1771 = vmatpush.msra.mxu0 %v632
    %1772 = vmatpush.msra.mxu0 %v616
    %1773 = vmatmul.f32.gmra.mxu0 %v95
    %v1774 = vpop.f32.mrf.mxu0
    %v1775 = vadd.f32 %v1755, %v1774
    %1776 = vdwg.mxu0
    %1777 = vmatpush.msra.mxu0 %v1112
    %1778 = vmatpush.msra.mxu0 %v1096
    %1779 = vmatpush.msra.mxu0 %v1080
    %1780 = vmatpush.msra.mxu0 %v1064
    %1781 = vmatpush.msra.mxu0 %v1048
    %1782 = vmatpush.msra.mxu0 %v1032
    %1783 = vmatpush.msra.mxu0 %v1016
    %1784 = vmatpush.msra.mxu0 %v1000
    %1785 = vmatpush.msra.mxu0 %v984
    %1786 = vmatpush.msra.mxu0 %v968
    %1787 = vmatpush.msra.mxu0 %v952
    %1788 = vmatpush.msra.mxu0 %v936
    %1789 = vmatpush.msra.mxu0 %v920
    %1790 = vmatpush.msra.mxu0 %v904
    %1791 = vmatpush.msra.mxu0 %v888
    %1792 = vmatpush.msra.mxu0 %v872
    %1793 = vmatmul.f32.gmra.mxu0 %v96
    %v1794 = vpop.f32.mrf.mxu0
    %v1795 = vadd.f32 %v1775, %v1794
    %1796 = vdwg.mxu0
    %1797 = vmatpush.msra.mxu0 %v345
    %1798 = vmatpush.msra.mxu0 %v329
    %1799 = vmatpush.msra.mxu0 %v313
    %1800 = vmatpush.msra.mxu0 %v297
    %1801 = vmatpush.msra.mxu0 %v281
    %1802 = vmatpush.msra.mxu0 %v265
    %1803 = vmatpush.msra.mxu0 %v249
    %1804 = vmatpush.msra.mxu0 %v233
    %1805 = vmatpush.msra.mxu0 %v217
    %1806 = vmatpush.msra.mxu0 %v201
    %1807 = vmatpush.msra.mxu0 %v185
    %1808 = vmatpush.msra.mxu0 %v169
    %1809 = vmatpush.msra.mxu0 %v153
    %1810 = vmatpush.msra.mxu0 %v137
    %1811 = vmatpush.msra.mxu0 %v121
    %1812 = vmatpush.msra.mxu0 %v105
    %1813 = vmatmul.f32.gmra.mxu0 %v93
    %v1814 = vpop.f32.mrf.mxu0
    %v1815 = vadd.f32 %v1133, %v1814
    %1816 = vdwg.mxu0
    %1817 = vmatpush.msra.mxu0 %v601
    %1818 = vmatpush.msra.mxu0 %v585
    %1819 = vmatpush.msra.mxu0 %v569
    %1820 = vmatpush.msra.mxu0 %v553
    %1821 = vmatpush.msra.mxu0 %v537
    %1822 = vmatpush.msra.mxu0 %v521
    %1823 = vmatpush.msra.mxu0 %v505
    %1824 = vmatpush.msra.mxu0 %v489
    %1825 = vmatpush.msra.mxu0 %v473
    %1826 = vmatpush.msra.mxu0 %v457
    %1827 = vmatpush.msra.mxu0 %v441
    %1828 = vmatpush.msra.mxu0 %v425
    %1829 = vmatpush.msra.mxu0 %v409
    %1830 = vmatpush.msra.mxu0 %v393
    %1831 = vmatpush.msra.mxu0 %v377
    %1832 = vmatpush.msra.mxu0 %v361
    %1833 = vmatmul.f32.gmra.mxu0 %v94
    %v1834 = vpop.f32.mrf.mxu0
    %v1835 = vadd.f32 %v1815, %v1834
    %1836 = vdwg.mxu0
    %1837 = vmatpush.msra.mxu0 %v857
    %1838 = vmatpush.msra.mxu0 %v841
    %1839 = vmatpush.msra.mxu0 %v825
    %1840 = vmatpush.msra.mxu0 %v809
    %1841 = vmatpush.msra.mxu0 %v793
    %1842 = vmatpush.msra.mxu0 %v777
    %1843 = vmatpush.msra.mxu0 %v761
    %1844 = vmatpush.msra.mxu0 %v745
    %1845 = vmatpush.msra.mxu0 %v729
    %1846 = vmatpush.msra.mxu0 %v713
    %1847 = vmatpush.msra.mxu0 %v697
    %1848 = vmatpush.msra.mxu0 %v681
    %1849 = vmatpush.msra.mxu0 %v665
    %1850 = vmatpush.msra.mxu0 %v649
    %1851 = vmatpush.msra.mxu0 %v633
    %1852 = vmatpush.msra.mxu0 %v617
    %1853 = vmatmul.f32.gmra.mxu0 %v95
    %v1854 = vpop.f32.mrf.mxu0
    %v1855 = vadd.f32 %v1835, %v1854
    %1856 = vdwg.mxu0
    %1857 = vmatpush.msra.mxu0 %v1113
    %1858 = vmatpush.msra.mxu0 %v1097
    %1859 = vmatpush.msra.mxu0 %v1081
    %1860 = vmatpush.msra.mxu0 %v1065
    %1861 = vmatpush.msra.mxu0 %v1049
    %1862 = vmatpush.msra.mxu0 %v1033
    %1863 = vmatpush.msra.mxu0 %v1017
    %1864 = vmatpush.msra.mxu0 %v1001
    %1865 = vmatpush.msra.mxu0 %v985
    %1866 = vmatpush.msra.mxu0 %v969
    %1867 = vmatpush.msra.mxu0 %v953
    %1868 = vmatpush.msra.mxu0 %v937
    %1869 = vmatpush.msra.mxu0 %v921
    %1870 = vmatpush.msra.mxu0 %v905
    %1871 = vmatpush.msra.mxu0 %v889
    %1872 = vmatpush.msra.mxu0 %v873
    %1873 = vmatmul.f32.gmra.mxu0 %v96
    %v1874 = vpop.f32.mrf.mxu0
    %v1875 = vadd.f32 %v1855, %v1874
    %1876 = vdwg.mxu0
    %1877 = vmatpush.msra.mxu0 %v346
    %1878 = vmatpush.msra.mxu0 %v330
    %1879 = vmatpush.msra.mxu0 %v314
    %1880 = vmatpush.msra.mxu0 %v298
    %1881 = vmatpush.msra.mxu0 %v282
    %1882 = vmatpush.msra.mxu0 %v266
    %1883 = vmatpush.msra.mxu0 %v250
    %1884 = vmatpush.msra.mxu0 %v234
    %1885 = vmatpush.msra.mxu0 %v218
    %1886 = vmatpush.msra.mxu0 %v202
    %1887 = vmatpush.msra.mxu0 %v186
    %1888 = vmatpush.msra.mxu0 %v170
    %1889 = vmatpush.msra.mxu0 %v154
    %1890 = vmatpush.msra.mxu0 %v138
    %1891 = vmatpush.msra.mxu0 %v122
    %1892 = vmatpush.msra.mxu0 %v106
    %1893 = vmatmul.f32.gmra.mxu0 %v93
    %v1894 = vpop.f32.mrf.mxu0
    %v1895 = vadd.f32 %v1134, %v1894
    %1896 = vdwg.mxu0
    %1897 = vmatpush.msra.mxu0 %v602
    %1898 = vmatpush.msra.mxu0 %v586
    %1899 = vmatpush.msra.mxu0 %v570
    %1900 = vmatpush.msra.mxu0 %v554
    %1901 = vmatpush.msra.mxu0 %v538
    %1902 = vmatpush.msra.mxu0 %v522
    %1903 = vmatpush.msra.mxu0 %v506
    %1904 = vmatpush.msra.mxu0 %v490
    %1905 = vmatpush.msra.mxu0 %v474
    %1906 = vmatpush.msra.mxu0 %v458
    %1907 = vmatpush.msra.mxu0 %v442
    %1908 = vmatpush.msra.mxu0 %v426
    %1909 = vmatpush.msra.mxu0 %v410
    %1910 = vmatpush.msra.mxu0 %v394
    %1911 = vmatpush.msra.mxu0 %v378
    %1912 = vmatpush.msra.mxu0 %v362
    %1913 = vmatmul.f32.gmra.mxu0 %v94
    %v1914 = vpop.f32.mrf.mxu0
    %v1915 = vadd.f32 %v1895, %v1914
    %1916 = vdwg.mxu0
    %1917 = vmatpush.msra.mxu0 %v858
    %1918 = vmatpush.msra.mxu0 %v842
    %1919 = vmatpush.msra.mxu0 %v826
    %1920 = vmatpush.msra.mxu0 %v810
    %1921 = vmatpush.msra.mxu0 %v794
    %1922 = vmatpush.msra.mxu0 %v778
    %1923 = vmatpush.msra.mxu0 %v762
    %1924 = vmatpush.msra.mxu0 %v746
    %1925 = vmatpush.msra.mxu0 %v730
    %1926 = vmatpush.msra.mxu0 %v714
    %1927 = vmatpush.msra.mxu0 %v698
    %1928 = vmatpush.msra.mxu0 %v682
    %1929 = vmatpush.msra.mxu0 %v666
    %1930 = vmatpush.msra.mxu0 %v650
    %1931 = vmatpush.msra.mxu0 %v634
    %1932 = vmatpush.msra.mxu0 %v618
    %1933 = vmatmul.f32.gmra.mxu0 %v95
    %v1934 = vpop.f32.mrf.mxu0
    %v1935 = vadd.f32 %v1915, %v1934
    %1936 = vdwg.mxu0
    %1937 = vmatpush.msra.mxu0 %v1114
    %1938 = vmatpush.msra.mxu0 %v1098
    %1939 = vmatpush.msra.mxu0 %v1082
    %1940 = vmatpush.msra.mxu0 %v1066
    %1941 = vmatpush.msra.mxu0 %v1050
    %1942 = vmatpush.msra.mxu0 %v1034
    %1943 = vmatpush.msra.mxu0 %v1018
    %1944 = vmatpush.msra.mxu0 %v1002
    %1945 = vmatpush.msra.mxu0 %v986
    %1946 = vmatpush.msra.mxu0 %v970
    %1947 = vmatpush.msra.mxu0 %v954
    %1948 = vmatpush.msra.mxu0 %v938
    %1949 = vmatpush.msra.mxu0 %v922
    %1950 = vmatpush.msra.mxu0 %v906
    %1951 = vmatpush.msra.mxu0 %v890
    %1952 = vmatpush.msra.mxu0 %v874
    %1953 = vmatmul.f32.gmra.mxu0 %v96
    %v1954 = vpop.f32.mrf.mxu0
    %v1955 = vadd.f32 %v1935, %v1954
    %1956 = vdwg.mxu0
    %1957 = vmatpush.msra.mxu0 %v347
    %1958 = vmatpush.msra.mxu0 %v331
    %1959 = vmatpush.msra.mxu0 %v315
    %1960 = vmatpush.msra.mxu0 %v299
    %1961 = vmatpush.msra.mxu0 %v283
    %1962 = vmatpush.msra.mxu0 %v267
    %1963 = vmatpush.msra.mxu0 %v251
    %1964 = vmatpush.msra.mxu0 %v235
    %1965 = vmatpush.msra.mxu0 %v219
    %1966 = vmatpush.msra.mxu0 %v203
    %1967 = vmatpush.msra.mxu0 %v187
    %1968 = vmatpush.msra.mxu0 %v171
    %1969 = vmatpush.msra.mxu0 %v155
    %1970 = vmatpush.msra.mxu0 %v139
    %1971 = vmatpush.msra.mxu0 %v123
    %1972 = vmatpush.msra.mxu0 %v107
    %1973 = vmatmul.f32.gmra.mxu0 %v93
    %v1974 = vpop.f32.mrf.mxu0
    %v1975 = vadd.f32 %v1135, %v1974
    %1976 = vdwg.mxu0
    %1977 = vmatpush.msra.mxu0 %v603
    %1978 = vmatpush.msra.mxu0 %v587
    %1979 = vmatpush.msra.mxu0 %v571
    %1980 = vmatpush.msra.mxu0 %v555
    %1981 = vmatpush.msra.mxu0 %v539
    %1982 = vmatpush.msra.mxu0 %v523
    %1983 = vmatpush.msra.mxu0 %v507
    %1984 = vmatpush.msra.mxu0 %v491
    %1985 = vmatpush.msra.mxu0 %v475
    %1986 = vmatpush.msra.mxu0 %v459
    %1987 = vmatpush.msra.mxu0 %v443
    %1988 = vmatpush.msra.mxu0 %v427
    %1989 = vmatpush.msra.mxu0 %v411
    %1990 = vmatpush.msra.mxu0 %v395
    %1991 = vmatpush.msra.mxu0 %v379
    %1992 = vmatpush.msra.mxu0 %v363
    %1993 = vmatmul.f32.gmra.mxu0 %v94
    %v1994 = vpop.f32.mrf.mxu0
    %v1995 = vadd.f32 %v1975, %v1994
    %1996 = vdwg.mxu0
    %1997 = vmatpush.msra.mxu0 %v859
    %1998 = vmatpush.msra.mxu0 %v843
    %1999 = vmatpush.msra.mxu0 %v827
    %2000 = vmatpush.msra.mxu0 %v811
    %2001 = vmatpush.msra.mxu0 %v795
    %2002 = vmatpush.msra.mxu0 %v779
    %2003 = vmatpush.msra.mxu0 %v763
    %2004 = vmatpush.msra.mxu0 %v747
    %2005 = vmatpush.msra.mxu0 %v731
    %2006 = vmatpush.msra.mxu0 %v715
    %2007 = vmatpush.msra.mxu0 %v699
    %2008 = vmatpush.msra.mxu0 %v683
    %2009 = vmatpush.msra.mxu0 %v667
    %2010 = vmatpush.msra.mxu0 %v651
    %2011 = vmatpush.msra.mxu0 %v635
    %2012 = vmatpush.msra.mxu0 %v619
    %2013 = vmatmul.f32.gmra.mxu0 %v95
    %v2014 = vpop.f32.mrf.mxu0
    %v2015 = vadd.f32 %v1995, %v2014
    %2016 = vdwg.mxu0
    %2017 = vmatpush.msra.mxu0 %v1115
    %2018 = vmatpush.msra.mxu0 %v1099
    %2019 = vmatpush.msra.mxu0 %v1083
    %2020 = vmatpush.msra.mxu0 %v1067
    %2021 = vmatpush.msra.mxu0 %v1051
    %2022 = vmatpush.msra.mxu0 %v1035
    %2023 = vmatpush.msra.mxu0 %v1019
    %2024 = vmatpush.msra.mxu0 %v1003
    %2025 = vmatpush.msra.mxu0 %v987
    %2026 = vmatpush.msra.mxu0 %v971
    %2027 = vmatpush.msra.mxu0 %v955
    %2028 = vmatpush.msra.mxu0 %v939
    %2029 = vmatpush.msra.mxu0 %v923
    %2030 = vmatpush.msra.mxu0 %v907
    %2031 = vmatpush.msra.mxu0 %v891
    %2032 = vmatpush.msra.mxu0 %v875
    %2033 = vmatmul.f32.gmra.mxu0 %v96
    %v2034 = vpop.f32.mrf.mxu0
    %v2035 = vadd.f32 %v2015, %v2034
    %2036 = vdwg.mxu0
    %2037 = vmatpush.msra.mxu0 %v348
    %2038 = vmatpush.msra.mxu0 %v332
    %2039 = vmatpush.msra.mxu0 %v316
    %2040 = vmatpush.msra.mxu0 %v300
    %2041 = vmatpush.msra.mxu0 %v284
    %2042 = vmatpush.msra.mxu0 %v268
    %2043 = vmatpush.msra.mxu0 %v252
    %2044 = vmatpush.msra.mxu0 %v236
    %2045 = vmatpush.msra.mxu0 %v220
    %2046 = vmatpush.msra.mxu0 %v204
    %2047 = vmatpush.msra.mxu0 %v188
    %2048 = vmatpush.msra.mxu0 %v172
    %2049 = vmatpush.msra.mxu0 %v156
    %2050 = vmatpush.msra.mxu0 %v140
    %2051 = vmatpush.msra.mxu0 %v124
    %2052 = vmatpush.msra.mxu0 %v108
    %2053 = vmatmul.f32.gmra.mxu0 %v93
    %v2054 = vpop.f32.mrf.mxu0
    %v2055 = vadd.f32 %v1136, %v2054
    %2056 = vdwg.mxu0
    %2057 = vmatpush.msra.mxu0 %v604
    %2058 = vmatpush.msra.mxu0 %v588
    %2059 = vmatpush.msra.mxu0 %v572
    %2060 = vmatpush.msra.mxu0 %v556
    %2061 = vmatpush.msra.mxu0 %v540
    %2062 = vmatpush.msra.mxu0 %v524
    %2063 = vmatpush.msra.mxu0 %v508
    %2064 = vmatpush.msra.mxu0 %v492
    %2065 = vmatpush.msra.mxu0 %v476
    %2066 = vmatpush.msra.mxu0 %v460
    %2067 = vmatpush.msra.mxu0 %v444
    %2068 = vmatpush.msra.mxu0 %v428
    %2069 = vmatpush.msra.mxu0 %v412
    %2070 = vmatpush.msra.mxu0 %v396
    %2071 = vmatpush.msra.mxu0 %v380
    %2072 = vmatpush.msra.mxu0 %v364
    %2073 = vmatmul.f32.gmra.mxu0 %v94
    %v2074 = vpop.f32.mrf.mxu0
    %v2075 = vadd.f32 %v2055, %v2074
    %2076 = vdwg.mxu0
    %2077 = vmatpush.msra.mxu0 %v860
    %2078 = vmatpush.msra.mxu0 %v844
    %2079 = vmatpush.msra.mxu0 %v828
    %2080 = vmatpush.msra.mxu0 %v812
    %2081 = vmatpush.msra.mxu0 %v796
    %2082 = vmatpush.msra.mxu0 %v780
    %2083 = vmatpush.msra.mxu0 %v764
    %2084 = vmatpush.msra.mxu0 %v748
    %2085 = vmatpush.msra.mxu0 %v732
    %2086 = vmatpush.msra.mxu0 %v716
    %2087 = vmatpush.msra.mxu0 %v700
    %2088 = vmatpush.msra.mxu0 %v684
    %2089 = vmatpush.msra.mxu0 %v668
    %2090 = vmatpush.msra.mxu0 %v652
    %2091 = vmatpush.msra.mxu0 %v636
    %2092 = vmatpush.msra.mxu0 %v620
    %2093 = vmatmul.f32.gmra.mxu0 %v95
    %v2094 = vpop.f32.mrf.mxu0
    %v2095 = vadd.f32 %v2075, %v2094
    %2096 = vdwg.mxu0
    %2097 = vmatpush.msra.mxu0 %v1116
    %2098 = vmatpush.msra.mxu0 %v1100
    %2099 = vmatpush.msra.mxu0 %v1084
    %2100 = vmatpush.msra.mxu0 %v1068
    %2101 = vmatpush.msra.mxu0 %v1052
    %2102 = vmatpush.msra.mxu0 %v1036
    %2103 = vmatpush.msra.mxu0 %v1020
    %2104 = vmatpush.msra.mxu0 %v1004
    %2105 = vmatpush.msra.mxu0 %v988
    %2106 = vmatpush.msra.mxu0 %v972
    %2107 = vmatpush.msra.mxu0 %v956
    %2108 = vmatpush.msra.mxu0 %v940
    %2109 = vmatpush.msra.mxu0 %v924
    %2110 = vmatpush.msra.mxu0 %v908
    %2111 = vmatpush.msra.mxu0 %v892
    %2112 = vmatpush.msra.mxu0 %v876
    %2113 = vmatmul.f32.gmra.mxu0 %v96
    %v2114 = vpop.f32.mrf.mxu0
    %v2115 = vadd.f32 %v2095, %v2114
    %2116 = vdwg.mxu0
    %2117 = vmatpush.msra.mxu0 %v349
    %2118 = vmatpush.msra.mxu0 %v333
    %2119 = vmatpush.msra.mxu0 %v317
    %2120 = vmatpush.msra.mxu0 %v301
    %2121 = vmatpush.msra.mxu0 %v285
    %2122 = vmatpush.msra.mxu0 %v269
    %2123 = vmatpush.msra.mxu0 %v253
    %2124 = vmatpush.msra.mxu0 %v237
    %2125 = vmatpush.msra.mxu0 %v221
    %2126 = vmatpush.msra.mxu0 %v205
    %2127 = vmatpush.msra.mxu0 %v189
    %2128 = vmatpush.msra.mxu0 %v173
    %2129 = vmatpush.msra.mxu0 %v157
    %2130 = vmatpush.msra.mxu0 %v141
    %2131 = vmatpush.msra.mxu0 %v125
    %2132 = vmatpush.msra.mxu0 %v109
    %2133 = vmatmul.f32.gmra.mxu0 %v93
    %v2134 = vpop.f32.mrf.mxu0
    %v2135 = vadd.f32 %v1137, %v2134
    %2136 = vdwg.mxu0
    %2137 = vmatpush.msra.mxu0 %v605
    %2138 = vmatpush.msra.mxu0 %v589
    %2139 = vmatpush.msra.mxu0 %v573
    %2140 = vmatpush.msra.mxu0 %v557
    %2141 = vmatpush.msra.mxu0 %v541
    %2142 = vmatpush.msra.mxu0 %v525
    %2143 = vmatpush.msra.mxu0 %v509
    %2144 = vmatpush.msra.mxu0 %v493
    %2145 = vmatpush.msra.mxu0 %v477
    %2146 = vmatpush.msra.mxu0 %v461
    %2147 = vmatpush.msra.mxu0 %v445
    %2148 = vmatpush.msra.mxu0 %v429
    %2149 = vmatpush.msra.mxu0 %v413
    %2150 = vmatpush.msra.mxu0 %v397
    %2151 = vmatpush.msra.mxu0 %v381
    %2152 = vmatpush.msra.mxu0 %v365
    %2153 = vmatmul.f32.gmra.mxu0 %v94
    %v2154 = vpop.f32.mrf.mxu0
    %v2155 = vadd.f32 %v2135, %v2154
    %2156 = vdwg.mxu0
    %2157 = vmatpush.msra.mxu0 %v861
    %2158 = vmatpush.msra.mxu0 %v845
    %2159 = vmatpush.msra.mxu0 %v829
    %2160 = vmatpush.msra.mxu0 %v813
    %2161 = vmatpush.msra.mxu0 %v797
    %2162 = vmatpush.msra.mxu0 %v781
    %2163 = vmatpush.msra.mxu0 %v765
    %2164 = vmatpush.msra.mxu0 %v749
    %2165 = vmatpush.msra.mxu0 %v733
    %2166 = vmatpush.msra.mxu0 %v717
    %2167 = vmatpush.msra.mxu0 %v701
    %2168 = vmatpush.msra.mxu0 %v685
    %2169 = vmatpush.msra.mxu0 %v669
    %2170 = vmatpush.msra.mxu0 %v653
    %2171 = vmatpush.msra.mxu0 %v637
    %2172 = vmatpush.msra.mxu0 %v621
    %2173 = vmatmul.f32.gmra.mxu0 %v95
    %v2174 = vpop.f32.mrf.mxu0
    %v2175 = vadd.f32 %v2155, %v2174
    %2176 = vdwg.mxu0
    %2177 = vmatpush.msra.mxu0 %v1117
    %2178 = vmatpush.msra.mxu0 %v1101
    %2179 = vmatpush.msra.mxu0 %v1085
    %2180 = vmatpush.msra.mxu0 %v1069
    %2181 = vmatpush.msra.mxu0 %v1053
    %2182 = vmatpush.msra.mxu0 %v1037
    %2183 = vmatpush.msra.mxu0 %v1021
    %2184 = vmatpush.msra.mxu0 %v1005
    %2185 = vmatpush.msra.mxu0 %v989
    %2186 = vmatpush.msra.mxu0 %v973
    %2187 = vmatpush.msra.mxu0 %v957
    %2188 = vmatpush.msra.mxu0 %v941
    %2189 = vmatpush.msra.mxu0 %v925
    %2190 = vmatpush.msra.mxu0 %v909
    %2191 = vmatpush.msra.mxu0 %v893
    %2192 = vmatpush.msra.mxu0 %v877
    %2193 = vmatmul.f32.gmra.mxu0 %v96
    %v2194 = vpop.f32.mrf.mxu0
    %v2195 = vadd.f32 %v2175, %v2194
    %2196 = vdwg.mxu0
    %2197 = vmatpush.msra.mxu0 %v350
    %2198 = vmatpush.msra.mxu0 %v334
    %2199 = vmatpush.msra.mxu0 %v318
    %2200 = vmatpush.msra.mxu0 %v302
    %2201 = vmatpush.msra.mxu0 %v286
    %2202 = vmatpush.msra.mxu0 %v270
    %2203 = vmatpush.msra.mxu0 %v254
    %2204 = vmatpush.msra.mxu0 %v238
    %2205 = vmatpush.msra.mxu0 %v222
    %2206 = vmatpush.msra.mxu0 %v206
    %2207 = vmatpush.msra.mxu0 %v190
    %2208 = vmatpush.msra.mxu0 %v174
    %2209 = vmatpush.msra.mxu0 %v158
    %2210 = vmatpush.msra.mxu0 %v142
    %2211 = vmatpush.msra.mxu0 %v126
    %2212 = vmatpush.msra.mxu0 %v110
    %2213 = vmatmul.f32.gmra.mxu0 %v93
    %v2214 = vpop.f32.mrf.mxu0
    %v2215 = vadd.f32 %v1138, %v2214
    %2216 = vdwg.mxu0
    %2217 = vmatpush.msra.mxu0 %v606
    %2218 = vmatpush.msra.mxu0 %v590
    %2219 = vmatpush.msra.mxu0 %v574
    %2220 = vmatpush.msra.mxu0 %v558
    %2221 = vmatpush.msra.mxu0 %v542
    %2222 = vmatpush.msra.mxu0 %v526
    %2223 = vmatpush.msra.mxu0 %v510
    %2224 = vmatpush.msra.mxu0 %v494
    %2225 = vmatpush.msra.mxu0 %v478
    %2226 = vmatpush.msra.mxu0 %v462
    %2227 = vmatpush.msra.mxu0 %v446
    %2228 = vmatpush.msra.mxu0 %v430
    %2229 = vmatpush.msra.mxu0 %v414
    %2230 = vmatpush.msra.mxu0 %v398
    %2231 = vmatpush.msra.mxu0 %v382
    %2232 = vmatpush.msra.mxu0 %v366
    %2233 = vmatmul.f32.gmra.mxu0 %v94
    %v2234 = vpop.f32.mrf.mxu0
    %v2235 = vadd.f32 %v2215, %v2234
    %2236 = vdwg.mxu0
    %2237 = vmatpush.msra.mxu0 %v862
    %2238 = vmatpush.msra.mxu0 %v846
    %2239 = vmatpush.msra.mxu0 %v830
    %2240 = vmatpush.msra.mxu0 %v814
    %2241 = vmatpush.msra.mxu0 %v798
    %2242 = vmatpush.msra.mxu0 %v782
    %2243 = vmatpush.msra.mxu0 %v766
    %2244 = vmatpush.msra.mxu0 %v750
    %2245 = vmatpush.msra.mxu0 %v734
    %2246 = vmatpush.msra.mxu0 %v718
    %2247 = vmatpush.msra.mxu0 %v702
    %2248 = vmatpush.msra.mxu0 %v686
    %2249 = vmatpush.msra.mxu0 %v670
    %2250 = vmatpush.msra.mxu0 %v654
    %2251 = vmatpush.msra.mxu0 %v638
    %2252 = vmatpush.msra.mxu0 %v622
    %2253 = vmatmul.f32.gmra.mxu0 %v95
    %v2254 = vpop.f32.mrf.mxu0
    %v2255 = vadd.f32 %v2235, %v2254
    %2256 = vdwg.mxu0
    %2257 = vmatpush.msra.mxu0 %v1118
    %2258 = vmatpush.msra.mxu0 %v1102
    %2259 = vmatpush.msra.mxu0 %v1086
    %2260 = vmatpush.msra.mxu0 %v1070
    %2261 = vmatpush.msra.mxu0 %v1054
    %2262 = vmatpush.msra.mxu0 %v1038
    %2263 = vmatpush.msra.mxu0 %v1022
    %2264 = vmatpush.msra.mxu0 %v1006
    %2265 = vmatpush.msra.mxu0 %v990
    %2266 = vmatpush.msra.mxu0 %v974
    %2267 = vmatpush.msra.mxu0 %v958
    %2268 = vmatpush.msra.mxu0 %v942
    %2269 = vmatpush.msra.mxu0 %v926
    %2270 = vmatpush.msra.mxu0 %v910
    %2271 = vmatpush.msra.mxu0 %v894
    %2272 = vmatpush.msra.mxu0 %v878
    %2273 = vmatmul.f32.gmra.mxu0 %v96
    %v2274 = vpop.f32.mrf.mxu0
    %v2275 = vadd.f32 %v2255, %v2274
    %2276 = vdwg.mxu0
    %2277 = vmatpush.msra.mxu0 %v351
    %2278 = vmatpush.msra.mxu0 %v335
    %2279 = vmatpush.msra.mxu0 %v319
    %2280 = vmatpush.msra.mxu0 %v303
    %2281 = vmatpush.msra.mxu0 %v287
    %2282 = vmatpush.msra.mxu0 %v271
    %2283 = vmatpush.msra.mxu0 %v255
    %2284 = vmatpush.msra.mxu0 %v239
    %2285 = vmatpush.msra.mxu0 %v223
    %2286 = vmatpush.msra.mxu0 %v207
    %2287 = vmatpush.msra.mxu0 %v191
    %2288 = vmatpush.msra.mxu0 %v175
    %2289 = vmatpush.msra.mxu0 %v159
    %2290 = vmatpush.msra.mxu0 %v143
    %2291 = vmatpush.msra.mxu0 %v127
    %2292 = vmatpush.msra.mxu0 %v111
    %2293 = vmatmul.f32.gmra.mxu0 %v93
    %v2294 = vpop.f32.mrf.mxu0
    %v2295 = vadd.f32 %v1139, %v2294
    %2296 = vdwg.mxu0
    %2297 = vmatpush.msra.mxu0 %v607
    %2298 = vmatpush.msra.mxu0 %v591
    %2299 = vmatpush.msra.mxu0 %v575
    %2300 = vmatpush.msra.mxu0 %v559
    %2301 = vmatpush.msra.mxu0 %v543
    %2302 = vmatpush.msra.mxu0 %v527
    %2303 = vmatpush.msra.mxu0 %v511
    %2304 = vmatpush.msra.mxu0 %v495
    %2305 = vmatpush.msra.mxu0 %v479
    %2306 = vmatpush.msra.mxu0 %v463
    %2307 = vmatpush.msra.mxu0 %v447
    %2308 = vmatpush.msra.mxu0 %v431
    %2309 = vmatpush.msra.mxu0 %v415
    %2310 = vmatpush.msra.mxu0 %v399
    %2311 = vmatpush.msra.mxu0 %v383
    %2312 = vmatpush.msra.mxu0 %v367
    %2313 = vmatmul.f32.gmra.mxu0 %v94
    %v2314 = vpop.f32.mrf.mxu0
    %v2315 = vadd.f32 %v2295, %v2314
    %2316 = vdwg.mxu0
    %2317 = vmatpush.msra.mxu0 %v863
    %2318 = vmatpush.msra.mxu0 %v847
    %2319 = vmatpush.msra.mxu0 %v831
    %2320 = vmatpush.msra.mxu0 %v815
    %2321 = vmatpush.msra.mxu0 %v799
    %2322 = vmatpush.msra.mxu0 %v783
    %2323 = vmatpush.msra.mxu0 %v767
    %2324 = vmatpush.msra.mxu0 %v751
    %2325 = vmatpush.msra.mxu0 %v735
    %2326 = vmatpush.msra.mxu0 %v719
    %2327 = vmatpush.msra.mxu0 %v703
    %2328 = vmatpush.msra.mxu0 %v687
    %2329 = vmatpush.msra.mxu0 %v671
    %2330 = vmatpush.msra.mxu0 %v655
    %2331 = vmatpush.msra.mxu0 %v639
    %2332 = vmatpush.msra.mxu0 %v623
    %2333 = vmatmul.f32.gmra.mxu0 %v95
    %v2334 = vpop.f32.mrf.mxu0
    %v2335 = vadd.f32 %v2315, %v2334
    %2336 = vdwg.mxu0
    %2337 = vmatpush.msra.mxu0 %v1119
    %2338 = vmatpush.msra.mxu0 %v1103
    %2339 = vmatpush.msra.mxu0 %v1087
    %2340 = vmatpush.msra.mxu0 %v1071
    %2341 = vmatpush.msra.mxu0 %v1055
    %2342 = vmatpush.msra.mxu0 %v1039
    %2343 = vmatpush.msra.mxu0 %v1023
    %2344 = vmatpush.msra.mxu0 %v1007
    %2345 = vmatpush.msra.mxu0 %v991
    %2346 = vmatpush.msra.mxu0 %v975
    %2347 = vmatpush.msra.mxu0 %v959
    %2348 = vmatpush.msra.mxu0 %v943
    %2349 = vmatpush.msra.mxu0 %v927
    %2350 = vmatpush.msra.mxu0 %v911
    %2351 = vmatpush.msra.mxu0 %v895
    %2352 = vmatpush.msra.mxu0 %v879
    %2353 = vmatmul.f32.gmra.mxu0 %v96
    %v2354 = vpop.f32.mrf.mxu0
    %v2355 = vadd.f32 %v2335, %v2354
    %2356 = vdwg.mxu0
    %2357 = vmatpush.msra.mxu0 %v352
    %2358 = vmatpush.msra.mxu0 %v336
    %2359 = vmatpush.msra.mxu0 %v320
    %2360 = vmatpush.msra.mxu0 %v304
    %2361 = vmatpush.msra.mxu0 %v288
    %2362 = vmatpush.msra.mxu0 %v272
    %2363 = vmatpush.msra.mxu0 %v256
    %2364 = vmatpush.msra.mxu0 %v240
    %2365 = vmatpush.msra.mxu0 %v224
    %2366 = vmatpush.msra.mxu0 %v208
    %2367 = vmatpush.msra.mxu0 %v192
    %2368 = vmatpush.msra.mxu0 %v176
    %2369 = vmatpush.msra.mxu0 %v160
    %2370 = vmatpush.msra.mxu0 %v144
    %2371 = vmatpush.msra.mxu0 %v128
    %2372 = vmatpush.msra.mxu0 %v112
    %2373 = vmatmul.f32.gmra.mxu0 %v93
    %v2374 = vpop.f32.mrf.mxu0
    %v2375 = vadd.f32 %v1140, %v2374
    %2376 = vdwg.mxu0
    %2377 = vmatpush.msra.mxu0 %v608
    %2378 = vmatpush.msra.mxu0 %v592
    %2379 = vmatpush.msra.mxu0 %v576
    %2380 = vmatpush.msra.mxu0 %v560
    %2381 = vmatpush.msra.mxu0 %v544
    %2382 = vmatpush.msra.mxu0 %v528
    %2383 = vmatpush.msra.mxu0 %v512
    %2384 = vmatpush.msra.mxu0 %v496
    %2385 = vmatpush.msra.mxu0 %v480
    %2386 = vmatpush.msra.mxu0 %v464
    %2387 = vmatpush.msra.mxu0 %v448
    %2388 = vmatpush.msra.mxu0 %v432
    %2389 = vmatpush.msra.mxu0 %v416
    %2390 = vmatpush.msra.mxu0 %v400
    %2391 = vmatpush.msra.mxu0 %v384
    %2392 = vmatpush.msra.mxu0 %v368
    %2393 = vmatmul.f32.gmra.mxu0 %v94
    %v2394 = vpop.f32.mrf.mxu0
    %v2395 = vadd.f32 %v2375, %v2394
    %2396 = vdwg.mxu0
    %2397 = vmatpush.msra.mxu0 %v864
    %2398 = vmatpush.msra.mxu0 %v848
    %2399 = vmatpush.msra.mxu0 %v832
    %2400 = vmatpush.msra.mxu0 %v816
    %2401 = vmatpush.msra.mxu0 %v800
    %2402 = vmatpush.msra.mxu0 %v784
    %2403 = vmatpush.msra.mxu0 %v768
    %2404 = vmatpush.msra.mxu0 %v752
    %2405 = vmatpush.msra.mxu0 %v736
    %2406 = vmatpush.msra.mxu0 %v720
    %2407 = vmatpush.msra.mxu0 %v704
    %2408 = vmatpush.msra.mxu0 %v688
    %2409 = vmatpush.msra.mxu0 %v672
    %2410 = vmatpush.msra.mxu0 %v656
    %2411 = vmatpush.msra.mxu0 %v640
    %2412 = vmatpush.msra.mxu0 %v624
    %2413 = vmatmul.f32.gmra.mxu0 %v95
    %v2414 = vpop.f32.mrf.mxu0
    %v2415 = vadd.f32 %v2395, %v2414
    %2416 = vdwg.mxu0
    %2417 = vmatpush.msra.mxu0 %v1120
    %2418 = vmatpush.msra.mxu0 %v1104
    %2419 = vmatpush.msra.mxu0 %v1088
    %2420 = vmatpush.msra.mxu0 %v1072
    %2421 = vmatpush.msra.mxu0 %v1056
    %2422 = vmatpush.msra.mxu0 %v1040
    %2423 = vmatpush.msra.mxu0 %v1024
    %2424 = vmatpush.msra.mxu0 %v1008
    %2425 = vmatpush.msra.mxu0 %v992
    %2426 = vmatpush.msra.mxu0 %v976
    %2427 = vmatpush.msra.mxu0 %v960
    %2428 = vmatpush.msra.mxu0 %v944
    %2429 = vmatpush.msra.mxu0 %v928
    %2430 = vmatpush.msra.mxu0 %v912
    %2431 = vmatpush.msra.mxu0 %v896
    %2432 = vmatpush.msra.mxu0 %v880
    %2433 = vmatmul.f32.gmra.mxu0 %v96
    %v2434 = vpop.f32.mrf.mxu0
    %v2435 = vadd.f32 %v2415, %v2434
    %2436 = vdwg.mxu0
    %v2437 = vtanh.pop %v1235
    %v2438 = vtanh.pop %v1315
    %v2439 = vtanh.pop %v1395
    %v2440 = vtanh.pop %v1475
    %v2441 = vtanh.pop %v1555
    %v2442 = vtanh.pop %v1635
    %v2443 = vtanh.pop %v1715
    %v2444 = vtanh.pop %v1795
    %v2445 = vtanh.pop %v1875
    %v2446 = vtanh.pop %v1955
    %v2447 = vtanh.pop %v2035
    %v2448 = vtanh.pop %v2115
    %v2449 = vtanh.pop %v2195
    %v2450 = vtanh.pop %v2275
    %v2451 = vtanh.pop %v2355
    %v2452 = vtanh.pop %v2435
    %v2453 = vld [vmem:[#allocation8] sm:$0xff]
    %v2454 = vld [vmem:[#allocation8 + $0x8] sm:$0xff]
    %v2455 = vld [vmem:[#allocation8 + $0x10] sm:$0xff]
    %v2456 = vld [vmem:[#allocation8 + $0x18] sm:$0xff]
    %v2457 = vld [vmem:[#allocation8 + $0x20] sm:$0xff]
    %v2458 = vld [vmem:[#allocation8 + $0x28] sm:$0xff]
    %v2459 = vld [vmem:[#allocation8 + $0x30] sm:$0xff]
    %v2460 = vld [vmem:[#allocation8 + $0x38] sm:$0xff]
    %v2461 = vld [vmem:[#allocation8 + $0x40] sm:$0xff]
    %v2462 = vld [vmem:[#allocation8 + $0x48] sm:$0xff]
    %v2463 = vld [vmem:[#allocation8 + $0x50] sm:$0xff]
    %v2464 = vld [vmem:[#allocation8 + $0x58] sm:$0xff]
    %v2465 = vld [vmem:[#allocation8 + $0x60] sm:$0xff]
    %v2466 = vld [vmem:[#allocation8 + $0x68] sm:$0xff]
    %v2467 = vld [vmem:[#allocation8 + $0x70] sm:$0xff]
    %v2468 = vld [vmem:[#allocation8 + $0x78] sm:$0xff]
    %v2469 = vld [vmem:[#allocation8 + $0x80] sm:$0xff]
    %v2470 = vld [vmem:[#allocation8 + $0x88] sm:$0xff]
    %v2471 = vld [vmem:[#allocation8 + $0x90] sm:$0xff]
    %v2472 = vld [vmem:[#allocation8 + $0x98] sm:$0xff]
    %v2473 = vld [vmem:[#allocation8 + $0xa0] sm:$0xff]
    %v2474 = vld [vmem:[#allocation8 + $0xa8] sm:$0xff]
    %v2475 = vld [vmem:[#allocation8 + $0xb0] sm:$0xff]
    %v2476 = vld [vmem:[#allocation8 + $0xb8] sm:$0xff]
    %v2477 = vld [vmem:[#allocation8 + $0xc0] sm:$0xff]
    %v2478 = vld [vmem:[#allocation8 + $0xc8] sm:$0xff]
    %v2479 = vld [vmem:[#allocation8 + $0xd0] sm:$0xff]
    %v2480 = vld [vmem:[#allocation8 + $0xd8] sm:$0xff]
    %v2481 = vld [vmem:[#allocation8 + $0xe0] sm:$0xff]
    %v2482 = vld [vmem:[#allocation8 + $0xe8] sm:$0xff]
    %v2483 = vld [vmem:[#allocation8 + $0xf0] sm:$0xff]
    %v2484 = vld [vmem:[#allocation8 + $0xf8] sm:$0xff]
    %v2485 = vld [vmem:[#allocation8 + $0x100] sm:$0xff]
    %v2486 = vld [vmem:[#allocation8 + $0x108] sm:$0xff]
    %v2487 = vld [vmem:[#allocation8 + $0x110] sm:$0xff]
    %v2488 = vld [vmem:[#allocation8 + $0x118] sm:$0xff]
    %v2489 = vld [vmem:[#allocation8 + $0x120] sm:$0xff]
    %v2490 = vld [vmem:[#allocation8 + $0x128] sm:$0xff]
    %v2491 = vld [vmem:[#allocation8 + $0x130] sm:$0xff]
    %v2492 = vld [vmem:[#allocation8 + $0x138] sm:$0xff]
    %v2493 = vld [vmem:[#allocation8 + $0x140] sm:$0xff]
    %v2494 = vld [vmem:[#allocation8 + $0x148] sm:$0xff]
    %v2495 = vld [vmem:[#allocation8 + $0x150] sm:$0xff]
    %v2496 = vld [vmem:[#allocation8 + $0x158] sm:$0xff]
    %v2497 = vld [vmem:[#allocation8 + $0x160] sm:$0xff]
    %v2498 = vld [vmem:[#allocation8 + $0x168] sm:$0xff]
    %v2499 = vld [vmem:[#allocation8 + $0x170] sm:$0xff]
    %v2500 = vld [vmem:[#allocation8 + $0x178] sm:$0xff]
    %v2501 = vld [vmem:[#allocation8 + $0x180] sm:$0xff]
    %v2502 = vld [vmem:[#allocation8 + $0x188] sm:$0xff]
    %v2503 = vld [vmem:[#allocation8 + $0x190] sm:$0xff]
    %v2504 = vld [vmem:[#allocation8 + $0x198] sm:$0xff]
    %v2505 = vld [vmem:[#allocation8 + $0x1a0] sm:$0xff]
    %v2506 = vld [vmem:[#allocation8 + $0x1a8] sm:$0xff]
    %v2507 = vld [vmem:[#allocation8 + $0x1b0] sm:$0xff]
    %v2508 = vld [vmem:[#allocation8 + $0x1b8] sm:$0xff]
    %v2509 = vld [vmem:[#allocation8 + $0x1c0] sm:$0xff]
    %v2510 = vld [vmem:[#allocation8 + $0x1c8] sm:$0xff]
    %v2511 = vld [vmem:[#allocation8 + $0x1d0] sm:$0xff]
    %v2512 = vld [vmem:[#allocation8 + $0x1d8] sm:$0xff]
    %v2513 = vld [vmem:[#allocation8 + $0x1e0] sm:$0xff]
    %v2514 = vld [vmem:[#allocation8 + $0x1e8] sm:$0xff]
    %v2515 = vld [vmem:[#allocation8 + $0x1f0] sm:$0xff]
    %v2516 = vld [vmem:[#allocation8 + $0x1f8] sm:$0xff]
    %v2517 = vld [vmem:[#allocation8 + $0x200] sm:$0xff]
    %v2518 = vld [vmem:[#allocation8 + $0x208] sm:$0xff]
    %v2519 = vld [vmem:[#allocation8 + $0x210] sm:$0xff]
    %v2520 = vld [vmem:[#allocation8 + $0x218] sm:$0xff]
    %v2521 = vld [vmem:[#allocation8 + $0x220] sm:$0xff]
    %v2522 = vld [vmem:[#allocation8 + $0x228] sm:$0xff]
    %v2523 = vld [vmem:[#allocation8 + $0x230] sm:$0xff]
    %v2524 = vld [vmem:[#allocation8 + $0x238] sm:$0xff]
    %v2525 = vld [vmem:[#allocation8 + $0x240] sm:$0xff]
    %v2526 = vld [vmem:[#allocation8 + $0x248] sm:$0xff]
    %v2527 = vld [vmem:[#allocation8 + $0x250] sm:$0xff]
    %v2528 = vld [vmem:[#allocation8 + $0x258] sm:$0xff]
    %v2529 = vld [vmem:[#allocation8 + $0x260] sm:$0xff]
    %v2530 = vld [vmem:[#allocation8 + $0x268] sm:$0xff]
    %v2531 = vld [vmem:[#allocation8 + $0x270] sm:$0xff]
    %v2532 = vld [vmem:[#allocation8 + $0x278] sm:$0xff]
    %v2533 = vld [vmem:[#allocation8 + $0x280] sm:$0xff]
    %v2534 = vld [vmem:[#allocation8 + $0x288] sm:$0xff]
    %v2535 = vld [vmem:[#allocation8 + $0x290] sm:$0xff]
    %v2536 = vld [vmem:[#allocation8 + $0x298] sm:$0xff]
    %v2537 = vld [vmem:[#allocation8 + $0x2a0] sm:$0xff]
    %v2538 = vld [vmem:[#allocation8 + $0x2a8] sm:$0xff]
    %v2539 = vld [vmem:[#allocation8 + $0x2b0] sm:$0xff]
    %v2540 = vld [vmem:[#allocation8 + $0x2b8] sm:$0xff]
    %v2541 = vld [vmem:[#allocation8 + $0x2c0] sm:$0xff]
    %v2542 = vld [vmem:[#allocation8 + $0x2c8] sm:$0xff]
    %v2543 = vld [vmem:[#allocation8 + $0x2d0] sm:$0xff]
    %v2544 = vld [vmem:[#allocation8 + $0x2d8] sm:$0xff]
    %v2545 = vld [vmem:[#allocation8 + $0x2e0] sm:$0xff]
    %v2546 = vld [vmem:[#allocation8 + $0x2e8] sm:$0xff]
    %v2547 = vld [vmem:[#allocation8 + $0x2f0] sm:$0xff]
    %v2548 = vld [vmem:[#allocation8 + $0x2f8] sm:$0xff]
    %v2549 = vld [vmem:[#allocation8 + $0x300] sm:$0xff]
    %v2550 = vld [vmem:[#allocation8 + $0x308] sm:$0xff]
    %v2551 = vld [vmem:[#allocation8 + $0x310] sm:$0xff]
    %v2552 = vld [vmem:[#allocation8 + $0x318] sm:$0xff]
    %v2553 = vld [vmem:[#allocation8 + $0x320] sm:$0xff]
    %v2554 = vld [vmem:[#allocation8 + $0x328] sm:$0xff]
    %v2555 = vld [vmem:[#allocation8 + $0x330] sm:$0xff]
    %v2556 = vld [vmem:[#allocation8 + $0x338] sm:$0xff]
    %v2557 = vld [vmem:[#allocation8 + $0x340] sm:$0xff]
    %v2558 = vld [vmem:[#allocation8 + $0x348] sm:$0xff]
    %v2559 = vld [vmem:[#allocation8 + $0x350] sm:$0xff]
    %v2560 = vld [vmem:[#allocation8 + $0x358] sm:$0xff]
    %v2561 = vld [vmem:[#allocation8 + $0x360] sm:$0xff]
    %v2562 = vld [vmem:[#allocation8 + $0x368] sm:$0xff]
    %v2563 = vld [vmem:[#allocation8 + $0x370] sm:$0xff]
    %v2564 = vld [vmem:[#allocation8 + $0x378] sm:$0xff]
    %v2565 = vld [vmem:[#allocation8 + $0x380] sm:$0xff]
    %v2566 = vld [vmem:[#allocation8 + $0x388] sm:$0xff]
    %v2567 = vld [vmem:[#allocation8 + $0x390] sm:$0xff]
    %v2568 = vld [vmem:[#allocation8 + $0x398] sm:$0xff]
    %v2569 = vld [vmem:[#allocation8 + $0x3a0] sm:$0xff]
    %v2570 = vld [vmem:[#allocation8 + $0x3a8] sm:$0xff]
    %v2571 = vld [vmem:[#allocation8 + $0x3b0] sm:$0xff]
    %v2572 = vld [vmem:[#allocation8 + $0x3b8] sm:$0xff]
    %v2573 = vld [vmem:[#allocation8 + $0x3c0] sm:$0xff]
    %v2574 = vld [vmem:[#allocation8 + $0x3c8] sm:$0xff]
    %v2575 = vld [vmem:[#allocation8 + $0x3d0] sm:$0xff]
    %v2576 = vld [vmem:[#allocation8 + $0x3d8] sm:$0xff]
    %v2577 = vld [vmem:[#allocation8 + $0x3e0] sm:$0xff]
    %v2578 = vld [vmem:[#allocation8 + $0x3e8] sm:$0xff]
    %v2579 = vld [vmem:[#allocation8 + $0x3f0] sm:$0xff]
    %v2580 = vld [vmem:[#allocation8 + $0x3f8] sm:$0xff]
    %v2581 = vld [vmem:[#allocation8 + $0x400] sm:$0xff]
    %v2582 = vld [vmem:[#allocation8 + $0x408] sm:$0xff]
    %v2583 = vld [vmem:[#allocation8 + $0x410] sm:$0xff]
    %v2584 = vld [vmem:[#allocation8 + $0x418] sm:$0xff]
    %v2585 = vld [vmem:[#allocation8 + $0x420] sm:$0xff]
    %v2586 = vld [vmem:[#allocation8 + $0x428] sm:$0xff]
    %v2587 = vld [vmem:[#allocation8 + $0x430] sm:$0xff]
    %v2588 = vld [vmem:[#allocation8 + $0x438] sm:$0xff]
    %v2589 = vld [vmem:[#allocation8 + $0x440] sm:$0xff]
    %v2590 = vld [vmem:[#allocation8 + $0x448] sm:$0xff]
    %v2591 = vld [vmem:[#allocation8 + $0x450] sm:$0xff]
    %v2592 = vld [vmem:[#allocation8 + $0x458] sm:$0xff]
    %v2593 = vld [vmem:[#allocation8 + $0x460] sm:$0xff]
    %v2594 = vld [vmem:[#allocation8 + $0x468] sm:$0xff]
    %v2595 = vld [vmem:[#allocation8 + $0x470] sm:$0xff]
    %v2596 = vld [vmem:[#allocation8 + $0x478] sm:$0xff]
    %v2597 = vld [vmem:[#allocation8 + $0x480] sm:$0xff]
    %v2598 = vld [vmem:[#allocation8 + $0x488] sm:$0xff]
    %v2599 = vld [vmem:[#allocation8 + $0x490] sm:$0xff]
    %v2600 = vld [vmem:[#allocation8 + $0x498] sm:$0xff]
    %v2601 = vld [vmem:[#allocation8 + $0x4a0] sm:$0xff]
    %v2602 = vld [vmem:[#allocation8 + $0x4a8] sm:$0xff]
    %v2603 = vld [vmem:[#allocation8 + $0x4b0] sm:$0xff]
    %v2604 = vld [vmem:[#allocation8 + $0x4b8] sm:$0xff]
    %v2605 = vld [vmem:[#allocation8 + $0x4c0] sm:$0xff]
    %v2606 = vld [vmem:[#allocation8 + $0x4c8] sm:$0xff]
    %v2607 = vld [vmem:[#allocation8 + $0x4d0] sm:$0xff]
    %v2608 = vld [vmem:[#allocation8 + $0x4d8] sm:$0xff]
    %v2609 = vld [vmem:[#allocation8 + $0x4e0] sm:$0xff]
    %v2610 = vld [vmem:[#allocation8 + $0x4e8] sm:$0xff]
    %v2611 = vld [vmem:[#allocation8 + $0x4f0] sm:$0xff]
    %v2612 = vld [vmem:[#allocation8 + $0x4f8] sm:$0xff]
    %v2613 = vld [vmem:[#allocation8 + $0x500] sm:$0xff]
    %v2614 = vld [vmem:[#allocation8 + $0x508] sm:$0xff]
    %v2615 = vld [vmem:[#allocation8 + $0x510] sm:$0xff]
    %v2616 = vld [vmem:[#allocation8 + $0x518] sm:$0xff]
    %v2617 = vld [vmem:[#allocation8 + $0x520] sm:$0xff]
    %v2618 = vld [vmem:[#allocation8 + $0x528] sm:$0xff]
    %v2619 = vld [vmem:[#allocation8 + $0x530] sm:$0xff]
    %v2620 = vld [vmem:[#allocation8 + $0x538] sm:$0xff]
    %v2621 = vld [vmem:[#allocation8 + $0x540] sm:$0xff]
    %v2622 = vld [vmem:[#allocation8 + $0x548] sm:$0xff]
    %v2623 = vld [vmem:[#allocation8 + $0x550] sm:$0xff]
    %v2624 = vld [vmem:[#allocation8 + $0x558] sm:$0xff]
    %v2625 = vld [vmem:[#allocation8 + $0x560] sm:$0xff]
    %v2626 = vld [vmem:[#allocation8 + $0x568] sm:$0xff]
    %v2627 = vld [vmem:[#allocation8 + $0x570] sm:$0xff]
    %v2628 = vld [vmem:[#allocation8 + $0x578] sm:$0xff]
    %v2629 = vld [vmem:[#allocation8 + $0x580] sm:$0xff]
    %v2630 = vld [vmem:[#allocation8 + $0x588] sm:$0xff]
    %v2631 = vld [vmem:[#allocation8 + $0x590] sm:$0xff]
    %v2632 = vld [vmem:[#allocation8 + $0x598] sm:$0xff]
    %v2633 = vld [vmem:[#allocation8 + $0x5a0] sm:$0xff]
    %v2634 = vld [vmem:[#allocation8 + $0x5a8] sm:$0xff]
    %v2635 = vld [vmem:[#allocation8 + $0x5b0] sm:$0xff]
    %v2636 = vld [vmem:[#allocation8 + $0x5b8] sm:$0xff]
    %v2637 = vld [vmem:[#allocation8 + $0x5c0] sm:$0xff]
    %v2638 = vld [vmem:[#allocation8 + $0x5c8] sm:$0xff]
    %v2639 = vld [vmem:[#allocation8 + $0x5d0] sm:$0xff]
    %v2640 = vld [vmem:[#allocation8 + $0x5d8] sm:$0xff]
    %v2641 = vld [vmem:[#allocation8 + $0x5e0] sm:$0xff]
    %v2642 = vld [vmem:[#allocation8 + $0x5e8] sm:$0xff]
    %v2643 = vld [vmem:[#allocation8 + $0x5f0] sm:$0xff]
    %v2644 = vld [vmem:[#allocation8 + $0x5f8] sm:$0xff]
    %v2645 = vld [vmem:[#allocation8 + $0x600] sm:$0xff]
    %v2646 = vld [vmem:[#allocation8 + $0x608] sm:$0xff]
    %v2647 = vld [vmem:[#allocation8 + $0x610] sm:$0xff]
    %v2648 = vld [vmem:[#allocation8 + $0x618] sm:$0xff]
    %v2649 = vld [vmem:[#allocation8 + $0x620] sm:$0xff]
    %v2650 = vld [vmem:[#allocation8 + $0x628] sm:$0xff]
    %v2651 = vld [vmem:[#allocation8 + $0x630] sm:$0xff]
    %v2652 = vld [vmem:[#allocation8 + $0x638] sm:$0xff]
    %v2653 = vld [vmem:[#allocation8 + $0x640] sm:$0xff]
    %v2654 = vld [vmem:[#allocation8 + $0x648] sm:$0xff]
    %v2655 = vld [vmem:[#allocation8 + $0x650] sm:$0xff]
    %v2656 = vld [vmem:[#allocation8 + $0x658] sm:$0xff]
    %v2657 = vld [vmem:[#allocation8 + $0x660] sm:$0xff]
    %v2658 = vld [vmem:[#allocation8 + $0x668] sm:$0xff]
    %v2659 = vld [vmem:[#allocation8 + $0x670] sm:$0xff]
    %v2660 = vld [vmem:[#allocation8 + $0x678] sm:$0xff]
    %v2661 = vld [vmem:[#allocation8 + $0x680] sm:$0xff]
    %v2662 = vld [vmem:[#allocation8 + $0x688] sm:$0xff]
    %v2663 = vld [vmem:[#allocation8 + $0x690] sm:$0xff]
    %v2664 = vld [vmem:[#allocation8 + $0x698] sm:$0xff]
    %v2665 = vld [vmem:[#allocation8 + $0x6a0] sm:$0xff]
    %v2666 = vld [vmem:[#allocation8 + $0x6a8] sm:$0xff]
    %v2667 = vld [vmem:[#allocation8 + $0x6b0] sm:$0xff]
    %v2668 = vld [vmem:[#allocation8 + $0x6b8] sm:$0xff]
    %v2669 = vld [vmem:[#allocation8 + $0x6c0] sm:$0xff]
    %v2670 = vld [vmem:[#allocation8 + $0x6c8] sm:$0xff]
    %v2671 = vld [vmem:[#allocation8 + $0x6d0] sm:$0xff]
    %v2672 = vld [vmem:[#allocation8 + $0x6d8] sm:$0xff]
    %v2673 = vld [vmem:[#allocation8 + $0x6e0] sm:$0xff]
    %v2674 = vld [vmem:[#allocation8 + $0x6e8] sm:$0xff]
    %v2675 = vld [vmem:[#allocation8 + $0x6f0] sm:$0xff]
    %v2676 = vld [vmem:[#allocation8 + $0x6f8] sm:$0xff]
    %v2677 = vld [vmem:[#allocation8 + $0x700] sm:$0xff]
    %v2678 = vld [vmem:[#allocation8 + $0x708] sm:$0xff]
    %v2679 = vld [vmem:[#allocation8 + $0x710] sm:$0xff]
    %v2680 = vld [vmem:[#allocation8 + $0x718] sm:$0xff]
    %v2681 = vld [vmem:[#allocation8 + $0x720] sm:$0xff]
    %v2682 = vld [vmem:[#allocation8 + $0x728] sm:$0xff]
    %v2683 = vld [vmem:[#allocation8 + $0x730] sm:$0xff]
    %v2684 = vld [vmem:[#allocation8 + $0x738] sm:$0xff]
    %v2685 = vld [vmem:[#allocation8 + $0x740] sm:$0xff]
    %v2686 = vld [vmem:[#allocation8 + $0x748] sm:$0xff]
    %v2687 = vld [vmem:[#allocation8 + $0x750] sm:$0xff]
    %v2688 = vld [vmem:[#allocation8 + $0x758] sm:$0xff]
    %v2689 = vld [vmem:[#allocation8 + $0x760] sm:$0xff]
    %v2690 = vld [vmem:[#allocation8 + $0x768] sm:$0xff]
    %v2691 = vld [vmem:[#allocation8 + $0x770] sm:$0xff]
    %v2692 = vld [vmem:[#allocation8 + $0x778] sm:$0xff]
    %v2693 = vld [vmem:[#allocation8 + $0x780] sm:$0xff]
    %v2694 = vld [vmem:[#allocation8 + $0x788] sm:$0xff]
    %v2695 = vld [vmem:[#allocation8 + $0x790] sm:$0xff]
    %v2696 = vld [vmem:[#allocation8 + $0x798] sm:$0xff]
    %v2697 = vld [vmem:[#allocation8 + $0x7a0] sm:$0xff]
    %v2698 = vld [vmem:[#allocation8 + $0x7a8] sm:$0xff]
    %v2699 = vld [vmem:[#allocation8 + $0x7b0] sm:$0xff]
    %v2700 = vld [vmem:[#allocation8 + $0x7b8] sm:$0xff]
    %v2701 = vld [vmem:[#allocation8 + $0x7c0] sm:$0xff]
    %v2702 = vld [vmem:[#allocation8 + $0x7c8] sm:$0xff]
    %v2703 = vld [vmem:[#allocation8 + $0x7d0] sm:$0xff]
    %v2704 = vld [vmem:[#allocation8 + $0x7d8] sm:$0xff]
    %v2705 = vld [vmem:[#allocation8 + $0x7e0] sm:$0xff]
    %v2706 = vld [vmem:[#allocation8 + $0x7e8] sm:$0xff]
    %v2707 = vld [vmem:[#allocation8 + $0x7f0] sm:$0xff]
    %v2708 = vld [vmem:[#allocation8 + $0x7f8] sm:$0xff]
    %v2709 = vld [vmem:[#allocation10] sm:$0x1]
    %v2711 = vperm.slane %v2709, 0
    %2713 = vmatpush.msra.mxu0 %v2468
    %2714 = vmatpush.msra.mxu0 %v2467
    %2715 = vmatpush.msra.mxu0 %v2466
    %2716 = vmatpush.msra.mxu0 %v2465
    %2717 = vmatpush.msra.mxu0 %v2464
    %2718 = vmatpush.msra.mxu0 %v2463
    %2719 = vmatpush.msra.mxu0 %v2462
    %2720 = vmatpush.msra.mxu0 %v2461
    %2721 = vmatpush.msra.mxu0 %v2460
    %2722 = vmatpush.msra.mxu0 %v2459
    %2723 = vmatpush.msra.mxu0 %v2458
    %2724 = vmatpush.msra.mxu0 %v2457
    %2725 = vmatpush.msra.mxu0 %v2456
    %2726 = vmatpush.msra.mxu0 %v2455
    %2727 = vmatpush.msra.mxu0 %v2454
    %2728 = vmatpush.msra.mxu0 %v2453
    %2729 = vmatmul.f32.gmra.mxu0 %v2437
    %v2730 = vpop.f32.mrf.mxu0
    %v2731 = vadd.f32 %v2711, %v2730
    %2732 = vdwg.mxu0
    %2733 = vmatpush.msra.mxu0 %v2484
    %2734 = vmatpush.msra.mxu0 %v2483
    %2735 = vmatpush.msra.mxu0 %v2482
    %2736 = vmatpush.msra.mxu0 %v2481
    %2737 = vmatpush.msra.mxu0 %v2480
    %2738 = vmatpush.msra.mxu0 %v2479
    %2739 = vmatpush.msra.mxu0 %v2478
    %2740 = vmatpush.msra.mxu0 %v2477
    %2741 = vmatpush.msra.mxu0 %v2476
    %2742 = vmatpush.msra.mxu0 %v2475
    %2743 = vmatpush.msra.mxu0 %v2474
    %2744 = vmatpush.msra.mxu0 %v2473
    %2745 = vmatpush.msra.mxu0 %v2472
    %2746 = vmatpush.msra.mxu0 %v2471
    %2747 = vmatpush.msra.mxu0 %v2470
    %2748 = vmatpush.msra.mxu0 %v2469
    %2749 = vmatmul.f32.gmra.mxu0 %v2438
    %v2750 = vpop.f32.mrf.mxu0
    %v2751 = vadd.f32 %v2731, %v2750
    %2752 = vdwg.mxu0
    %2753 = vmatpush.msra.mxu0 %v2500
    %2754 = vmatpush.msra.mxu0 %v2499
    %2755 = vmatpush.msra.mxu0 %v2498
    %2756 = vmatpush.msra.mxu0 %v2497
    %2757 = vmatpush.msra.mxu0 %v2496
    %2758 = vmatpush.msra.mxu0 %v2495
    %2759 = vmatpush.msra.mxu0 %v2494
    %2760 = vmatpush.msra.mxu0 %v2493
    %2761 = vmatpush.msra.mxu0 %v2492
    %2762 = vmatpush.msra.mxu0 %v2491
    %2763 = vmatpush.msra.mxu0 %v2490
    %2764 = vmatpush.msra.mxu0 %v2489
    %2765 = vmatpush.msra.mxu0 %v2488
    %2766 = vmatpush.msra.mxu0 %v2487
    %2767 = vmatpush.msra.mxu0 %v2486
    %2768 = vmatpush.msra.mxu0 %v2485
    %2769 = vmatmul.f32.gmra.mxu0 %v2439
    %v2770 = vpop.f32.mrf.mxu0
    %v2771 = vadd.f32 %v2751, %v2770
    %2772 = vdwg.mxu0
    %2773 = vmatpush.msra.mxu0 %v2516
    %2774 = vmatpush.msra.mxu0 %v2515
    %2775 = vmatpush.msra.mxu0 %v2514
    %2776 = vmatpush.msra.mxu0 %v2513
    %2777 = vmatpush.msra.mxu0 %v2512
    %2778 = vmatpush.msra.mxu0 %v2511
    %2779 = vmatpush.msra.mxu0 %v2510
    %2780 = vmatpush.msra.mxu0 %v2509
    %2781 = vmatpush.msra.mxu0 %v2508
    %2782 = vmatpush.msra.mxu0 %v2507
    %2783 = vmatpush.msra.mxu0 %v2506
    %2784 = vmatpush.msra.mxu0 %v2505
    %2785 = vmatpush.msra.mxu0 %v2504
    %2786 = vmatpush.msra.mxu0 %v2503
    %2787 = vmatpush.msra.mxu0 %v2502
    %2788 = vmatpush.msra.mxu0 %v2501
    %2789 = vmatmul.f32.gmra.mxu0 %v2440
    %v2790 = vpop.f32.mrf.mxu0
    %v2791 = vadd.f32 %v2771, %v2790
    %2792 = vdwg.mxu0
    %2793 = vmatpush.msra.mxu0 %v2532
    %2794 = vmatpush.msra.mxu0 %v2531
    %2795 = vmatpush.msra.mxu0 %v2530
    %2796 = vmatpush.msra.mxu0 %v2529
    %2797 = vmatpush.msra.mxu0 %v2528
    %2798 = vmatpush.msra.mxu0 %v2527
    %2799 = vmatpush.msra.mxu0 %v2526
    %2800 = vmatpush.msra.mxu0 %v2525
    %2801 = vmatpush.msra.mxu0 %v2524
    %2802 = vmatpush.msra.mxu0 %v2523
    %2803 = vmatpush.msra.mxu0 %v2522
    %2804 = vmatpush.msra.mxu0 %v2521
    %2805 = vmatpush.msra.mxu0 %v2520
    %2806 = vmatpush.msra.mxu0 %v2519
    %2807 = vmatpush.msra.mxu0 %v2518
    %2808 = vmatpush.msra.mxu0 %v2517
    %2809 = vmatmul.f32.gmra.mxu0 %v2441
    %v2810 = vpop.f32.mrf.mxu0
    %v2811 = vadd.f32 %v2791, %v2810
    %2812 = vdwg.mxu0
    %2813 = vmatpush.msra.mxu0 %v2548
    %2814 = vmatpush.msra.mxu0 %v2547
    %2815 = vmatpush.msra.mxu0 %v2546
    %2816 = vmatpush.msra.mxu0 %v2545
    %2817 = vmatpush.msra.mxu0 %v2544
    %2818 = vmatpush.msra.mxu0 %v2543
    %2819 = vmatpush.msra.mxu0 %v2542
    %2820 = vmatpush.msra.mxu0 %v2541
    %2821 = vmatpush.msra.mxu0 %v2540
    %2822 = vmatpush.msra.mxu0 %v2539
    %2823 = vmatpush.msra.mxu0 %v2538
    %2824 = vmatpush.msra.mxu0 %v2537
    %2825 = vmatpush.msra.mxu0 %v2536
    %2826 = vmatpush.msra.mxu0 %v2535
    %2827 = vmatpush.msra.mxu0 %v2534
    %2828 = vmatpush.msra.mxu0 %v2533
    %2829 = vmatmul.f32.gmra.mxu0 %v2442
    %v2830 = vpop.f32.mrf.mxu0
    %v2831 = vadd.f32 %v2811, %v2830
    %2832 = vdwg.mxu0
    %2833 = vmatpush.msra.mxu0 %v2564
    %2834 = vmatpush.msra.mxu0 %v2563
    %2835 = vmatpush.msra.mxu0 %v2562
    %2836 = vmatpush.msra.mxu0 %v2561
    %2837 = vmatpush.msra.mxu0 %v2560
    %2838 = vmatpush.msra.mxu0 %v2559
    %2839 = vmatpush.msra.mxu0 %v2558
    %2840 = vmatpush.msra.mxu0 %v2557
    %2841 = vmatpush.msra.mxu0 %v2556
    %2842 = vmatpush.msra.mxu0 %v2555
    %2843 = vmatpush.msra.mxu0 %v2554
    %2844 = vmatpush.msra.mxu0 %v2553
    %2845 = vmatpush.msra.mxu0 %v2552
    %2846 = vmatpush.msra.mxu0 %v2551
    %2847 = vmatpush.msra.mxu0 %v2550
    %2848 = vmatpush.msra.mxu0 %v2549
    %2849 = vmatmul.f32.gmra.mxu0 %v2443
    %v2850 = vpop.f32.mrf.mxu0
    %v2851 = vadd.f32 %v2831, %v2850
    %2852 = vdwg.mxu0
    %2853 = vmatpush.msra.mxu0 %v2580
    %2854 = vmatpush.msra.mxu0 %v2579
    %2855 = vmatpush.msra.mxu0 %v2578
    %2856 = vmatpush.msra.mxu0 %v2577
    %2857 = vmatpush.msra.mxu0 %v2576
    %2858 = vmatpush.msra.mxu0 %v2575
    %2859 = vmatpush.msra.mxu0 %v2574
    %2860 = vmatpush.msra.mxu0 %v2573
    %2861 = vmatpush.msra.mxu0 %v2572
    %2862 = vmatpush.msra.mxu0 %v2571
    %2863 = vmatpush.msra.mxu0 %v2570
    %2864 = vmatpush.msra.mxu0 %v2569
    %2865 = vmatpush.msra.mxu0 %v2568
    %2866 = vmatpush.msra.mxu0 %v2567
    %2867 = vmatpush.msra.mxu0 %v2566
    %2868 = vmatpush.msra.mxu0 %v2565
    %2869 = vmatmul.f32.gmra.mxu0 %v2444
    %v2870 = vpop.f32.mrf.mxu0
    %v2871 = vadd.f32 %v2851, %v2870
    %2872 = vdwg.mxu0
    %2873 = vmatpush.msra.mxu0 %v2596
    %2874 = vmatpush.msra.mxu0 %v2595
    %2875 = vmatpush.msra.mxu0 %v2594
    %2876 = vmatpush.msra.mxu0 %v2593
    %2877 = vmatpush.msra.mxu0 %v2592
    %2878 = vmatpush.msra.mxu0 %v2591
    %2879 = vmatpush.msra.mxu0 %v2590
    %2880 = vmatpush.msra.mxu0 %v2589
    %2881 = vmatpush.msra.mxu0 %v2588
    %2882 = vmatpush.msra.mxu0 %v2587
    %2883 = vmatpush.msra.mxu0 %v2586
    %2884 = vmatpush.msra.mxu0 %v2585
    %2885 = vmatpush.msra.mxu0 %v2584
    %2886 = vmatpush.msra.mxu0 %v2583
    %2887 = vmatpush.msra.mxu0 %v2582
    %2888 = vmatpush.msra.mxu0 %v2581
    %2889 = vmatmul.f32.gmra.mxu0 %v2445
    %v2890 = vpop.f32.mrf.mxu0
    %v2891 = vadd.f32 %v2871, %v2890
    %2892 = vdwg.mxu0
    %2893 = vmatpush.msra.mxu0 %v2612
    %2894 = vmatpush.msra.mxu0 %v2611
    %2895 = vmatpush.msra.mxu0 %v2610
    %2896 = vmatpush.msra.mxu0 %v2609
    %2897 = vmatpush.msra.mxu0 %v2608
    %2898 = vmatpush.msra.mxu0 %v2607
    %2899 = vmatpush.msra.mxu0 %v2606
    %2900 = vmatpush.msra.mxu0 %v2605
    %2901 = vmatpush.msra.mxu0 %v2604
    %2902 = vmatpush.msra.mxu0 %v2603
    %2903 = vmatpush.msra.mxu0 %v2602
    %2904 = vmatpush.msra.mxu0 %v2601
    %2905 = vmatpush.msra.mxu0 %v2600
    %2906 = vmatpush.msra.mxu0 %v2599
    %2907 = vmatpush.msra.mxu0 %v2598
    %2908 = vmatpush.msra.mxu0 %v2597
    %2909 = vmatmul.f32.gmra.mxu0 %v2446
    %v2910 = vpop.f32.mrf.mxu0
    %v2911 = vadd.f32 %v2891, %v2910
    %2912 = vdwg.mxu0
    %2913 = vmatpush.msra.mxu0 %v2628
    %2914 = vmatpush.msra.mxu0 %v2627
    %2915 = vmatpush.msra.mxu0 %v2626
    %2916 = vmatpush.msra.mxu0 %v2625
    %2917 = vmatpush.msra.mxu0 %v2624
    %2918 = vmatpush.msra.mxu0 %v2623
    %2919 = vmatpush.msra.mxu0 %v2622
    %2920 = vmatpush.msra.mxu0 %v2621
    %2921 = vmatpush.msra.mxu0 %v2620
    %2922 = vmatpush.msra.mxu0 %v2619
    %2923 = vmatpush.msra.mxu0 %v2618
    %2924 = vmatpush.msra.mxu0 %v2617
    %2925 = vmatpush.msra.mxu0 %v2616
    %2926 = vmatpush.msra.mxu0 %v2615
    %2927 = vmatpush.msra.mxu0 %v2614
    %2928 = vmatpush.msra.mxu0 %v2613
    %2929 = vmatmul.f32.gmra.mxu0 %v2447
    %v2930 = vpop.f32.mrf.mxu0
    %v2931 = vadd.f32 %v2911, %v2930
    %2932 = vdwg.mxu0
    %2933 = vmatpush.msra.mxu0 %v2644
    %2934 = vmatpush.msra.mxu0 %v2643
    %2935 = vmatpush.msra.mxu0 %v2642
    %2936 = vmatpush.msra.mxu0 %v2641
    %2937 = vmatpush.msra.mxu0 %v2640
    %2938 = vmatpush.msra.mxu0 %v2639
    %2939 = vmatpush.msra.mxu0 %v2638
    %2940 = vmatpush.msra.mxu0 %v2637
    %2941 = vmatpush.msra.mxu0 %v2636
    %2942 = vmatpush.msra.mxu0 %v2635
    %2943 = vmatpush.msra.mxu0 %v2634
    %2944 = vmatpush.msra.mxu0 %v2633
    %2945 = vmatpush.msra.mxu0 %v2632
    %2946 = vmatpush.msra.mxu0 %v2631
    %2947 = vmatpush.msra.mxu0 %v2630
    %2948 = vmatpush.msra.mxu0 %v2629
    %2949 = vmatmul.f32.gmra.mxu0 %v2448
    %v2950 = vpop.f32.mrf.mxu0
    %v2951 = vadd.f32 %v2931, %v2950
    %2952 = vdwg.mxu0
    %2953 = vmatpush.msra.mxu0 %v2660
    %2954 = vmatpush.msra.mxu0 %v2659
    %2955 = vmatpush.msra.mxu0 %v2658
    %2956 = vmatpush.msra.mxu0 %v2657
    %2957 = vmatpush.msra.mxu0 %v2656
    %2958 = vmatpush.msra.mxu0 %v2655
    %2959 = vmatpush.msra.mxu0 %v2654
    %2960 = vmatpush.msra.mxu0 %v2653
    %2961 = vmatpush.msra.mxu0 %v2652
    %2962 = vmatpush.msra.mxu0 %v2651
    %2963 = vmatpush.msra.mxu0 %v2650
    %2964 = vmatpush.msra.mxu0 %v2649
    %2965 = vmatpush.msra.mxu0 %v2648
    %2966 = vmatpush.msra.mxu0 %v2647
    %2967 = vmatpush.msra.mxu0 %v2646
    %2968 = vmatpush.msra.mxu0 %v2645
    %2969 = vmatmul.f32.gmra.mxu0 %v2449
    %v2970 = vpop.f32.mrf.mxu0
    %v2971 = vadd.f32 %v2951, %v2970
    %2972 = vdwg.mxu0
    %2973 = vmatpush.msra.mxu0 %v2676
    %2974 = vmatpush.msra.mxu0 %v2675
    %2975 = vmatpush.msra.mxu0 %v2674
    %2976 = vmatpush.msra.mxu0 %v2673
    %2977 = vmatpush.msra.mxu0 %v2672
    %2978 = vmatpush.msra.mxu0 %v2671
    %2979 = vmatpush.msra.mxu0 %v2670
    %2980 = vmatpush.msra.mxu0 %v2669
    %2981 = vmatpush.msra.mxu0 %v2668
    %2982 = vmatpush.msra.mxu0 %v2667
    %2983 = vmatpush.msra.mxu0 %v2666
    %2984 = vmatpush.msra.mxu0 %v2665
    %2985 = vmatpush.msra.mxu0 %v2664
    %2986 = vmatpush.msra.mxu0 %v2663
    %2987 = vmatpush.msra.mxu0 %v2662
    %2988 = vmatpush.msra.mxu0 %v2661
    %2989 = vmatmul.f32.gmra.mxu0 %v2450
    %v2990 = vpop.f32.mrf.mxu0
    %v2991 = vadd.f32 %v2971, %v2990
    %2992 = vdwg.mxu0
    %2993 = vmatpush.msra.mxu0 %v2692
    %2994 = vmatpush.msra.mxu0 %v2691
    %2995 = vmatpush.msra.mxu0 %v2690
    %2996 = vmatpush.msra.mxu0 %v2689
    %2997 = vmatpush.msra.mxu0 %v2688
    %2998 = vmatpush.msra.mxu0 %v2687
    %2999 = vmatpush.msra.mxu0 %v2686
    %3000 = vmatpush.msra.mxu0 %v2685
    %3001 = vmatpush.msra.mxu0 %v2684
    %3002 = vmatpush.msra.mxu0 %v2683
    %3003 = vmatpush.msra.mxu0 %v2682
    %3004 = vmatpush.msra.mxu0 %v2681
    %3005 = vmatpush.msra.mxu0 %v2680
    %3006 = vmatpush.msra.mxu0 %v2679
    %3007 = vmatpush.msra.mxu0 %v2678
    %3008 = vmatpush.msra.mxu0 %v2677
    %3009 = vmatmul.f32.gmra.mxu0 %v2451
    %v3010 = vpop.f32.mrf.mxu0
    %v3011 = vadd.f32 %v2991, %v3010
    %3012 = vdwg.mxu0
    %3013 = vmatpush.msra.mxu0 %v2708
    %3014 = vmatpush.msra.mxu0 %v2707
    %3015 = vmatpush.msra.mxu0 %v2706
    %3016 = vmatpush.msra.mxu0 %v2705
    %3017 = vmatpush.msra.mxu0 %v2704
    %3018 = vmatpush.msra.mxu0 %v2703
    %3019 = vmatpush.msra.mxu0 %v2702
    %3020 = vmatpush.msra.mxu0 %v2701
    %3021 = vmatpush.msra.mxu0 %v2700
    %3022 = vmatpush.msra.mxu0 %v2699
    %3023 = vmatpush.msra.mxu0 %v2698
    %3024 = vmatpush.msra.mxu0 %v2697
    %3025 = vmatpush.msra.mxu0 %v2696
    %3026 = vmatpush.msra.mxu0 %v2695
    %3027 = vmatpush.msra.mxu0 %v2694
    %3028 = vmatpush.msra.mxu0 %v2693
    %3029 = vmatmul.f32.gmra.mxu0 %v2452
    %v3030 = vpop.f32.mrf.mxu0
    %v3031 = vadd.f32 %v3011, %v3030
    %3032 = vdwg.mxu0
    %v3033 = vtanh.pop %v3031
    %3034 = vst [vmem:[#allocation11] sm:$0xff] %v3033
    // Predicated region
    $region42: #{tpu_custom_call.1} parent=1 // pred_check
      _
    $region43: #{tpu_custom_call.1} parent=1 // pred_check_branch
      %3036 = sbr.rel (0) target = $region45
    $region44: #{tpu_custom_call.1} parent=1 // pred_region
      %3038 = vsyncadd [#allocation4], 0
      %s3040 = sshll.u32 [#allocation11], 4
      %s3041 = int_to_ptr.vmem [resolvable:$true] %s3040
      %s3042 = sshll.u32 %s5, 4
      %s3043 = int_to_ptr.hbm [resolvable:$true] %s3042
      %3045 = dma.vmem_to_hbm [thread:$0]  %s3041, 128, %s3043, [#allocation4]
    $region45: #{tpu_custom_call.1} parent=1 // pred_fallthru
      _
    // Predicated region
    $region46: #{tpu_custom_call.1} parent=1 // pred_check
      _
    $region47: #{tpu_custom_call.1} parent=1 // pred_check_branch
      %3047 = sbr.rel (0) target = $region49
    $region48: #{tpu_custom_call.1} parent=1 // pred_region
      %3049 = dma.done [#allocation4], 128
    $region49: #{tpu_custom_call.1} parent=1 // pred_fallthru
      _
    %3050 = vsyncpa [#allocation3], 1
    %3051 = vsyncpa [#allocation6], 1
    %3052 = vsyncpa [#allocation9], 1
    %3053 = vsyncpa [#allocation4], 1

</llo_original>
